<compile_context>
chip_gen: v7x
topology: tpu7x:2x2x1
jax: 0.10.0
libtpu: 0.0.40
codegen_flags: <defaults>
</compile_context>

<pallas_src>
import functools

import numpy as np
import jax
import jax.numpy as jnp
from jax.experimental import pallas as pl
from jax.experimental.pallas import tpu as pltpu


def _round_up(x, m):
    return (x + m - 1) // m * m


# ---------------------------------------------------------------------------
# Pallas kernel: fused 3x3 conv + ReLU + fused 1x1 heads + fg sigmoid-softmax
# ---------------------------------------------------------------------------
def _rpn_kernel(x_ref,      # (tile_h+2, Wp+2, Cin_p)  bf16, haloed input tile
                wconv_ref,  # (9, Cin_p, Cmid_p)       bf16, 3x3 conv weight (tap-major)
                bconv_ref,  # (1, Cmid_p)              f32
                wh_ref,     # (Cmid_p, 128)            bf16, fused head weight
                bh_ref,     # (1, 128)                 f32, fused head bias
                out_ref,    # (tile_h*Wp, 128)         f32, packed output slab
                acc_ref,    # (tile_h*Wp, Cmid_p)      f32 scratch accumulator
                *, n_anchor):
    th2, wp2, cin = x_ref.shape
    TH, Wp = th2 - 2, wp2 - 2
    A = n_anchor

    def row_contrib(ky):
        # Sum the 3 kx taps of this ky row in registers (values) before the
        # result ever touches the VMEM accumulator: 9 RMW passes -> ~2.5.
        # Per-tap windows are loaded straight from the ref; Wp is a multiple
        # of 8 so the flatten below is layout-preserving (no relayout).
        c = None
        for kx in range(3):
            patch = x_ref[ky:ky + TH, kx:kx + Wp, :].reshape(TH * Wp, cin)
            d = jnp.dot(patch, wconv_ref[3 * ky + kx],
                        preferred_element_type=jnp.float32)
            c = d if c is None else c + d
        return c

    # 3x3 "same" conv: f32 accumulation in a VMEM scratch.
    # (On v7x an unbroken sum-of-dots chain would let the MRB accumulate
    #  in-place; the explicit 3-pass scratch is the portable v5e/v6e choice.)
    acc_ref[...] = row_contrib(0)           # first tap row initializes
    acc_ref[...] += row_contrib(1)          # single RMW pass
    # Last tap row fused with bias + ReLU + bf16 cast (no extra acc store).
    mid = jnp.maximum(acc_ref[...] + row_contrib(2) + bconv_ref[...],
                      0.0).astype(jnp.bfloat16)

    # Single fused head matmul: columns = [params 4A | score 2A | (s1-s0) A | 0].
    head = jnp.dot(mid, wh_ref[...],
                   preferred_element_type=jnp.float32) + bh_ref[...]

    # Foreground softmax of a 2-class score == sigmoid(s1 - s0); the diff is
    # already a matmul column, so no cross-lane movement is needed.  Exact
    # divide (scores feed top-k / NMS ranking downstream).
    fg = 1.0 / (1.0 + jnp.exp(-head))

    col = jax.lax.broadcasted_iota(jnp.int32, head.shape, 1)
    in_fg = (col >= 6 * A) & (col < 7 * A)
    out_ref[...] = jnp.where(in_fg, fg, head)   # one lane-dense 128-wide store


# ---------------------------------------------------------------------------
# Wrapper: layout prep + pallas_call
# ---------------------------------------------------------------------------
def rpn_forward_pallas(x_nchw, weights, n_anchor=9, tile_h=8,
                       vmem_limit_bytes=32 * 1024 * 1024):
    """Fused RPN head.  x_nchw: (N, Cin, H, W) f32.  weights in PyTorch layout.

    Production tuning (H=W=50, C=512): tile_h=25 (nT=2, balanced across v7x's
    2 TensorCores); vmem_limit_bytes up to 64 MiB on v5e/v6e, <=48 MiB on v7x.
    """
    wconv, bconv, wscore, bscore, wparams, bparams = weights
    N, Cin, H, W = x_nchw.shape
    Cmid = wconv.shape[0]
    A = n_anchor
    assert wscore.shape[0] == 2 * A and wparams.shape[0] == 4 * A

    HEAD_N = 128
    assert 7 * A <= HEAD_N
    Cin_p = _round_up(Cin, 128)
    Cmid_p = _round_up(Cmid, 128)
    Wp = _round_up(W, 8)              # keeps the in-kernel flatten layout-preserving
    Hp = _round_up(H, tile_h)
    nT = Hp // tile_h

    # ---- input: NCHW -> NHWC, channel pad, spatial halo + alignment pad, bf16 ----
    x_nhwc = jnp.transpose(x_nchw, (0, 2, 3, 1))
    x_nhwc = jnp.pad(x_nhwc, ((0, 0), (0, 0), (0, 0), (0, Cin_p - Cin)))
    x_pad = jnp.pad(x_nhwc, ((0, 0), (1, 1 + Hp - H), (1, 1 + Wp - W), (0, 0)))
    x_pad = x_pad.astype(jnp.bfloat16)              # (N, Hp+2, Wp+2, Cin_p)
    # Overlapping row tiles (halo of 1 row each side) built once in HBM so the
    # kernel-side BlockSpec is a plain disjoint block.
    # TODO(synk): replace with pl.Element-offset BlockSpec to drop this copy.
    tiles = jnp.stack(
        [x_pad[:, t * tile_h: t * tile_h + tile_h + 2] for t in range(nT)],
        axis=1)                                     # (N, nT, tile_h+2, Wp+2, Cin_p)

    # ---- 3x3 conv weight: (Cmid, Cin, 3, 3) -> tap-major (9, Cin_p, Cmid_p) ----
    wk = jnp.transpose(wconv, (2, 3, 1, 0))                      # (3, 3, Cin, Cmid)
    wk = jnp.pad(wk, ((0, 0), (0, 0), (0, Cin_p - Cin), (0, Cmid_p - Cmid)))
    wk = wk.reshape(9, Cin_p, Cmid_p).astype(jnp.bfloat16)
    bk = jnp.pad(bconv, (0, Cmid_p - Cmid)).reshape(1, Cmid_p).astype(jnp.float32)

    # ---- fused head weight: columns [params 4A | score 2A | (s_fg - s_bg) A | 0] ----
    # PyTorch score channels are anchor-major interleaved (a0_bg, a0_fg, a1_bg, ...),
    # matching permute(0,2,3,1).view(N,-1,2).
    wpar = jnp.transpose(wparams, (1, 0))    # (Cmid, 4A)
    wsc = jnp.transpose(wscore, (1, 0))      # (Cmid, 2A)
    wdiff = wsc[:, 1::2] - wsc[:, 0::2]      # (Cmid, A):  w_fg - w_bg
    w_heads = jnp.concatenate([wpar, wsc, wdiff], axis=1)        # (Cmid, 7A)
    w_heads = jnp.pad(w_heads, ((0, Cmid_p - Cmid), (0, HEAD_N - 7 * A)))
    w_heads = w_heads.astype(jnp.bfloat16)
    b_heads = jnp.concatenate([bparams, bscore, bscore[1::2] - bscore[0::2]])
    b_heads = jnp.pad(b_heads, (0, HEAD_N - 7 * A)).reshape(1, HEAD_N)
    b_heads = b_heads.astype(jnp.float32)

    kern = functools.partial(_rpn_kernel, n_anchor=A)

    cost = pl.CostEstimate(
        flops=int(2 * N * Hp * Wp * (9 * Cin_p * Cmid_p + Cmid_p * HEAD_N)),
        transcendentals=int(N * Hp * Wp * HEAD_N),
        bytes_accessed=int(
            N * nT * (tile_h + 2) * (Wp + 2) * Cin_p * 2      # input tiles (bf16)
            + 9 * Cin_p * Cmid_p * 2 + Cmid_p * 4             # conv weight + bias
            + Cmid_p * HEAD_N * 2 + HEAD_N * 4                # head weight + bias
            + N * Hp * Wp * HEAD_N * 4),                      # output slab (f32)
    )

    out = pl.pallas_call(
        kern,
        out_shape=jax.ShapeDtypeStruct((N, nT, tile_h * Wp, HEAD_N), jnp.float32),
        grid_spec=pltpu.PrefetchScalarGridSpec(
            num_scalar_prefetch=0,
            grid=(N, nT),
            in_specs=[
                pl.BlockSpec((None, None, tile_h + 2, Wp + 2, Cin_p),
                             lambda n, t: (n, t, 0, 0, 0)),
                # Grid-invariant operands: single-buffered (no duplicated
                # resident copies in VMEM).
                pl.BlockSpec((9, Cin_p, Cmid_p), lambda n, t: (0, 0, 0),
                             pipeline_mode=pl.Buffered(1)),
                pl.BlockSpec((1, Cmid_p), lambda n, t: (0, 0),
                             pipeline_mode=pl.Buffered(1)),
                pl.BlockSpec((Cmid_p, HEAD_N), lambda n, t: (0, 0),
                             pipeline_mode=pl.Buffered(1)),
                pl.BlockSpec((1, HEAD_N), lambda n, t: (0, 0),
                             pipeline_mode=pl.Buffered(1)),
            ],
            out_specs=pl.BlockSpec((None, None, tile_h * Wp, HEAD_N),
                                   lambda n, t: (n, t, 0, 0)),
            scratch_shapes=[pltpu.VMEM((tile_h * Wp, Cmid_p), jnp.float32)],
        ),
        compiler_params=pltpu.CompilerParams(
            dimension_semantics=("parallel", "parallel"),
            vmem_limit_bytes=vmem_limit_bytes,
        ),
        cost_estimate=cost,
    )(tiles, wk, bk, w_heads, b_heads)

    # Unpack the lane-dense slab (pure reshapes/slices, matches PyTorch
    # permute(0,2,3,1).view semantics; padded rows/cols are dropped).
    slab = out.reshape(N, Hp, Wp, HEAD_N)[:, :H, :W, :].reshape(N, H * W, HEAD_N)
    rpn_params = slab[:, :, :4 * A].reshape(N, H * W * A, 4)
    rpn_score = slab[:, :, 4 * A:6 * A].reshape(N, H * W * A, 2)
    rpn_fg_score = slab[:, :, 6 * A:7 * A].reshape(N, H * W * A)
    return rpn_params, rpn_score, rpn_fg_score


# ---------------------------------------------------------------------------
# Anchor generation (deterministic glue, standard Faster-RCNN impl)
# ---------------------------------------------------------------------------
def generate_anchor_base(base_size=16, ratios=(0.5, 1.0, 2.0), scales=(8, 16, 32)):
    py, px = base_size / 2.0, base_size / 2.0
    anchor_base = np.zeros((len(ratios) * len(scales), 4), dtype=np.float32)
    for i, r in enumerate(ratios):
        for j, s in enumerate(scales):
            h = base_size * s * np.sqrt(r)
            w = base_size * s * np.sqrt(1.0 / r)
            idx = i * len(scales) + j
            anchor_base[idx, 0] = py - h / 2.0
            anchor_base[idx, 1] = px - w / 2.0
            anchor_base[idx, 2] = py + h / 2.0
            anchor_base[idx, 3] = px + w / 2.0
    return anchor_base


def generate_anchor(feat_stride, h, w):
    anchor_base = generate_anchor_base(base_size=feat_stride)
    shift_y = np.arange(0, h * feat_stride, feat_stride)
    shift_x = np.arange(0, w * feat_stride, feat_stride)
    sx, sy = np.meshgrid(shift_x, shift_y)
    shift = np.stack((sy.ravel(), sx.ravel(), sy.ravel(), sx.ravel()), axis=1)
    A = anchor_base.shape[0]
    K = shift.shape[0]
    anchor = anchor_base.reshape((1, A, 4)) + \
        shift.reshape((K, 1, 4)).astype(np.float32)
    return anchor.reshape((K * A, 4)).astype(np.float32)


# ---------------------------------------------------------------------------
# RPN module (parameter init + forward)
# ---------------------------------------------------------------------------
def init_rpn_weights(key, in_channels, mid_channels, n_anchor=9):
    """normal_init(mean=0, std=0.01) for all weights and biases (PyTorch layout)."""
    ks = jax.random.split(key, 6)
    std = 0.01
    wconv = jax.random.normal(ks[0], (mid_channels, in_channels, 3, 3), jnp.float32) * std
    bconv = jax.random.normal(ks[1], (mid_channels,), jnp.float32) * std
    wscore = jax.random.normal(ks[2], (2 * n_anchor, mid_channels), jnp.float32) * std
    bscore = jax.random.normal(ks[3], (2 * n_anchor,), jnp.float32) * std
    wparams = jax.random.normal(ks[4], (4 * n_anchor, mid_channels), jnp.float32) * std
    bparams = jax.random.normal(ks[5], (4 * n_anchor,), jnp.float32) * std
    return (wconv, bconv, wscore, bscore, wparams, bparams)


def rpn_forward(x_nchw, weights, img_size, feat_stride=16, scale=1.0, n_anchor=9):
    n, _, h, w = x_nchw.shape
    anchor = generate_anchor(feat_stride, h, w)
    rpn_params, rpn_score, rpn_fg_score = rpn_forward_pallas(
        x_nchw, weights, n_anchor=n_anchor)
    # TODO(synk): tools_gpu.Proposal (per-image NMS -> rois, roi_index) has
    # data-dependent output shapes; not implemented as a Pallas kernel.
    rois, roi_index = None, None
    return rpn_params, rpn_score, rpn_fg_score, rois, roi_index, anchor


# ---------------------------------------------------------------------------
# Reference (plain JAX, f32) for correctness checking
# ---------------------------------------------------------------------------
def rpn_reference(x_nchw, weights, n_anchor=9):
    wconv, bconv, wscore, bscore, wparams, bparams = weights
    N, Cin, H, W = x_nchw.shape
    A = n_anchor
    x_nhwc = jnp.transpose(x_nchw, (0, 2, 3, 1))
    w_hwio = jnp.transpose(wconv, (2, 3, 1, 0))
    mid = jax.lax.conv_general_dilated(
        x_nhwc, w_hwio, window_strides=(1, 1), padding="SAME",
        dimension_numbers=("NHWC", "HWIO", "NHWC"))
    mid = jnp.maximum(mid + bconv.reshape(1, 1, 1, -1), 0.0)
    params = jnp.einsum("nhwc,dc->nhwd", mid, wparams) + bparams.reshape(1, 1, 1, -1)
    score = jnp.einsum("nhwc,dc->nhwd", mid, wscore) + bscore.reshape(1, 1, 1, -1)
    rpn_params = params.reshape(N, H * W * A, 4)
    rpn_score = score.reshape(N, H * W * A, 2)
    sm = jax.nn.softmax(rpn_score, axis=2)
    rpn_fg = sm[:, :, 1].reshape(N, -1)
    return rpn_params, rpn_score, rpn_fg


if __name__ == "__main__":
    # Small shapes: batch=2, in_channels=32, mid_channels=64, spatial 16x16.
    N, Cin, Cmid, H, W = 2, 32, 64, 16, 16
    feat_stride = 16
    img_size = (H * feat_stride, W * feat_stride)

    key = jax.random.PRNGKey(0)
    kx, kw = jax.random.split(key)
    x = jax.random.normal(kx, (N, Cin, H, W), jnp.float32)
    weights = init_rpn_weights(kw, Cin, Cmid)

    rpn_params, rpn_score, rpn_fg, rois, roi_index, anchor = rpn_forward(
        x, weights, img_size, feat_stride=feat_stride, scale=1.0)
    jax.block_until_ready((rpn_params, rpn_score, rpn_fg))

    # Verify against the plain-JAX f32 reference (bf16 matmuls -> loosened tol).
    ref_params, ref_score, ref_fg = rpn_reference(x, weights)
    np.testing.assert_allclose(np.asarray(rpn_params), np.asarray(ref_params),
                               rtol=2e-2, atol=2e-3)
    np.testing.assert_allclose(np.asarray(rpn_score), np.asarray(ref_score),
                               rtol=2e-2, atol=2e-3)
    np.testing.assert_allclose(np.asarray(rpn_fg), np.asarray(ref_fg),
                               rtol=2e-2, atol=2e-3)
    assert anchor.shape == (H * W * 9, 4)

    print("KERNEL_OK")
</pallas_src>

<mosaic_0001>
module attributes {stable_mosaic.version = 11 : i64} {
  func.func @_rpn_kernel(%arg0: i32, %arg1: i32, %arg2: memref<1x1x10x18x128xbf16, #tpu.memory_space<vmem>>, %arg3: memref<9x128x128xbf16, #tpu.memory_space<vmem>>, %arg4: memref<1x128xf32, #tpu.memory_space<vmem>>, %arg5: memref<128x128xbf16, #tpu.memory_space<vmem>>, %arg6: memref<1x128xf32, #tpu.memory_space<vmem>>, %arg7: memref<1x1x128x128xf32, #tpu.memory_space<vmem>>, %arg8: memref<128x128xf32, #tpu.memory_space<vmem>>) attributes {dimension_semantics = [#tpu.dimension_semantics<parallel>, #tpu.dimension_semantics<parallel>], iteration_bounds = array<i64: 2, 2>, scalar_prefetch = 0 : i64, scratch_operands = 1 : i64, tpu.core_type = #tpu.core_type<tc>, window_params = [{transform_indices = @transform_0, window_bounds = array<i64: 1, 1, 10, 18, 128>}, {pipeline_mode = #tpu.pipeline_mode<synchronous>, transform_indices = @transform_1, window_bounds = array<i64: 9, 128, 128>}, {pipeline_mode = #tpu.pipeline_mode<synchronous>, transform_indices = @transform_2, window_bounds = array<i64: 1, 128>}, {pipeline_mode = #tpu.pipeline_mode<synchronous>, transform_indices = @transform_3, window_bounds = array<i64: 128, 128>}, {pipeline_mode = #tpu.pipeline_mode<synchronous>, transform_indices = @transform_4, window_bounds = array<i64: 1, 128>}, {transform_indices = @transform_5, window_bounds = array<i64: 1, 1, 128, 128>}]} {
    %c0 = arith.constant 0 : index
    %c0_0 = arith.constant 0 : index
    %c0_1 = arith.constant 0 : index
    %c0_2 = arith.constant 0 : index
    %c0_3 = arith.constant 0 : index
    %0 = vector.load %arg2[%c0, %c0_0, %c0_1, %c0_2, %c0_3] : memref<1x1x10x18x128xbf16, #tpu.memory_space<vmem>>, vector<1x1x8x16x128xbf16>
    %1 = vector.shape_cast %0 : vector<1x1x8x16x128xbf16> to vector<8x16x128xbf16>
    %2 = vector.shape_cast %1 : vector<8x16x128xbf16> to vector<128x128xbf16>
    %c0_4 = arith.constant 0 : index
    %c0_5 = arith.constant 0 : index
    %c0_6 = arith.constant 0 : index
    %3 = vector.load %arg3[%c0_4, %c0_5, %c0_6] : memref<9x128x128xbf16, #tpu.memory_space<vmem>>, vector<1x128x128xbf16>
    %4 = vector.shape_cast %3 : vector<1x128x128xbf16> to vector<128x128xbf16>
    %cst = arith.constant dense<0.000000e+00> : vector<128x128xf32>
    %5 = tpu.matmul %2, %4, %cst {dimension_numbers = #tpu.dot_dimension_numbers<[1], [0], [0], [1], [0, 0, 1, 1], [], []>} : vector<128x128xbf16>, vector<128x128xbf16>, vector<128x128xf32> -> vector<128x128xf32>
    %c0_7 = arith.constant 0 : index
    %c0_8 = arith.constant 0 : index
    %c0_9 = arith.constant 0 : index
    %c1 = arith.constant 1 : index
    %c0_10 = arith.constant 0 : index
    %6 = vector.load %arg2[%c0_7, %c0_8, %c0_9, %c1, %c0_10] : memref<1x1x10x18x128xbf16, #tpu.memory_space<vmem>>, vector<1x1x8x16x128xbf16>
    %7 = vector.shape_cast %6 : vector<1x1x8x16x128xbf16> to vector<8x16x128xbf16>
    %8 = vector.shape_cast %7 : vector<8x16x128xbf16> to vector<128x128xbf16>
    %c1_11 = arith.constant 1 : index
    %c0_12 = arith.constant 0 : index
    %c0_13 = arith.constant 0 : index
    %9 = vector.load %arg3[%c1_11, %c0_12, %c0_13] : memref<9x128x128xbf16, #tpu.memory_space<vmem>>, vector<1x128x128xbf16>
    %10 = vector.shape_cast %9 : vector<1x128x128xbf16> to vector<128x128xbf16>
    %cst_14 = arith.constant dense<0.000000e+00> : vector<128x128xf32>
    %11 = tpu.matmul %8, %10, %cst_14 {dimension_numbers = #tpu.dot_dimension_numbers<[1], [0], [0], [1], [0, 0, 1, 1], [], []>} : vector<128x128xbf16>, vector<128x128xbf16>, vector<128x128xf32> -> vector<128x128xf32>
    %12 = arith.addf %5, %11 : vector<128x128xf32>
    %c0_15 = arith.constant 0 : index
    %c0_16 = arith.constant 0 : index
    %c0_17 = arith.constant 0 : index
    %c2 = arith.constant 2 : index
    %c0_18 = arith.constant 0 : index
    %13 = vector.load %arg2[%c0_15, %c0_16, %c0_17, %c2, %c0_18] : memref<1x1x10x18x128xbf16, #tpu.memory_space<vmem>>, vector<1x1x8x16x128xbf16>
    %14 = vector.shape_cast %13 : vector<1x1x8x16x128xbf16> to vector<8x16x128xbf16>
    %15 = vector.shape_cast %14 : vector<8x16x128xbf16> to vector<128x128xbf16>
    %c2_19 = arith.constant 2 : index
    %c0_20 = arith.constant 0 : index
    %c0_21 = arith.constant 0 : index
    %16 = vector.load %arg3[%c2_19, %c0_20, %c0_21] : memref<9x128x128xbf16, #tpu.memory_space<vmem>>, vector<1x128x128xbf16>
    %17 = vector.shape_cast %16 : vector<1x128x128xbf16> to vector<128x128xbf16>
    %cst_22 = arith.constant dense<0.000000e+00> : vector<128x128xf32>
    %18 = tpu.matmul %15, %17, %cst_22 {dimension_numbers = #tpu.dot_dimension_numbers<[1], [0], [0], [1], [0, 0, 1, 1], [], []>} : vector<128x128xbf16>, vector<128x128xbf16>, vector<128x128xf32> -> vector<128x128xf32>
    %19 = arith.addf %12, %18 : vector<128x128xf32>
    %c0_23 = arith.constant 0 : index
    %c0_24 = arith.constant 0 : index
    %20 = vector.load %arg8[%c0_23, %c0_24] : memref<128x128xf32, #tpu.memory_space<vmem>>, vector<128x128xf32>
    tpu.vector_store %arg8[%c0_23, %c0_24], %19 {strides = array<i32>} : memref<128x128xf32, #tpu.memory_space<vmem>>, vector<128x128xf32>,
    %c0_25 = arith.constant 0 : index
    %c0_26 = arith.constant 0 : index
    %21 = vector.load %arg8[%c0_25, %c0_26] : memref<128x128xf32, #tpu.memory_space<vmem>>, vector<128x128xf32>
    %c0_27 = arith.constant 0 : index
    %c0_28 = arith.constant 0 : index
    %c1_29 = arith.constant 1 : index
    %c0_30 = arith.constant 0 : index
    %c0_31 = arith.constant 0 : index
    %22 = vector.load %arg2[%c0_27, %c0_28, %c1_29, %c0_30, %c0_31] : memref<1x1x10x18x128xbf16, #tpu.memory_space<vmem>>, vector<1x1x8x16x128xbf16>
    %23 = vector.shape_cast %22 : vector<1x1x8x16x128xbf16> to vector<8x16x128xbf16>
    %24 = vector.shape_cast %23 : vector<8x16x128xbf16> to vector<128x128xbf16>
    %c3 = arith.constant 3 : index
    %c0_32 = arith.constant 0 : index
    %c0_33 = arith.constant 0 : index
    %25 = vector.load %arg3[%c3, %c0_32, %c0_33] : memref<9x128x128xbf16, #tpu.memory_space<vmem>>, vector<1x128x128xbf16>
    %26 = vector.shape_cast %25 : vector<1x128x128xbf16> to vector<128x128xbf16>
    %cst_34 = arith.constant dense<0.000000e+00> : vector<128x128xf32>
    %27 = tpu.matmul %24, %26, %cst_34 {dimension_numbers = #tpu.dot_dimension_numbers<[1], [0], [0], [1], [0, 0, 1, 1], [], []>} : vector<128x128xbf16>, vector<128x128xbf16>, vector<128x128xf32> -> vector<128x128xf32>
    %c0_35 = arith.constant 0 : index
    %c0_36 = arith.constant 0 : index
    %c1_37 = arith.constant 1 : index
    %c1_38 = arith.constant 1 : index
    %c0_39 = arith.constant 0 : index
    %28 = vector.load %arg2[%c0_35, %c0_36, %c1_37, %c1_38, %c0_39] : memref<1x1x10x18x128xbf16, #tpu.memory_space<vmem>>, vector<1x1x8x16x128xbf16>
    %29 = vector.shape_cast %28 : vector<1x1x8x16x128xbf16> to vector<8x16x128xbf16>
    %30 = vector.shape_cast %29 : vector<8x16x128xbf16> to vector<128x128xbf16>
    %c4 = arith.constant 4 : index
    %c0_40 = arith.constant 0 : index
    %c0_41 = arith.constant 0 : index
    %31 = vector.load %arg3[%c4, %c0_40, %c0_41] : memref<9x128x128xbf16, #tpu.memory_space<vmem>>, vector<1x128x128xbf16>
    %32 = vector.shape_cast %31 : vector<1x128x128xbf16> to vector<128x128xbf16>
    %cst_42 = arith.constant dense<0.000000e+00> : vector<128x128xf32>
    %33 = tpu.matmul %30, %32, %cst_42 {dimension_numbers = #tpu.dot_dimension_numbers<[1], [0], [0], [1], [0, 0, 1, 1], [], []>} : vector<128x128xbf16>, vector<128x128xbf16>, vector<128x128xf32> -> vector<128x128xf32>
    %34 = arith.addf %27, %33 : vector<128x128xf32>
    %c0_43 = arith.constant 0 : index
    %c0_44 = arith.constant 0 : index
    %c1_45 = arith.constant 1 : index
    %c2_46 = arith.constant 2 : index
    %c0_47 = arith.constant 0 : index
    %35 = vector.load %arg2[%c0_43, %c0_44, %c1_45, %c2_46, %c0_47] : memref<1x1x10x18x128xbf16, #tpu.memory_space<vmem>>, vector<1x1x8x16x128xbf16>
    %36 = vector.shape_cast %35 : vector<1x1x8x16x128xbf16> to vector<8x16x128xbf16>
    %37 = vector.shape_cast %36 : vector<8x16x128xbf16> to vector<128x128xbf16>
    %c5 = arith.constant 5 : index
    %c0_48 = arith.constant 0 : index
    %c0_49 = arith.constant 0 : index
    %38 = vector.load %arg3[%c5, %c0_48, %c0_49] : memref<9x128x128xbf16, #tpu.memory_space<vmem>>, vector<1x128x128xbf16>
    %39 = vector.shape_cast %38 : vector<1x128x128xbf16> to vector<128x128xbf16>
    %cst_50 = arith.constant dense<0.000000e+00> : vector<128x128xf32>
    %40 = tpu.matmul %37, %39, %cst_50 {dimension_numbers = #tpu.dot_dimension_numbers<[1], [0], [0], [1], [0, 0, 1, 1], [], []>} : vector<128x128xbf16>, vector<128x128xbf16>, vector<128x128xf32> -> vector<128x128xf32>
    %41 = arith.addf %34, %40 : vector<128x128xf32>
    %42 = arith.addf %21, %41 : vector<128x128xf32>
    %c0_51 = arith.constant 0 : index
    %c0_52 = arith.constant 0 : index
    %43 = vector.load %arg8[%c0_51, %c0_52] : memref<128x128xf32, #tpu.memory_space<vmem>>, vector<128x128xf32>
    tpu.vector_store %arg8[%c0_51, %c0_52], %42 {strides = array<i32>} : memref<128x128xf32, #tpu.memory_space<vmem>>, vector<128x128xf32>,
    %c0_53 = arith.constant 0 : index
    %c0_54 = arith.constant 0 : index
    %44 = vector.load %arg8[%c0_53, %c0_54] : memref<128x128xf32, #tpu.memory_space<vmem>>, vector<128x128xf32>
    %c0_55 = arith.constant 0 : index
    %c0_56 = arith.constant 0 : index
    %c2_57 = arith.constant 2 : index
    %c0_58 = arith.constant 0 : index
    %c0_59 = arith.constant 0 : index
    %45 = vector.load %arg2[%c0_55, %c0_56, %c2_57, %c0_58, %c0_59] : memref<1x1x10x18x128xbf16, #tpu.memory_space<vmem>>, vector<1x1x8x16x128xbf16>
    %46 = vector.shape_cast %45 : vector<1x1x8x16x128xbf16> to vector<8x16x128xbf16>
    %47 = vector.shape_cast %46 : vector<8x16x128xbf16> to vector<128x128xbf16>
    %c6 = arith.constant 6 : index
    %c0_60 = arith.constant 0 : index
    %c0_61 = arith.constant 0 : index
    %48 = vector.load %arg3[%c6, %c0_60, %c0_61] : memref<9x128x128xbf16, #tpu.memory_space<vmem>>, vector<1x128x128xbf16>
    %49 = vector.shape_cast %48 : vector<1x128x128xbf16> to vector<128x128xbf16>
    %cst_62 = arith.constant dense<0.000000e+00> : vector<128x128xf32>
    %50 = tpu.matmul %47, %49, %cst_62 {dimension_numbers = #tpu.dot_dimension_numbers<[1], [0], [0], [1], [0, 0, 1, 1], [], []>} : vector<128x128xbf16>, vector<128x128xbf16>, vector<128x128xf32> -> vector<128x128xf32>
    %c0_63 = arith.constant 0 : index
    %c0_64 = arith.constant 0 : index
    %c2_65 = arith.constant 2 : index
    %c1_66 = arith.constant 1 : index
    %c0_67 = arith.constant 0 : index
    %51 = vector.load %arg2[%c0_63, %c0_64, %c2_65, %c1_66, %c0_67] : memref<1x1x10x18x128xbf16, #tpu.memory_space<vmem>>, vector<1x1x8x16x128xbf16>
    %52 = vector.shape_cast %51 : vector<1x1x8x16x128xbf16> to vector<8x16x128xbf16>
    %53 = vector.shape_cast %52 : vector<8x16x128xbf16> to vector<128x128xbf16>
    %c7 = arith.constant 7 : index
    %c0_68 = arith.constant 0 : index
    %c0_69 = arith.constant 0 : index
    %54 = vector.load %arg3[%c7, %c0_68, %c0_69] : memref<9x128x128xbf16, #tpu.memory_space<vmem>>, vector<1x128x128xbf16>
    %55 = vector.shape_cast %54 : vector<1x128x128xbf16> to vector<128x128xbf16>
    %cst_70 = arith.constant dense<0.000000e+00> : vector<128x128xf32>
    %56 = tpu.matmul %53, %55, %cst_70 {dimension_numbers = #tpu.dot_dimension_numbers<[1], [0], [0], [1], [0, 0, 1, 1], [], []>} : vector<128x128xbf16>, vector<128x128xbf16>, vector<128x128xf32> -> vector<128x128xf32>
    %57 = arith.addf %50, %56 : vector<128x128xf32>
    %c0_71 = arith.constant 0 : index
    %c0_72 = arith.constant 0 : index
    %c2_73 = arith.constant 2 : index
    %c2_74 = arith.constant 2 : index
    %c0_75 = arith.constant 0 : index
    %58 = vector.load %arg2[%c0_71, %c0_72, %c2_73, %c2_74, %c0_75] : memref<1x1x10x18x128xbf16, #tpu.memory_space<vmem>>, vector<1x1x8x16x128xbf16>
    %59 = vector.shape_cast %58 : vector<1x1x8x16x128xbf16> to vector<8x16x128xbf16>
    %60 = vector.shape_cast %59 : vector<8x16x128xbf16> to vector<128x128xbf16>
    %c8 = arith.constant 8 : index
    %c0_76 = arith.constant 0 : index
    %c0_77 = arith.constant 0 : index
    %61 = vector.load %arg3[%c8, %c0_76, %c0_77] : memref<9x128x128xbf16, #tpu.memory_space<vmem>>, vector<1x128x128xbf16>
    %62 = vector.shape_cast %61 : vector<1x128x128xbf16> to vector<128x128xbf16>
    %cst_78 = arith.constant dense<0.000000e+00> : vector<128x128xf32>
    %63 = tpu.matmul %60, %62, %cst_78 {dimension_numbers = #tpu.dot_dimension_numbers<[1], [0], [0], [1], [0, 0, 1, 1], [], []>} : vector<128x128xbf16>, vector<128x128xbf16>, vector<128x128xf32> -> vector<128x128xf32>
    %64 = arith.addf %57, %63 : vector<128x128xf32>
    %65 = arith.addf %44, %64 : vector<128x128xf32>
    %c0_79 = arith.constant 0 : index
    %c0_80 = arith.constant 0 : index
    %66 = vector.load %arg4[%c0_79, %c0_80] : memref<1x128xf32, #tpu.memory_space<vmem>>, vector<1x128xf32>
    %67 = vector.broadcast %66 : vector<1x128xf32> to vector<128x128xf32>
    %68 = arith.addf %65, %67 : vector<128x128xf32>
    %cst_81 = arith.constant 0.000000e+00 : f32
    %69 = vector.broadcast %cst_81 : f32 to vector<128x128xf32>
    %70 = arith.maximumf %68, %69 : vector<128x128xf32>
    %71 = arith.truncf %70 : vector<128x128xf32> to vector<128x128xbf16>
    %c0_82 = arith.constant 0 : index
    %c0_83 = arith.constant 0 : index
    %72 = vector.load %arg5[%c0_82, %c0_83] : memref<128x128xbf16, #tpu.memory_space<vmem>>, vector<128x128xbf16>
    %cst_84 = arith.constant dense<0.000000e+00> : vector<128x128xf32>
    %73 = tpu.matmul %71, %72, %cst_84 {dimension_numbers = #tpu.dot_dimension_numbers<[1], [0], [0], [1], [0, 0, 1, 1], [], []>} : vector<128x128xbf16>, vector<128x128xbf16>, vector<128x128xf32> -> vector<128x128xf32>
    %c0_85 = arith.constant 0 : index
    %c0_86 = arith.constant 0 : index
    %74 = vector.load %arg6[%c0_85, %c0_86] : memref<1x128xf32, #tpu.memory_space<vmem>>, vector<1x128xf32>
    %75 = vector.broadcast %74 : vector<1x128xf32> to vector<128x128xf32>
    %76 = arith.addf %73, %75 : vector<128x128xf32>
    %cst_87 = arith.constant 0.000000e+00 : f32
    %77 = vector.broadcast %cst_87 : f32 to vector<128x128xf32>
    %78 = arith.subf %77, %76 : vector<128x128xf32>
    %79 = math.exp %78 : vector<128x128xf32>
    %cst_88 = arith.constant 1.000000e+00 : f32
    %80 = vector.broadcast %cst_88 : f32 to vector<128x128xf32>
    %81 = arith.addf %80, %79 : vector<128x128xf32>
    %cst_89 = arith.constant 1.000000e+00 : f32
    %82 = vector.broadcast %cst_89 : f32 to vector<128x128xf32>
    %83 = arith.divf %82, %81 : vector<128x128xf32>
    %84 = tpu.iota {dimensions = array<i32: 1>} : vector<128x128xi32>
    %c54_i32 = arith.constant 54 : i32
    %85 = vector.broadcast %c54_i32 : i32 to vector<128x128xi32>
    %86 = arith.cmpi sge, %84, %85 : vector<128x128xi32>
    %c63_i32 = arith.constant 63 : i32
    %87 = vector.broadcast %c63_i32 : i32 to vector<128x128xi32>
    %88 = arith.cmpi slt, %84, %87 : vector<128x128xi32>
    %89 = arith.andi %86, %88 : vector<128x128xi1>
    %90 = arith.select %89, %83, %76 : vector<128x128xi1>, vector<128x128xf32>
    %c0_90 = arith.constant 0 : index
    %c0_91 = arith.constant 0 : index
    %c0_92 = arith.constant 0 : index
    %c0_93 = arith.constant 0 : index
    %91 = vector.load %arg7[%c0_90, %c0_91, %c0_92, %c0_93] : memref<1x1x128x128xf32, #tpu.memory_space<vmem>>, vector<1x1x128x128xf32>
    %92 = vector.shape_cast %91 : vector<1x1x128x128xf32> to vector<128x128xf32>
    %93 = vector.shape_cast %90 : vector<128x128xf32> to vector<1x1x128x128xf32>
    tpu.vector_store %arg7[%c0_90, %c0_91, %c0_92, %c0_93], %93 {strides = array<i32>} : memref<1x1x128x128xf32, #tpu.memory_space<vmem>>, vector<1x1x128x128xf32>,
    return
  }
  func.func @transform_0(%arg0: i32, %arg1: i32) -> (i32, i32, i32, i32, i32) {
    %c0_i32 = arith.constant 0 : i32
    %c0_i32_0 = arith.constant 0 : i32
    %c0_i32_1 = arith.constant 0 : i32
    %c0_i32_2 = arith.constant 0 : i32
    return %arg0, %arg1, %c0_i32, %c0_i32_0, %c0_i32_1 : i32, i32, i32, i32, i32
  }
  func.func @transform_1(%arg0: i32, %arg1: i32) -> (i32, i32, i32) {
    %c0_i32 = arith.constant 0 : i32
    %c0_i32_0 = arith.constant 0 : i32
    %c0_i32_1 = arith.constant 0 : i32
    %c0_i32_2 = arith.constant 0 : i32
    return %c0_i32, %c0_i32_0, %c0_i32_1 : i32, i32, i32
  }
  func.func @transform_2(%arg0: i32, %arg1: i32) -> (i32, i32) {
    %c0_i32 = arith.constant 0 : i32
    %c0_i32_0 = arith.constant 0 : i32
    %c0_i32_1 = arith.constant 0 : i32
    return %c0_i32, %c0_i32_0 : i32, i32
  }
  func.func @transform_3(%arg0: i32, %arg1: i32) -> (i32, i32) {
    %c0_i32 = arith.constant 0 : i32
    %c0_i32_0 = arith.constant 0 : i32
    %c0_i32_1 = arith.constant 0 : i32
    return %c0_i32, %c0_i32_0 : i32, i32
  }
  func.func @transform_4(%arg0: i32, %arg1: i32) -> (i32, i32) {
    %c0_i32 = arith.constant 0 : i32
    %c0_i32_0 = arith.constant 0 : i32
    %c0_i32_1 = arith.constant 0 : i32
    return %c0_i32, %c0_i32_0 : i32, i32
  }
  func.func @transform_5(%arg0: i32, %arg1: i32) -> (i32, i32, i32, i32) {
    %c0_i32 = arith.constant 0 : i32
    %c0_i32_0 = arith.constant 0 : i32
    %c0_i32_1 = arith.constant 0 : i32
    return %arg0, %arg1, %c0_i32, %c0_i32_0 : i32, i32, i32, i32
  }
}

</mosaic_0001>

<llo_original>
// kernel: tpu_custom_call.1
$region0: #{tpu_custom_call.1}
  #allocation0 [shape = 'u32[]', space=smem, size = 0x4, offset = 0x4, fixed_abs, tag = 'smem constant byte address 0x4 - core index']
  #allocation1 [shape = 'u32[144,128]{1,0:T(1,128)}', space=vmem, size = 0x12000, scoped, tag = 'internal scratch']
  #allocation2 [shape = 'f32[128,128]{1,0:T(8,128)}', space=vmem, size = 0x10000, scoped, tag = 'scratch operand']
  %s0 = inlined_call_operand.vmem [shape: bf16[2,2,10,18,128], index: 0, kind: input, shape index: {}]
  %s1 = inlined_call_operand.vmem [shape: bf16[9,128,128], index: 1, kind: input, shape index: {}]
  %s2 = inlined_call_operand.vmem [shape: f32[1,128], index: 2, kind: input, shape index: {}]
  %s3 = inlined_call_operand.vmem [shape: bf16[128,128], index: 3, kind: input, shape index: {}]
  %s4 = inlined_call_operand.vmem [shape: f32[1,128], index: 4, kind: input, shape index: {}]
  %s5 = inlined_call_operand.hbm [shape: f32[2,2,128,128], index: 5, kind: output, shape index: {}]
  %s6 = sld [smem:[#allocation0]]
  $region53: #{tpu_custom_call.1} parent=0
    _
  %s8 = ssub.s32 1, %s6
  %s9 = scalar_select 0, %s8, %s6
  $region1: #{tpu_custom_call.1} parent=0
    #allocation3 [shape = 'u8[131072]{0}', space=vmem, size = 0x20000, scoped, tag = 'output window, operand 0']
    #allocation4 [shape = 's32[2]{0}', space=sflag, size = 0x8, scoped, tag = 'scoped memory for tpu_custom_call.1']
    %10 = vsyncpa [#allocation4], 0
    %s11 = scalar_lea.sflag [#allocation4], 1
    %12 = vsyncpa %s11, 0
    loop: start=0, step=1, limit=6
    $region2: #{tpu_custom_call.1} parent=1 // loop_pre_header
      _
    $region3: #{tpu_custom_call.1} parent=1 // loop_header
      %s14 = sphi 0, %s18
      %p15 = scmp.ge.s32.totalorder %s14, 6
      %s21 = sphi 0, %s33
      %s22 = sphi 0, %s29
      %s23 = sphi 0, %s21
      %s24 = sphi 0, %s22
      %s25 = sphi 0, %s23
      %s26 = sphi 0, %s24
      %s38 = sphi 0, %s40
      %s41 = sphi 0, %s38
      %s42 = sphi 0, %s41
      %s58 = sphi 0, %s42
      %s62 = sphi 0, %s62
      %s64 = sphi 0, %s62
      %s65 = sphi 0, %s64
      %s79 = sphi 0, %s65
      %s83 = sphi 0, %s83
      %s85 = sphi 0, %s83
      %s86 = sphi 0, %s85
      %s100 = sphi 0, %s86
      %s104 = sphi 0, %s104
      %s106 = sphi 0, %s104
      %s107 = sphi 0, %s106
      %s121 = sphi 0, %s107
      %s125 = sphi 0, %s125
      %s127 = sphi 0, %s125
      %s128 = sphi 0, %s127
      %s142 = sphi 0, %s128
      %s150 = sphi 0, %s152
      %s153 = sphi 0, %s150
      %s154 = sphi 0, %s153
      %s170 = sphi 0, %s154
    $region4: #{tpu_custom_call.1} parent=1 // loop_header_branch
      %17 = sbr.rel (%p15) target = $region8
    $region5: #{tpu_custom_call.1} parent=1 // loop_body
      %s19 = ssub.s32 %s14, 1
      %s20 = ssub.s32 %s14, 2
      %s27 = sadd.s32 1, %s22
      %p28 = scmp.ge.s32.totalorder %s27, 2
      %s29 = scalar_select %p28, 0, %s27
      %s30 = sadd.s32 1, %s21
      %s31 = scalar_select %p28, %s30, %s21
      %p32 = scmp.ge.s32.totalorder %s31, 2
      %s33 = scalar_select %p32, 0, %s31
      %s34 = ssub.s32 %s21, %s33
      %s35 = ssub.s32 %s22, %s29
      %s36 = sor.u32 %s34, %s35
      %p37 = scmp.eq.s32.totalorder %s36, 0
      %s39 = sadd.s32 %s38, 1
      %s40 = scalar_select %p37, %s38, %s39
      %p43 = pneg %p37
      %p44 = scmp.eq.s32.totalorder %s14, 3
      %p45 = por %p43, %p44
      %p46 = scmp.ne.s32.totalorder %s38, %s41
      %p47 = scmp.eq.s32.totalorder %s14, 0
      %p48 = por %p46, %p47
      %p49 = scmp.ne.s32.totalorder %s38, %s41
      %p50 = scmp.eq.s32.totalorder %s19, 3
      %p51 = por %p49, %p50
      %p52 = scmp.ne.s32.totalorder %s41, %s42
      %p53 = scmp.eq.s32.totalorder %s19, 0
      %p54 = por %p52, %p53
      %p55 = scmp.ne.s32.totalorder %s41, %s42
      %p56 = scmp.eq.s32.totalorder %s20, 3
      %p57 = por %p55, %p56
      %p59 = scmp.ne.s32.totalorder %s42, %s58
      %p60 = scmp.eq.s32.totalorder %s20, 0
      %p61 = por %p59, %p60
      %s63 = sadd.s32 %s62, 1
      %p66 = scmp.eq.s32.totalorder %s14, 3
      %p67 = scmp.ne.s32.totalorder %s62, %s64
      %p68 = scmp.eq.s32.totalorder %s14, 0
      %p69 = por %p67, %p68
      %p70 = scmp.ne.s32.totalorder %s62, %s64
      %p71 = scmp.eq.s32.totalorder %s19, 3
      %p72 = por %p70, %p71
      %p73 = scmp.ne.s32.totalorder %s64, %s65
      %p74 = scmp.eq.s32.totalorder %s19, 0
      %p75 = por %p73, %p74
      %p76 = scmp.ne.s32.totalorder %s64, %s65
      %p77 = scmp.eq.s32.totalorder %s20, 3
      %p78 = por %p76, %p77
      %p80 = scmp.ne.s32.totalorder %s65, %s79
      %p81 = scmp.eq.s32.totalorder %s20, 0
      %p82 = por %p80, %p81
      %s84 = sadd.s32 %s83, 1
      %p87 = scmp.eq.s32.totalorder %s14, 3
      %p88 = scmp.ne.s32.totalorder %s83, %s85
      %p89 = scmp.eq.s32.totalorder %s14, 0
      %p90 = por %p88, %p89
      %p91 = scmp.ne.s32.totalorder %s83, %s85
      %p92 = scmp.eq.s32.totalorder %s19, 3
      %p93 = por %p91, %p92
      %p94 = scmp.ne.s32.totalorder %s85, %s86
      %p95 = scmp.eq.s32.totalorder %s19, 0
      %p96 = por %p94, %p95
      %p97 = scmp.ne.s32.totalorder %s85, %s86
      %p98 = scmp.eq.s32.totalorder %s20, 3
      %p99 = por %p97, %p98
      %p101 = scmp.ne.s32.totalorder %s86, %s100
      %p102 = scmp.eq.s32.totalorder %s20, 0
      %p103 = por %p101, %p102
      %s105 = sadd.s32 %s104, 1
      %p108 = scmp.eq.s32.totalorder %s14, 3
      %p109 = scmp.ne.s32.totalorder %s104, %s106
      %p110 = scmp.eq.s32.totalorder %s14, 0
      %p111 = por %p109, %p110
      %p112 = scmp.ne.s32.totalorder %s104, %s106
      %p113 = scmp.eq.s32.totalorder %s19, 3
      %p114 = por %p112, %p113
      %p115 = scmp.ne.s32.totalorder %s106, %s107
      %p116 = scmp.eq.s32.totalorder %s19, 0
      %p117 = por %p115, %p116
      %p118 = scmp.ne.s32.totalorder %s106, %s107
      %p119 = scmp.eq.s32.totalorder %s20, 3
      %p120 = por %p118, %p119
      %p122 = scmp.ne.s32.totalorder %s107, %s121
      %p123 = scmp.eq.s32.totalorder %s20, 0
      %p124 = por %p122, %p123
      %s126 = sadd.s32 %s125, 1
      %p129 = scmp.eq.s32.totalorder %s14, 3
      %p130 = scmp.ne.s32.totalorder %s125, %s127
      %p131 = scmp.eq.s32.totalorder %s14, 0
      %p132 = por %p130, %p131
      %p133 = scmp.ne.s32.totalorder %s125, %s127
      %p134 = scmp.eq.s32.totalorder %s19, 3
      %p135 = por %p133, %p134
      %p136 = scmp.ne.s32.totalorder %s127, %s128
      %p137 = scmp.eq.s32.totalorder %s19, 0
      %p138 = por %p136, %p137
      %p139 = scmp.ne.s32.totalorder %s127, %s128
      %p140 = scmp.eq.s32.totalorder %s20, 3
      %p141 = por %p139, %p140
      %p143 = scmp.ne.s32.totalorder %s128, %s142
      %p144 = scmp.eq.s32.totalorder %s20, 0
      %p145 = por %p143, %p144
      %s146 = ssub.s32 %s21, %s33
      %s147 = ssub.s32 %s22, %s29
      %s148 = sor.u32 %s146, %s147
      %p149 = scmp.eq.s32.totalorder %s148, 0
      %s151 = sadd.s32 %s150, 1
      %s152 = scalar_select %p149, %s150, %s151
      %p155 = pneg %p149
      %p156 = scmp.eq.s32.totalorder %s14, 3
      %p157 = por %p155, %p156
      %p158 = scmp.ne.s32.totalorder %s150, %s153
      %p159 = scmp.eq.s32.totalorder %s14, 0
      %p160 = por %p158, %p159
      %p161 = scmp.ne.s32.totalorder %s150, %s153
      %p162 = scmp.eq.s32.totalorder %s19, 3
      %p163 = por %p161, %p162
      %p164 = scmp.ne.s32.totalorder %s153, %s154
      %p165 = scmp.eq.s32.totalorder %s19, 0
      %p166 = por %p164, %p165
      %p167 = scmp.ne.s32.totalorder %s153, %s154
      %p168 = scmp.eq.s32.totalorder %s20, 3
      %p169 = por %p167, %p168
      %p171 = scmp.ne.s32.totalorder %s154, %s170
      %p172 = scmp.eq.s32.totalorder %s20, 0
      %p173 = por %p171, %p172
      %p174 = scmp.le.s32.totalorder 1, %s14
      %p175 = scmp.lt.s32.totalorder %s14, 5
      %p176 = pnand %p174, %p175
      %p177 = pneg %p176
      // Predicated region
      $region9: #{tpu_custom_call.1} parent=5 // pred_check
        _
      $region10: #{tpu_custom_call.1} parent=5 // pred_check_branch
        %179 = sbr.rel (%p176) target = $region12
      $region11: #{tpu_custom_call.1} parent=5 // pred_region
        %s180 = ssub.s32 %s14, 1
        // Predicated region
        $region13: #{tpu_custom_call.1} parent=11 // pred_check
          %p181 = pneg %p75
        $region14: #{tpu_custom_call.1} parent=11 // pred_check_branch
          %183 = sbr.rel (%p181) target = $region16
        $region15: #{tpu_custom_call.1} parent=11 // pred_region
          _
        $region16: #{tpu_custom_call.1} parent=11 // pred_fallthru
          _
        // Predicated region
        $region17: #{tpu_custom_call.1} parent=11 // pred_check
          %p184 = pneg %p96
        $region18: #{tpu_custom_call.1} parent=11 // pred_check_branch
          %186 = sbr.rel (%p184) target = $region20
        $region19: #{tpu_custom_call.1} parent=11 // pred_region
          _
        $region20: #{tpu_custom_call.1} parent=11 // pred_fallthru
          _
        // Predicated region
        $region21: #{tpu_custom_call.1} parent=11 // pred_check
          %p187 = pneg %p117
        $region22: #{tpu_custom_call.1} parent=11 // pred_check_branch
          %189 = sbr.rel (%p187) target = $region24
        $region23: #{tpu_custom_call.1} parent=11 // pred_region
          _
        $region24: #{tpu_custom_call.1} parent=11 // pred_fallthru
          _
        // Predicated region
        $region25: #{tpu_custom_call.1} parent=11 // pred_check
          %p190 = pneg %p138
        $region26: #{tpu_custom_call.1} parent=11 // pred_check_branch
          %192 = sbr.rel (%p190) target = $region28
        $region27: #{tpu_custom_call.1} parent=11 // pred_region
          _
        $region28: #{tpu_custom_call.1} parent=11 // pred_fallthru
          _
      $region12: #{tpu_custom_call.1} parent=5 // pred_fallthru
        _
      %p193 = scmp.lt.s32.totalorder %s14, 4
      // Predicated region
      $region29: #{tpu_custom_call.1} parent=5 // pred_check
        %p194 = pneg %p193
      $region30: #{tpu_custom_call.1} parent=5 // pred_check_branch
        %196 = sbr.rel (%p194) target = $region32
      $region31: #{tpu_custom_call.1} parent=5 // pred_region
        // Predicated region
        $region33: #{tpu_custom_call.1} parent=31 // pred_check
          %p197 = pneg %p48
        $region34: #{tpu_custom_call.1} parent=31 // pred_check_branch
          %199 = sbr.rel (%p197) target = $region36
        $region35: #{tpu_custom_call.1} parent=31 // pred_region
          %p200 = scmp.lt.s32.totalorder %s21, 1
          %s201 = scalar_select %p200, %s21, 1
          %p202 = scmp.lt.s32.totalorder %s22, 1
          %s203 = scalar_select %p202, %s22, 1
          %s204 = smul.addr %s203, 30
          %s205 = smul.addr %s201, 60
          %s206 = sadd.s32 %s204, %s205
          %s207 = smul.addr %s206, 4
          %s208 = scalar_lea.vmem %s0, %s207
        $region36: #{tpu_custom_call.1} parent=31 // pred_fallthru
          _
      $region32: #{tpu_custom_call.1} parent=5 // pred_fallthru
        _
      %p209 = scmp.le.s32.totalorder 1, %s14
      %p210 = scmp.lt.s32.totalorder %s14, 5
      %p211 = pnand %p209, %p210
      %p212 = pneg %p211
      // Predicated region
      $region37: #{tpu_custom_call.1} parent=5 // pred_check
        _
      $region38: #{tpu_custom_call.1} parent=5 // pred_check_branch
        %214 = sbr.rel (%p211) target = $region40
      $region39: #{tpu_custom_call.1} parent=5 // pred_region
        %s215 = ssub.s32 %s14, 1
        %p216 = scmp.lt.s32.totalorder %s23, 1
        %s217 = scalar_select %p216, %s23, 1
        %p218 = scmp.lt.s32.totalorder %s24, 1
        %s219 = scalar_select %p218, %s24, 1
        %s220 = smul.addr %s219, 30
        %s221 = smul.addr %s217, 60
        %s222 = sadd.s32 %s220, %s221
        %s223 = smul.addr %s222, 4
        %s224 = scalar_lea.vmem %s0, %s223
        %p225 = pneg %p54
        %p226 = pneg %p51
        %p227 = pneg %p75
        %p228 = pneg %p72
        %p229 = pneg %p96
        %p230 = pneg %p93
        %p231 = pneg %p117
        %p232 = pneg %p114
        %p233 = pneg %p138
        %p234 = pneg %p135
        %p235 = pneg %p166
        %p236 = pneg %p163
        %s237 = sand.u32 %s153, 1
        %s238 = scalar_lea.sflag [#allocation4], %s237
        %s239 = sand.u32 %s153, 1
        %s240 = smul.addr %s239, 128
        %s241 = scalar_lea.vmem [#allocation3], %s240
        %p242 = scmp.lt.s32.totalorder %s23, 1
        %s243 = scalar_select %p242, %s23, 1
        %p244 = scmp.lt.s32.totalorder %s24, 1
        %s245 = scalar_select %p244, %s24, 1
        %s246 = smul.addr %s245, 30
        %s247 = smul.addr %s243, 60
        %s248 = sadd.s32 %s246, %s247
        %s249 = smul.addr %s248, 4
        %s250 = scalar_lea.vmem %s0, %s249
        %v252 = vld [vmem:[%s250] sm:$0xf]
        %v253 = vld [vmem:[%s250 + $0x4] sm:$0xf]
        %v254 = vld [vmem:[%s250 + $0xc] sm:$0xf]
        %v255 = vld [vmem:[%s250 + $0x10] sm:$0xf]
        %v256 = vld [vmem:[%s250 + $0x18] sm:$0xf]
        %v257 = vld [vmem:[%s250 + $0x1c] sm:$0xf]
        %v258 = vld [vmem:[%s250 + $0x24] sm:$0xf]
        %v259 = vld [vmem:[%s250 + $0x28] sm:$0xf]
        %v260 = vld [vmem:[%s250 + $0x30] sm:$0xf]
        %v261 = vld [vmem:[%s250 + $0x34] sm:$0xf]
        %v262 = vld [vmem:[%s250 + $0x3c] sm:$0xf]
        %v263 = vld [vmem:[%s250 + $0x40] sm:$0xf]
        %v264 = vld [vmem:[%s250 + $0x48] sm:$0xf]
        %v265 = vld [vmem:[%s250 + $0x4c] sm:$0xf]
        %v266 = vld [vmem:[%s250 + $0x54] sm:$0xf]
        %v267 = vld [vmem:[%s250 + $0x58] sm:$0xf]
        %v268 = vld [vmem:[%s1] sm:$0xf]
        %v269 = vld [vmem:[%s1 + $0x4] sm:$0xf]
        %v270 = vld [vmem:[%s1 + $0x8] sm:$0xf]
        %v271 = vld [vmem:[%s1 + $0xc] sm:$0xf]
        %v272 = vld [vmem:[%s1 + $0x10] sm:$0xf]
        %v273 = vld [vmem:[%s1 + $0x14] sm:$0xf]
        %v274 = vld [vmem:[%s1 + $0x18] sm:$0xf]
        %v275 = vld [vmem:[%s1 + $0x1c] sm:$0xf]
        %v276 = vld [vmem:[%s1 + $0x20] sm:$0xf]
        %v277 = vld [vmem:[%s1 + $0x24] sm:$0xf]
        %v278 = vld [vmem:[%s1 + $0x28] sm:$0xf]
        %v279 = vld [vmem:[%s1 + $0x2c] sm:$0xf]
        %v280 = vld [vmem:[%s1 + $0x30] sm:$0xf]
        %v281 = vld [vmem:[%s1 + $0x34] sm:$0xf]
        %v282 = vld [vmem:[%s1 + $0x38] sm:$0xf]
        %v283 = vld [vmem:[%s1 + $0x3c] sm:$0xf]
        %v284 = vld [vmem:[%s250 + $0x8] sm:$0x1]
        %v285 = vld [vmem:[%s250 + $0x14] sm:$0x1]
        %v286 = vld [vmem:[%s250 + $0x20] sm:$0x1]
        %v287 = vld [vmem:[%s250 + $0x2c] sm:$0x1]
        %v288 = vld [vmem:[%s250 + $0x38] sm:$0x1]
        %v289 = vld [vmem:[%s250 + $0x44] sm:$0x1]
        %v290 = vld [vmem:[%s250 + $0x50] sm:$0x1]
        %v291 = vld [vmem:[%s250 + $0x5c] sm:$0x1]
        %vm292 = vsmask.f32 3328
        %vm293 = vsmask.f32 7440
        %vm294 = vmor %vm292, %vm293
        %v296 = vshrl.u32 %v252, 16
        %v298 = vrot.slane %v296, 4
        %v299 = vshll.u32 %v252, 16
        %v301 = vrot.slane %v299, 5
        %v302 = vor.u32 %v298, %v301
        %v303 = vrot.slane %v302, 4
        %v305 = vshll.u32 %v253, 16
        %v307 = vrot.slane %v305, 5
        %v308 = vsel %vm294, %v303, %v307
        %v309 = vshrl.u32 %v253, 16
        %v311 = vrot.slane %v309, 4
        %v312 = vor.u32 %v311, %v307
        %v313 = vrot.slane %v312, 4
        %v315 = vshll.u32 %v284, 16
        %v317 = vrot.slane %v315, 5
        %v318 = vsel %vm294, %v313, %v317
        %v320 = vshrl.u32 %v254, 16
        %v322 = vrot.slane %v320, 4
        %v323 = vshll.u32 %v254, 16
        %v325 = vrot.slane %v323, 5
        %v326 = vor.u32 %v322, %v325
        %v327 = vrot.slane %v326, 4
        %v329 = vshll.u32 %v255, 16
        %v331 = vrot.slane %v329, 5
        %v332 = vsel %vm294, %v327, %v331
        %v333 = vshrl.u32 %v255, 16
        %v335 = vrot.slane %v333, 4
        %v336 = vor.u32 %v335, %v331
        %v337 = vrot.slane %v336, 4
        %v339 = vshll.u32 %v285, 16
        %v341 = vrot.slane %v339, 5
        %v342 = vsel %vm294, %v337, %v341
        %v344 = vshrl.u32 %v256, 16
        %v346 = vrot.slane %v344, 4
        %v347 = vshll.u32 %v256, 16
        %v349 = vrot.slane %v347, 5
        %v350 = vor.u32 %v346, %v349
        %v351 = vrot.slane %v350, 4
        %v353 = vshll.u32 %v257, 16
        %v355 = vrot.slane %v353, 5
        %v356 = vsel %vm294, %v351, %v355
        %v357 = vshrl.u32 %v257, 16
        %v359 = vrot.slane %v357, 4
        %v360 = vor.u32 %v359, %v355
        %v361 = vrot.slane %v360, 4
        %v363 = vshll.u32 %v286, 16
        %v365 = vrot.slane %v363, 5
        %v366 = vsel %vm294, %v361, %v365
        %v368 = vshrl.u32 %v258, 16
        %v370 = vrot.slane %v368, 4
        %v371 = vshll.u32 %v258, 16
        %v373 = vrot.slane %v371, 5
        %v374 = vor.u32 %v370, %v373
        %v375 = vrot.slane %v374, 4
        %v377 = vshll.u32 %v259, 16
        %v379 = vrot.slane %v377, 5
        %v380 = vsel %vm294, %v375, %v379
        %v381 = vshrl.u32 %v259, 16
        %v383 = vrot.slane %v381, 4
        %v384 = vor.u32 %v383, %v379
        %v385 = vrot.slane %v384, 4
        %v387 = vshll.u32 %v287, 16
        %v389 = vrot.slane %v387, 5
        %v390 = vsel %vm294, %v385, %v389
        %v392 = vshrl.u32 %v260, 16
        %v394 = vrot.slane %v392, 4
        %v395 = vshll.u32 %v260, 16
        %v397 = vrot.slane %v395, 5
        %v398 = vor.u32 %v394, %v397
        %v399 = vrot.slane %v398, 4
        %v401 = vshll.u32 %v261, 16
        %v403 = vrot.slane %v401, 5
        %v404 = vsel %vm294, %v399, %v403
        %v405 = vshrl.u32 %v261, 16
        %v407 = vrot.slane %v405, 4
        %v408 = vor.u32 %v407, %v403
        %v409 = vrot.slane %v408, 4
        %v411 = vshll.u32 %v288, 16
        %v413 = vrot.slane %v411, 5
        %v414 = vsel %vm294, %v409, %v413
        %v416 = vshrl.u32 %v262, 16
        %v418 = vrot.slane %v416, 4
        %v419 = vshll.u32 %v262, 16
        %v421 = vrot.slane %v419, 5
        %v422 = vor.u32 %v418, %v421
        %v423 = vrot.slane %v422, 4
        %v425 = vshll.u32 %v263, 16
        %v427 = vrot.slane %v425, 5
        %v428 = vsel %vm294, %v423, %v427
        %v429 = vshrl.u32 %v263, 16
        %v431 = vrot.slane %v429, 4
        %v432 = vor.u32 %v431, %v427
        %v433 = vrot.slane %v432, 4
        %v435 = vshll.u32 %v289, 16
        %v437 = vrot.slane %v435, 5
        %v438 = vsel %vm294, %v433, %v437
        %v440 = vshrl.u32 %v264, 16
        %v442 = vrot.slane %v440, 4
        %v443 = vshll.u32 %v264, 16
        %v445 = vrot.slane %v443, 5
        %v446 = vor.u32 %v442, %v445
        %v447 = vrot.slane %v446, 4
        %v449 = vshll.u32 %v265, 16
        %v451 = vrot.slane %v449, 5
        %v452 = vsel %vm294, %v447, %v451
        %v453 = vshrl.u32 %v265, 16
        %v455 = vrot.slane %v453, 4
        %v456 = vor.u32 %v455, %v451
        %v457 = vrot.slane %v456, 4
        %v459 = vshll.u32 %v290, 16
        %v461 = vrot.slane %v459, 5
        %v462 = vsel %vm294, %v457, %v461
        %v464 = vshrl.u32 %v266, 16
        %v466 = vrot.slane %v464, 4
        %v467 = vshll.u32 %v266, 16
        %v469 = vrot.slane %v467, 5
        %v470 = vor.u32 %v466, %v469
        %v471 = vrot.slane %v470, 4
        %v473 = vshll.u32 %v267, 16
        %v475 = vrot.slane %v473, 5
        %v476 = vsel %vm294, %v471, %v475
        %v477 = vshrl.u32 %v267, 16
        %v479 = vrot.slane %v477, 4
        %v480 = vor.u32 %v479, %v475
        %v481 = vrot.slane %v480, 4
        %v483 = vshll.u32 %v291, 16
        %v485 = vrot.slane %v483, 5
        %v486 = vsel %vm294, %v481, %v485
        %s487 = scalar_lea.vmem %s1, 64
        %v488 = vld [vmem:[%s487] sm:$0xf]
        %v489 = vld [vmem:[%s487 + $0x4] sm:$0xf]
        %v490 = vld [vmem:[%s487 + $0x8] sm:$0xf]
        %v491 = vld [vmem:[%s487 + $0xc] sm:$0xf]
        %v492 = vld [vmem:[%s487 + $0x10] sm:$0xf]
        %v493 = vld [vmem:[%s487 + $0x14] sm:$0xf]
        %v494 = vld [vmem:[%s487 + $0x18] sm:$0xf]
        %v495 = vld [vmem:[%s487 + $0x1c] sm:$0xf]
        %v496 = vld [vmem:[%s487 + $0x20] sm:$0xf]
        %v497 = vld [vmem:[%s487 + $0x24] sm:$0xf]
        %v498 = vld [vmem:[%s487 + $0x28] sm:$0xf]
        %v499 = vld [vmem:[%s487 + $0x2c] sm:$0xf]
        %v500 = vld [vmem:[%s487 + $0x30] sm:$0xf]
        %v501 = vld [vmem:[%s487 + $0x34] sm:$0xf]
        %v502 = vld [vmem:[%s487 + $0x38] sm:$0xf]
        %v503 = vld [vmem:[%s487 + $0x3c] sm:$0xf]
        %v504 = vunpack.c.l.b16 %v308
        %v505 = vunpack.c.l.b16 %v318
        %v506 = vunpack.c.l.b16 %v332
        %v507 = vunpack.c.l.b16 %v342
        %v508 = vunpack.c.l.b16 %v356
        %v509 = vunpack.c.l.b16 %v366
        %v510 = vunpack.c.l.b16 %v380
        %v511 = vunpack.c.l.b16 %v390
        %v512 = vunpack.c.l.b16 %v404
        %v513 = vunpack.c.l.b16 %v414
        %v514 = vunpack.c.l.b16 %v428
        %v515 = vunpack.c.l.b16 %v438
        %v516 = vunpack.c.l.b16 %v452
        %v517 = vunpack.c.l.b16 %v462
        %v518 = vunpack.c.l.b16 %v476
        %v519 = vunpack.c.l.b16 %v486
        %v520 = vpack.c.b16 %v505, %v504
        %v521 = vpack.c.b16 %v507, %v506
        %v522 = vpack.c.b16 %v509, %v508
        %v523 = vpack.c.b16 %v511, %v510
        %v524 = vpack.c.b16 %v513, %v512
        %v525 = vpack.c.b16 %v515, %v514
        %v526 = vpack.c.b16 %v517, %v516
        %v527 = vpack.c.b16 %v519, %v518
        %v552 = vunpack.c.l.b16 %v488
        %v553 = vunpack.c.l.b16 %v489
        %v554 = vunpack.c.l.b16 %v490
        %v555 = vunpack.c.l.b16 %v491
        %v556 = vunpack.c.l.b16 %v492
        %v557 = vunpack.c.l.b16 %v493
        %v558 = vunpack.c.l.b16 %v494
        %v559 = vunpack.c.l.b16 %v495
        %v560 = vunpack.c.l.b16 %v496
        %v561 = vunpack.c.l.b16 %v497
        %v562 = vunpack.c.l.b16 %v498
        %v563 = vunpack.c.l.b16 %v499
        %v564 = vunpack.c.l.b16 %v500
        %v565 = vunpack.c.l.b16 %v501
        %v566 = vunpack.c.l.b16 %v502
        %v567 = vunpack.c.l.b16 %v503
        %v568 = vpack.c.b16 %v553, %v552
        %v569 = vpack.c.b16 %v555, %v554
        %v570 = vpack.c.b16 %v557, %v556
        %v571 = vpack.c.b16 %v559, %v558
        %v572 = vpack.c.b16 %v561, %v560
        %v573 = vpack.c.b16 %v563, %v562
        %v574 = vpack.c.b16 %v565, %v564
        %v575 = vpack.c.b16 %v567, %v566
        %584 = vmatprep.subr.bf16.mxu0 0
        %585 = vmatpush1.bf16.msra.mxu0 %v568
        %586 = vmatprep.subr.bf16.mxu0 0
        %587 = vmatpush1.bf16.msra.mxu0 %v569
        %588 = vmatprep.subr.bf16.mxu0 0
        %589 = vmatpush1.bf16.msra.mxu0 %v570
        %590 = vmatprep.subr.bf16.mxu0 0
        %591 = vmatpush1.bf16.msra.mxu0 %v571
        %592 = vmatprep.subr.bf16.mxu0 0
        %593 = vmatpush1.bf16.msra.mxu0 %v572
        %594 = vmatprep.subr.bf16.mxu0 0
        %595 = vmatpush1.bf16.msra.mxu0 %v573
        %596 = vmatprep.subr.bf16.mxu0 0
        %597 = vmatpush1.bf16.msra.mxu0 %v574
        %598 = vmatprep.subr.bf16.mxu0 0
        %599 = vmatpush1.bf16.msra.mxu0 %v575
        %600 = vmatprep.subr.bf16.mxu0 0
        %601 = vmatpush1.bf16.msra.mxu0 0
        %602 = vmatprep.subr.bf16.mxu0 0
        %603 = vmatpush1.bf16.msra.mxu0 0
        %604 = vmatprep.subr.bf16.mxu0 0
        %605 = vmatpush1.bf16.msra.mxu0 0
        %606 = vmatprep.subr.bf16.mxu0 0
        %607 = vmatpush1.bf16.msra.mxu0 0
        %608 = vmatprep.subr.bf16.mxu0 0
        %609 = vmatpush1.bf16.msra.mxu0 0
        %610 = vmatprep.subr.bf16.mxu0 0
        %611 = vmatpush1.bf16.msra.mxu0 0
        %612 = vmatprep.subr.bf16.mxu0 0
        %613 = vmatpush1.bf16.msra.mxu0 0
        %614 = vmatprep.subr.bf16.mxu0 0
        %615 = vmatpush1.bf16.msra.mxu0 0
        %616 = vmatprep.mubr.bf16.mxu0 0
        %617 = vmatmul.mubr.bf16.gmra.mrb[0].mxu0 %v520
        %v618 = vpop.f32.mrb[0].mxu0
        %v619 = vadd.f32 0.0, %v618
        %v620 = vpop.f32.mrb[0].mxu0
        %v621 = vpop.f32.mrb[0].mxu0
        %v622 = vadd.f32 0.0, %v621
        %v623 = vpop.f32.mrb[0].mxu0
        %624 = vmatprep.mubr.bf16.mxu0 0
        %625 = vmatmul.mubr.bf16.gmra.mrb[0].mxu0 %v521
        %v626 = vpop.f32.mrb[0].mxu0
        %v627 = vadd.f32 0.0, %v626
        %v628 = vpop.f32.mrb[0].mxu0
        %v629 = vpop.f32.mrb[0].mxu0
        %v630 = vadd.f32 0.0, %v629
        %v631 = vpop.f32.mrb[0].mxu0
        %632 = vmatprep.mubr.bf16.mxu0 0
        %633 = vmatmul.mubr.bf16.gmra.mrb[0].mxu0 %v522
        %v634 = vpop.f32.mrb[0].mxu0
        %v635 = vadd.f32 0.0, %v634
        %v636 = vpop.f32.mrb[0].mxu0
        %v637 = vpop.f32.mrb[0].mxu0
        %v638 = vadd.f32 0.0, %v637
        %v639 = vpop.f32.mrb[0].mxu0
        %640 = vmatprep.mubr.bf16.mxu0 0
        %641 = vmatmul.mubr.bf16.gmra.mrb[0].mxu0 %v523
        %v642 = vpop.f32.mrb[0].mxu0
        %v643 = vadd.f32 0.0, %v642
        %v644 = vpop.f32.mrb[0].mxu0
        %v645 = vpop.f32.mrb[0].mxu0
        %v646 = vadd.f32 0.0, %v645
        %v647 = vpop.f32.mrb[0].mxu0
        %648 = vmatprep.mubr.bf16.mxu0 0
        %649 = vmatmul.mubr.bf16.gmra.mrb[0].mxu0 %v524
        %v650 = vpop.f32.mrb[0].mxu0
        %v651 = vadd.f32 0.0, %v650
        %v652 = vpop.f32.mrb[0].mxu0
        %v653 = vpop.f32.mrb[0].mxu0
        %v654 = vadd.f32 0.0, %v653
        %v655 = vpop.f32.mrb[0].mxu0
        %656 = vmatprep.mubr.bf16.mxu0 0
        %657 = vmatmul.mubr.bf16.gmra.mrb[0].mxu0 %v525
        %v658 = vpop.f32.mrb[0].mxu0
        %v659 = vadd.f32 0.0, %v658
        %v660 = vpop.f32.mrb[0].mxu0
        %v661 = vpop.f32.mrb[0].mxu0
        %v662 = vadd.f32 0.0, %v661
        %v663 = vpop.f32.mrb[0].mxu0
        %664 = vmatprep.mubr.bf16.mxu0 0
        %665 = vmatmul.mubr.bf16.gmra.mrb[0].mxu0 %v526
        %v666 = vpop.f32.mrb[0].mxu0
        %v667 = vadd.f32 0.0, %v666
        %v668 = vpop.f32.mrb[0].mxu0
        %v669 = vpop.f32.mrb[0].mxu0
        %v670 = vadd.f32 0.0, %v669
        %v671 = vpop.f32.mrb[0].mxu0
        %672 = vmatprep.mubr.bf16.mxu0 0
        %673 = vmatmul.mubr.bf16.gmra.mrb[0].mxu0 %v527
        %v674 = vpop.f32.mrb[0].mxu0
        %v675 = vadd.f32 0.0, %v674
        %v676 = vpop.f32.mrb[0].mxu0
        %v677 = vpop.f32.mrb[0].mxu0
        %v678 = vadd.f32 0.0, %v677
        %v679 = vpop.f32.mrb[0].mxu0
        %680 = vdwg.mxu0
        %v697 = vunpack.c.l.b16 %v252
        %v698 = vunpack.c.l.b16 %v253
        %v699 = vunpack.c.l.b16 %v254
        %v700 = vunpack.c.l.b16 %v255
        %v701 = vunpack.c.l.b16 %v256
        %v702 = vunpack.c.l.b16 %v257
        %v703 = vunpack.c.l.b16 %v258
        %v704 = vunpack.c.l.b16 %v259
        %v705 = vunpack.c.l.b16 %v260
        %v706 = vunpack.c.l.b16 %v261
        %v707 = vunpack.c.l.b16 %v262
        %v708 = vunpack.c.l.b16 %v263
        %v709 = vunpack.c.l.b16 %v264
        %v710 = vunpack.c.l.b16 %v265
        %v711 = vunpack.c.l.b16 %v266
        %v712 = vunpack.c.l.b16 %v267
        %v713 = vpack.c.b16 %v698, %v697
        %v714 = vpack.c.b16 %v700, %v699
        %v715 = vpack.c.b16 %v702, %v701
        %v716 = vpack.c.b16 %v704, %v703
        %v717 = vpack.c.b16 %v706, %v705
        %v718 = vpack.c.b16 %v708, %v707
        %v719 = vpack.c.b16 %v710, %v709
        %v720 = vpack.c.b16 %v712, %v711
        %v745 = vunpack.c.l.b16 %v268
        %v746 = vunpack.c.l.b16 %v269
        %v747 = vunpack.c.l.b16 %v270
        %v748 = vunpack.c.l.b16 %v271
        %v749 = vunpack.c.l.b16 %v272
        %v750 = vunpack.c.l.b16 %v273
        %v751 = vunpack.c.l.b16 %v274
        %v752 = vunpack.c.l.b16 %v275
        %v753 = vunpack.c.l.b16 %v276
        %v754 = vunpack.c.l.b16 %v277
        %v755 = vunpack.c.l.b16 %v278
        %v756 = vunpack.c.l.b16 %v279
        %v757 = vunpack.c.l.b16 %v280
        %v758 = vunpack.c.l.b16 %v281
        %v759 = vunpack.c.l.b16 %v282
        %v760 = vunpack.c.l.b16 %v283
        %v761 = vpack.c.b16 %v746, %v745
        %v762 = vpack.c.b16 %v748, %v747
        %v763 = vpack.c.b16 %v750, %v749
        %v764 = vpack.c.b16 %v752, %v751
        %v765 = vpack.c.b16 %v754, %v753
        %v766 = vpack.c.b16 %v756, %v755
        %v767 = vpack.c.b16 %v758, %v757
        %v768 = vpack.c.b16 %v760, %v759
        %777 = vmatprep.subr.bf16.mxu0 0
        %778 = vmatpush1.bf16.msra.mxu0 %v761
        %779 = vmatprep.subr.bf16.mxu0 0
        %780 = vmatpush1.bf16.msra.mxu0 %v762
        %781 = vmatprep.subr.bf16.mxu0 0
        %782 = vmatpush1.bf16.msra.mxu0 %v763
        %783 = vmatprep.subr.bf16.mxu0 0
        %784 = vmatpush1.bf16.msra.mxu0 %v764
        %785 = vmatprep.subr.bf16.mxu0 0
        %786 = vmatpush1.bf16.msra.mxu0 %v765
        %787 = vmatprep.subr.bf16.mxu0 0
        %788 = vmatpush1.bf16.msra.mxu0 %v766
        %789 = vmatprep.subr.bf16.mxu0 0
        %790 = vmatpush1.bf16.msra.mxu0 %v767
        %791 = vmatprep.subr.bf16.mxu0 0
        %792 = vmatpush1.bf16.msra.mxu0 %v768
        %793 = vmatprep.subr.bf16.mxu0 0
        %794 = vmatpush1.bf16.msra.mxu0 0
        %795 = vmatprep.subr.bf16.mxu0 0
        %796 = vmatpush1.bf16.msra.mxu0 0
        %797 = vmatprep.subr.bf16.mxu0 0
        %798 = vmatpush1.bf16.msra.mxu0 0
        %799 = vmatprep.subr.bf16.mxu0 0
        %800 = vmatpush1.bf16.msra.mxu0 0
        %801 = vmatprep.subr.bf16.mxu0 0
        %802 = vmatpush1.bf16.msra.mxu0 0
        %803 = vmatprep.subr.bf16.mxu0 0
        %804 = vmatpush1.bf16.msra.mxu0 0
        %805 = vmatprep.subr.bf16.mxu0 0
        %806 = vmatpush1.bf16.msra.mxu0 0
        %807 = vmatprep.subr.bf16.mxu0 0
        %808 = vmatpush1.bf16.msra.mxu0 0
        %809 = vmatprep.mubr.bf16.mxu0 0
        %810 = vmatmul.mubr.bf16.gmra.mrb[0].mxu0 %v713
        %v811 = vpop.f32.mrb[0].mxu0
        %v812 = vadd.f32 %v619, %v811
        %v813 = vpop.f32.mrb[0].mxu0
        %v814 = vpop.f32.mrb[0].mxu0
        %v815 = vadd.f32 %v622, %v814
        %v816 = vpop.f32.mrb[0].mxu0
        %817 = vmatprep.mubr.bf16.mxu0 0
        %818 = vmatmul.mubr.bf16.gmra.mrb[0].mxu0 %v714
        %v819 = vpop.f32.mrb[0].mxu0
        %v820 = vadd.f32 %v627, %v819
        %v821 = vpop.f32.mrb[0].mxu0
        %v822 = vpop.f32.mrb[0].mxu0
        %v823 = vadd.f32 %v630, %v822
        %v824 = vpop.f32.mrb[0].mxu0
        %825 = vmatprep.mubr.bf16.mxu0 0
        %826 = vmatmul.mubr.bf16.gmra.mrb[0].mxu0 %v715
        %v827 = vpop.f32.mrb[0].mxu0
        %v828 = vadd.f32 %v635, %v827
        %v829 = vpop.f32.mrb[0].mxu0
        %v830 = vpop.f32.mrb[0].mxu0
        %v831 = vadd.f32 %v638, %v830
        %v832 = vpop.f32.mrb[0].mxu0
        %833 = vmatprep.mubr.bf16.mxu0 0
        %834 = vmatmul.mubr.bf16.gmra.mrb[0].mxu0 %v716
        %v835 = vpop.f32.mrb[0].mxu0
        %v836 = vadd.f32 %v643, %v835
        %v837 = vpop.f32.mrb[0].mxu0
        %v838 = vpop.f32.mrb[0].mxu0
        %v839 = vadd.f32 %v646, %v838
        %v840 = vpop.f32.mrb[0].mxu0
        %841 = vmatprep.mubr.bf16.mxu0 0
        %842 = vmatmul.mubr.bf16.gmra.mrb[0].mxu0 %v717
        %v843 = vpop.f32.mrb[0].mxu0
        %v844 = vadd.f32 %v651, %v843
        %v845 = vpop.f32.mrb[0].mxu0
        %v846 = vpop.f32.mrb[0].mxu0
        %v847 = vadd.f32 %v654, %v846
        %v848 = vpop.f32.mrb[0].mxu0
        %849 = vmatprep.mubr.bf16.mxu0 0
        %850 = vmatmul.mubr.bf16.gmra.mrb[0].mxu0 %v718
        %v851 = vpop.f32.mrb[0].mxu0
        %v852 = vadd.f32 %v659, %v851
        %v853 = vpop.f32.mrb[0].mxu0
        %v854 = vpop.f32.mrb[0].mxu0
        %v855 = vadd.f32 %v662, %v854
        %v856 = vpop.f32.mrb[0].mxu0
        %857 = vmatprep.mubr.bf16.mxu0 0
        %858 = vmatmul.mubr.bf16.gmra.mrb[0].mxu0 %v719
        %v859 = vpop.f32.mrb[0].mxu0
        %v860 = vadd.f32 %v667, %v859
        %v861 = vpop.f32.mrb[0].mxu0
        %v862 = vpop.f32.mrb[0].mxu0
        %v863 = vadd.f32 %v670, %v862
        %v864 = vpop.f32.mrb[0].mxu0
        %865 = vmatprep.mubr.bf16.mxu0 0
        %866 = vmatmul.mubr.bf16.gmra.mrb[0].mxu0 %v720
        %v867 = vpop.f32.mrb[0].mxu0
        %v868 = vadd.f32 %v675, %v867
        %v869 = vpop.f32.mrb[0].mxu0
        %v870 = vpop.f32.mrb[0].mxu0
        %v871 = vadd.f32 %v678, %v870
        %v872 = vpop.f32.mrb[0].mxu0
        %873 = vdwg.mxu0
        %v874 = vld [vmem:[%s250] sm:$0xe]
        %v875 = vld [vmem:[%s250 + $0xc] sm:$0xe]
        %v876 = vld [vmem:[%s250 + $0x18] sm:$0xe]
        %v877 = vld [vmem:[%s250 + $0x24] sm:$0xe]
        %v878 = vld [vmem:[%s250 + $0x30] sm:$0xe]
        %v879 = vld [vmem:[%s250 + $0x3c] sm:$0xe]
        %v880 = vld [vmem:[%s250 + $0x48] sm:$0xe]
        %v881 = vld [vmem:[%s250 + $0x54] sm:$0xe]
        %vm898 = vcmask 1042432
        %vm899 = vcmask 1046532
        %vm900 = vmor %vm898, %vm899
        %v901 = vrot.slane %v874, 5
        %v902 = vrot.slane %v901, 4
        %v903 = vrot.slane %v253, 5
        %v904 = vsel %vm900, %v902, %v903
        %v905 = vrot.slane %v903, 4
        %v906 = vrot.slane %v284, 5
        %v907 = vsel %vm900, %v905, %v906
        %v908 = vrot.slane %v875, 5
        %v909 = vrot.slane %v908, 4
        %v910 = vrot.slane %v255, 5
        %v911 = vsel %vm900, %v909, %v910
        %v912 = vrot.slane %v910, 4
        %v913 = vrot.slane %v285, 5
        %v914 = vsel %vm900, %v912, %v913
        %v915 = vrot.slane %v876, 5
        %v916 = vrot.slane %v915, 4
        %v917 = vrot.slane %v257, 5
        %v918 = vsel %vm900, %v916, %v917
        %v919 = vrot.slane %v917, 4
        %v920 = vrot.slane %v286, 5
        %v921 = vsel %vm900, %v919, %v920
        %v922 = vrot.slane %v877, 5
        %v923 = vrot.slane %v922, 4
        %v924 = vrot.slane %v259, 5
        %v925 = vsel %vm900, %v923, %v924
        %v926 = vrot.slane %v924, 4
        %v927 = vrot.slane %v287, 5
        %v928 = vsel %vm900, %v926, %v927
        %v929 = vrot.slane %v878, 5
        %v930 = vrot.slane %v929, 4
        %v931 = vrot.slane %v261, 5
        %v932 = vsel %vm900, %v930, %v931
        %v933 = vrot.slane %v931, 4
        %v934 = vrot.slane %v288, 5
        %v935 = vsel %vm900, %v933, %v934
        %v936 = vrot.slane %v879, 5
        %v937 = vrot.slane %v936, 4
        %v938 = vrot.slane %v263, 5
        %v939 = vsel %vm900, %v937, %v938
        %v940 = vrot.slane %v938, 4
        %v941 = vrot.slane %v289, 5
        %v942 = vsel %vm900, %v940, %v941
        %v943 = vrot.slane %v880, 5
        %v944 = vrot.slane %v943, 4
        %v945 = vrot.slane %v265, 5
        %v946 = vsel %vm900, %v944, %v945
        %v947 = vrot.slane %v945, 4
        %v948 = vrot.slane %v290, 5
        %v949 = vsel %vm900, %v947, %v948
        %v950 = vrot.slane %v881, 5
        %v951 = vrot.slane %v950, 4
        %v952 = vrot.slane %v267, 5
        %v953 = vsel %vm900, %v951, %v952
        %v954 = vrot.slane %v952, 4
        %v955 = vrot.slane %v291, 5
        %v956 = vsel %vm900, %v954, %v955
        %s957 = scalar_lea.vmem %s1, 128
        %v958 = vld [vmem:[%s957] sm:$0xf]
        %v959 = vld [vmem:[%s957 + $0x4] sm:$0xf]
        %v960 = vld [vmem:[%s957 + $0x8] sm:$0xf]
        %v961 = vld [vmem:[%s957 + $0xc] sm:$0xf]
        %v962 = vld [vmem:[%s957 + $0x10] sm:$0xf]
        %v963 = vld [vmem:[%s957 + $0x14] sm:$0xf]
        %v964 = vld [vmem:[%s957 + $0x18] sm:$0xf]
        %v965 = vld [vmem:[%s957 + $0x1c] sm:$0xf]
        %v966 = vld [vmem:[%s957 + $0x20] sm:$0xf]
        %v967 = vld [vmem:[%s957 + $0x24] sm:$0xf]
        %v968 = vld [vmem:[%s957 + $0x28] sm:$0xf]
        %v969 = vld [vmem:[%s957 + $0x2c] sm:$0xf]
        %v970 = vld [vmem:[%s957 + $0x30] sm:$0xf]
        %v971 = vld [vmem:[%s957 + $0x34] sm:$0xf]
        %v972 = vld [vmem:[%s957 + $0x38] sm:$0xf]
        %v973 = vld [vmem:[%s957 + $0x3c] sm:$0xf]
        %v974 = vunpack.c.l.b16 %v904
        %v975 = vunpack.c.l.b16 %v907
        %v976 = vunpack.c.l.b16 %v911
        %v977 = vunpack.c.l.b16 %v914
        %v978 = vunpack.c.l.b16 %v918
        %v979 = vunpack.c.l.b16 %v921
        %v980 = vunpack.c.l.b16 %v925
        %v981 = vunpack.c.l.b16 %v928
        %v982 = vunpack.c.l.b16 %v932
        %v983 = vunpack.c.l.b16 %v935
        %v984 = vunpack.c.l.b16 %v939
        %v985 = vunpack.c.l.b16 %v942
        %v986 = vunpack.c.l.b16 %v946
        %v987 = vunpack.c.l.b16 %v949
        %v988 = vunpack.c.l.b16 %v953
        %v989 = vunpack.c.l.b16 %v956
        %v990 = vpack.c.b16 %v975, %v974
        %v991 = vpack.c.b16 %v977, %v976
        %v992 = vpack.c.b16 %v979, %v978
        %v993 = vpack.c.b16 %v981, %v980
        %v994 = vpack.c.b16 %v983, %v982
        %v995 = vpack.c.b16 %v985, %v984
        %v996 = vpack.c.b16 %v987, %v986
        %v997 = vpack.c.b16 %v989, %v988
        %v1022 = vunpack.c.l.b16 %v958
        %v1023 = vunpack.c.l.b16 %v959
        %v1024 = vunpack.c.l.b16 %v960
        %v1025 = vunpack.c.l.b16 %v961
        %v1026 = vunpack.c.l.b16 %v962
        %v1027 = vunpack.c.l.b16 %v963
        %v1028 = vunpack.c.l.b16 %v964
        %v1029 = vunpack.c.l.b16 %v965
        %v1030 = vunpack.c.l.b16 %v966
        %v1031 = vunpack.c.l.b16 %v967
        %v1032 = vunpack.c.l.b16 %v968
        %v1033 = vunpack.c.l.b16 %v969
        %v1034 = vunpack.c.l.b16 %v970
        %v1035 = vunpack.c.l.b16 %v971
        %v1036 = vunpack.c.l.b16 %v972
        %v1037 = vunpack.c.l.b16 %v973
        %v1038 = vpack.c.b16 %v1023, %v1022
        %v1039 = vpack.c.b16 %v1025, %v1024
        %v1040 = vpack.c.b16 %v1027, %v1026
        %v1041 = vpack.c.b16 %v1029, %v1028
        %v1042 = vpack.c.b16 %v1031, %v1030
        %v1043 = vpack.c.b16 %v1033, %v1032
        %v1044 = vpack.c.b16 %v1035, %v1034
        %v1045 = vpack.c.b16 %v1037, %v1036
        %1054 = vmatprep.subr.bf16.mxu0 0
        %1055 = vmatpush1.bf16.msra.mxu0 %v1038
        %1056 = vmatprep.subr.bf16.mxu0 0
        %1057 = vmatpush1.bf16.msra.mxu0 %v1039
        %1058 = vmatprep.subr.bf16.mxu0 0
        %1059 = vmatpush1.bf16.msra.mxu0 %v1040
        %1060 = vmatprep.subr.bf16.mxu0 0
        %1061 = vmatpush1.bf16.msra.mxu0 %v1041
        %1062 = vmatprep.subr.bf16.mxu0 0
        %1063 = vmatpush1.bf16.msra.mxu0 %v1042
        %1064 = vmatprep.subr.bf16.mxu0 0
        %1065 = vmatpush1.bf16.msra.mxu0 %v1043
        %1066 = vmatprep.subr.bf16.mxu0 0
        %1067 = vmatpush1.bf16.msra.mxu0 %v1044
        %1068 = vmatprep.subr.bf16.mxu0 0
        %1069 = vmatpush1.bf16.msra.mxu0 %v1045
        %1070 = vmatprep.subr.bf16.mxu0 0
        %1071 = vmatpush1.bf16.msra.mxu0 0
        %1072 = vmatprep.subr.bf16.mxu0 0
        %1073 = vmatpush1.bf16.msra.mxu0 0
        %1074 = vmatprep.subr.bf16.mxu0 0
        %1075 = vmatpush1.bf16.msra.mxu0 0
        %1076 = vmatprep.subr.bf16.mxu0 0
        %1077 = vmatpush1.bf16.msra.mxu0 0
        %1078 = vmatprep.subr.bf16.mxu0 0
        %1079 = vmatpush1.bf16.msra.mxu0 0
        %1080 = vmatprep.subr.bf16.mxu0 0
        %1081 = vmatpush1.bf16.msra.mxu0 0
        %1082 = vmatprep.subr.bf16.mxu0 0
        %1083 = vmatpush1.bf16.msra.mxu0 0
        %1084 = vmatprep.subr.bf16.mxu0 0
        %1085 = vmatpush1.bf16.msra.mxu0 0
        %1086 = vmatprep.mubr.bf16.mxu0 0
        %1087 = vmatmul.mubr.bf16.gmra.mrb[0].mxu0 %v990
        %v1088 = vpop.f32.mrb[0].mxu0
        %v1089 = vadd.f32 0.0, %v1088
        %v1090 = vpop.f32.mrb[0].mxu0
        %v1091 = vpop.f32.mrb[0].mxu0
        %v1092 = vadd.f32 0.0, %v1091
        %v1093 = vpop.f32.mrb[0].mxu0
        %1094 = vmatprep.mubr.bf16.mxu0 0
        %1095 = vmatmul.mubr.bf16.gmra.mrb[0].mxu0 %v991
        %v1096 = vpop.f32.mrb[0].mxu0
        %v1097 = vadd.f32 0.0, %v1096
        %v1098 = vpop.f32.mrb[0].mxu0
        %v1099 = vpop.f32.mrb[0].mxu0
        %v1100 = vadd.f32 0.0, %v1099
        %v1101 = vpop.f32.mrb[0].mxu0
        %1102 = vmatprep.mubr.bf16.mxu0 0
        %1103 = vmatmul.mubr.bf16.gmra.mrb[0].mxu0 %v992
        %v1104 = vpop.f32.mrb[0].mxu0
        %v1105 = vadd.f32 0.0, %v1104
        %v1106 = vpop.f32.mrb[0].mxu0
        %v1107 = vpop.f32.mrb[0].mxu0
        %v1108 = vadd.f32 0.0, %v1107
        %v1109 = vpop.f32.mrb[0].mxu0
        %1110 = vmatprep.mubr.bf16.mxu0 0
        %1111 = vmatmul.mubr.bf16.gmra.mrb[0].mxu0 %v993
        %v1112 = vpop.f32.mrb[0].mxu0
        %v1113 = vadd.f32 0.0, %v1112
        %v1114 = vpop.f32.mrb[0].mxu0
        %v1115 = vpop.f32.mrb[0].mxu0
        %v1116 = vadd.f32 0.0, %v1115
        %v1117 = vpop.f32.mrb[0].mxu0
        %1118 = vmatprep.mubr.bf16.mxu0 0
        %1119 = vmatmul.mubr.bf16.gmra.mrb[0].mxu0 %v994
        %v1120 = vpop.f32.mrb[0].mxu0
        %v1121 = vadd.f32 0.0, %v1120
        %v1122 = vpop.f32.mrb[0].mxu0
        %v1123 = vpop.f32.mrb[0].mxu0
        %v1124 = vadd.f32 0.0, %v1123
        %v1125 = vpop.f32.mrb[0].mxu0
        %1126 = vmatprep.mubr.bf16.mxu0 0
        %1127 = vmatmul.mubr.bf16.gmra.mrb[0].mxu0 %v995
        %v1128 = vpop.f32.mrb[0].mxu0
        %v1129 = vadd.f32 0.0, %v1128
        %v1130 = vpop.f32.mrb[0].mxu0
        %v1131 = vpop.f32.mrb[0].mxu0
        %v1132 = vadd.f32 0.0, %v1131
        %v1133 = vpop.f32.mrb[0].mxu0
        %1134 = vmatprep.mubr.bf16.mxu0 0
        %1135 = vmatmul.mubr.bf16.gmra.mrb[0].mxu0 %v996
        %v1136 = vpop.f32.mrb[0].mxu0
        %v1137 = vadd.f32 0.0, %v1136
        %v1138 = vpop.f32.mrb[0].mxu0
        %v1139 = vpop.f32.mrb[0].mxu0
        %v1140 = vadd.f32 0.0, %v1139
        %v1141 = vpop.f32.mrb[0].mxu0
        %1142 = vmatprep.mubr.bf16.mxu0 0
        %1143 = vmatmul.mubr.bf16.gmra.mrb[0].mxu0 %v997
        %v1144 = vpop.f32.mrb[0].mxu0
        %v1145 = vadd.f32 0.0, %v1144
        %v1146 = vpop.f32.mrb[0].mxu0
        %v1147 = vpop.f32.mrb[0].mxu0
        %v1148 = vadd.f32 0.0, %v1147
        %v1149 = vpop.f32.mrb[0].mxu0
        %1150 = vdwg.mxu0
        %v1151 = vadd.f32 %v812, %v1089
        %v1152 = vadd.f32 %v815, %v1092
        %v1153 = vadd.f32 %v820, %v1097
        %v1154 = vadd.f32 %v823, %v1100
        %v1155 = vadd.f32 %v828, %v1105
        %v1156 = vadd.f32 %v831, %v1108
        %v1157 = vadd.f32 %v836, %v1113
        %v1158 = vadd.f32 %v839, %v1116
        %v1159 = vadd.f32 %v844, %v1121
        %v1160 = vadd.f32 %v847, %v1124
        %v1161 = vadd.f32 %v852, %v1129
        %v1162 = vadd.f32 %v855, %v1132
        %v1163 = vadd.f32 %v860, %v1137
        %v1164 = vadd.f32 %v863, %v1140
        %v1165 = vadd.f32 %v868, %v1145
        %v1166 = vadd.f32 %v871, %v1148
        %1167 = vst [vmem:[#allocation2] sm:$0xff] %v1151
        %1168 = vst [vmem:[#allocation2 + $0x8] sm:$0xff] %v1152
        %1169 = vst [vmem:[#allocation2 + $0x10] sm:$0xff] %v1153
        %1170 = vst [vmem:[#allocation2 + $0x18] sm:$0xff] %v1154
        %1171 = vst [vmem:[#allocation2 + $0x20] sm:$0xff] %v1155
        %1172 = vst [vmem:[#allocation2 + $0x28] sm:$0xff] %v1156
        %1173 = vst [vmem:[#allocation2 + $0x30] sm:$0xff] %v1157
        %1174 = vst [vmem:[#allocation2 + $0x38] sm:$0xff] %v1158
        %1175 = vst [vmem:[#allocation2 + $0x40] sm:$0xff] %v1159
        %1176 = vst [vmem:[#allocation2 + $0x48] sm:$0xff] %v1160
        %1177 = vst [vmem:[#allocation2 + $0x50] sm:$0xff] %v1161
        %1178 = vst [vmem:[#allocation2 + $0x58] sm:$0xff] %v1162
        %1179 = vst [vmem:[#allocation2 + $0x60] sm:$0xff] %v1163
        %1180 = vst [vmem:[#allocation2 + $0x68] sm:$0xff] %v1164
        %1181 = vst [vmem:[#allocation2 + $0x70] sm:$0xff] %v1165
        %1182 = vst [vmem:[#allocation2 + $0x78] sm:$0xff] %v1166
        %v1183 = vld [vmem:[#allocation2] sm:$0xff]
        %v1184 = vld [vmem:[#allocation2 + $0x8] sm:$0xff]
        %v1185 = vld [vmem:[#allocation2 + $0x10] sm:$0xff]
        %v1186 = vld [vmem:[#allocation2 + $0x18] sm:$0xff]
        %v1187 = vld [vmem:[#allocation2 + $0x20] sm:$0xff]
        %v1188 = vld [vmem:[#allocation2 + $0x28] sm:$0xff]
        %v1189 = vld [vmem:[#allocation2 + $0x30] sm:$0xff]
        %v1190 = vld [vmem:[#allocation2 + $0x38] sm:$0xff]
        %v1191 = vld [vmem:[#allocation2 + $0x40] sm:$0xff]
        %v1192 = vld [vmem:[#allocation2 + $0x48] sm:$0xff]
        %v1193 = vld [vmem:[#allocation2 + $0x50] sm:$0xff]
        %v1194 = vld [vmem:[#allocation2 + $0x58] sm:$0xff]
        %v1195 = vld [vmem:[#allocation2 + $0x60] sm:$0xff]
        %v1196 = vld [vmem:[#allocation2 + $0x68] sm:$0xff]
        %v1197 = vld [vmem:[#allocation2 + $0x70] sm:$0xff]
        %v1198 = vld [vmem:[#allocation2 + $0x78] sm:$0xff]
        %s1199 = scalar_lea.vmem %s250, 12
        %v1200 = vld [vmem:[%s1199] sm:$0xf]
        %v1201 = vld [vmem:[%s1199 + $0x4] sm:$0xf]
        %v1202 = vld [vmem:[%s1199 + $0xc] sm:$0xf]
        %v1203 = vld [vmem:[%s1199 + $0x10] sm:$0xf]
        %v1204 = vld [vmem:[%s1199 + $0x18] sm:$0xf]
        %v1205 = vld [vmem:[%s1199 + $0x1c] sm:$0xf]
        %v1206 = vld [vmem:[%s1199 + $0x24] sm:$0xf]
        %v1207 = vld [vmem:[%s1199 + $0x28] sm:$0xf]
        %v1208 = vld [vmem:[%s1199 + $0x30] sm:$0xf]
        %v1209 = vld [vmem:[%s1199 + $0x34] sm:$0xf]
        %v1210 = vld [vmem:[%s1199 + $0x3c] sm:$0xf]
        %v1211 = vld [vmem:[%s1199 + $0x40] sm:$0xf]
        %v1212 = vld [vmem:[%s1199 + $0x48] sm:$0xf]
        %v1213 = vld [vmem:[%s1199 + $0x4c] sm:$0xf]
        %v1214 = vld [vmem:[%s1199 + $0x54] sm:$0xf]
        %v1215 = vld [vmem:[%s1199 + $0x58] sm:$0xf]
        %s1216 = scalar_lea.vmem %s1, 192
        %v1217 = vld [vmem:[%s1216] sm:$0xf]
        %v1218 = vld [vmem:[%s1216 + $0x4] sm:$0xf]
        %v1219 = vld [vmem:[%s1216 + $0x8] sm:$0xf]
        %v1220 = vld [vmem:[%s1216 + $0xc] sm:$0xf]
        %v1221 = vld [vmem:[%s1216 + $0x10] sm:$0xf]
        %v1222 = vld [vmem:[%s1216 + $0x14] sm:$0xf]
        %v1223 = vld [vmem:[%s1216 + $0x18] sm:$0xf]
        %v1224 = vld [vmem:[%s1216 + $0x1c] sm:$0xf]
        %v1225 = vld [vmem:[%s1216 + $0x20] sm:$0xf]
        %v1226 = vld [vmem:[%s1216 + $0x24] sm:$0xf]
        %v1227 = vld [vmem:[%s1216 + $0x28] sm:$0xf]
        %v1228 = vld [vmem:[%s1216 + $0x2c] sm:$0xf]
        %v1229 = vld [vmem:[%s1216 + $0x30] sm:$0xf]
        %v1230 = vld [vmem:[%s1216 + $0x34] sm:$0xf]
        %v1231 = vld [vmem:[%s1216 + $0x38] sm:$0xf]
        %v1232 = vld [vmem:[%s1216 + $0x3c] sm:$0xf]
        %v1233 = vld [vmem:[%s1199 + $0x8] sm:$0x1]
        %v1234 = vld [vmem:[%s1199 + $0x14] sm:$0x1]
        %v1235 = vld [vmem:[%s1199 + $0x20] sm:$0x1]
        %v1236 = vld [vmem:[%s1199 + $0x2c] sm:$0x1]
        %v1237 = vld [vmem:[%s1199 + $0x38] sm:$0x1]
        %v1238 = vld [vmem:[%s1199 + $0x44] sm:$0x1]
        %v1239 = vld [vmem:[%s1199 + $0x50] sm:$0x1]
        %v1240 = vld [vmem:[%s1199 + $0x5c] sm:$0x1]
        %v1242 = vshrl.u32 %v1200, 16
        %v1244 = vrot.slane %v1242, 4
        %v1245 = vshll.u32 %v1200, 16
        %v1247 = vrot.slane %v1245, 5
        %v1248 = vor.u32 %v1244, %v1247
        %v1249 = vrot.slane %v1248, 4
        %v1251 = vshll.u32 %v1201, 16
        %v1253 = vrot.slane %v1251, 5
        %v1254 = vsel %vm294, %v1249, %v1253
        %v1255 = vshrl.u32 %v1201, 16
        %v1257 = vrot.slane %v1255, 4
        %v1258 = vor.u32 %v1257, %v1253
        %v1259 = vrot.slane %v1258, 4
        %v1261 = vshll.u32 %v1233, 16
        %v1263 = vrot.slane %v1261, 5
        %v1264 = vsel %vm294, %v1259, %v1263
        %v1266 = vshrl.u32 %v1202, 16
        %v1268 = vrot.slane %v1266, 4
        %v1269 = vshll.u32 %v1202, 16
        %v1271 = vrot.slane %v1269, 5
        %v1272 = vor.u32 %v1268, %v1271
        %v1273 = vrot.slane %v1272, 4
        %v1275 = vshll.u32 %v1203, 16
        %v1277 = vrot.slane %v1275, 5
        %v1278 = vsel %vm294, %v1273, %v1277
        %v1279 = vshrl.u32 %v1203, 16
        %v1281 = vrot.slane %v1279, 4
        %v1282 = vor.u32 %v1281, %v1277
        %v1283 = vrot.slane %v1282, 4
        %v1285 = vshll.u32 %v1234, 16
        %v1287 = vrot.slane %v1285, 5
        %v1288 = vsel %vm294, %v1283, %v1287
        %v1290 = vshrl.u32 %v1204, 16
        %v1292 = vrot.slane %v1290, 4
        %v1293 = vshll.u32 %v1204, 16
        %v1295 = vrot.slane %v1293, 5
        %v1296 = vor.u32 %v1292, %v1295
        %v1297 = vrot.slane %v1296, 4
        %v1299 = vshll.u32 %v1205, 16
        %v1301 = vrot.slane %v1299, 5
        %v1302 = vsel %vm294, %v1297, %v1301
        %v1303 = vshrl.u32 %v1205, 16
        %v1305 = vrot.slane %v1303, 4
        %v1306 = vor.u32 %v1305, %v1301
        %v1307 = vrot.slane %v1306, 4
        %v1309 = vshll.u32 %v1235, 16
        %v1311 = vrot.slane %v1309, 5
        %v1312 = vsel %vm294, %v1307, %v1311
        %v1314 = vshrl.u32 %v1206, 16
        %v1316 = vrot.slane %v1314, 4
        %v1317 = vshll.u32 %v1206, 16
        %v1319 = vrot.slane %v1317, 5
        %v1320 = vor.u32 %v1316, %v1319
        %v1321 = vrot.slane %v1320, 4
        %v1323 = vshll.u32 %v1207, 16
        %v1325 = vrot.slane %v1323, 5
        %v1326 = vsel %vm294, %v1321, %v1325
        %v1327 = vshrl.u32 %v1207, 16
        %v1329 = vrot.slane %v1327, 4
        %v1330 = vor.u32 %v1329, %v1325
        %v1331 = vrot.slane %v1330, 4
        %v1333 = vshll.u32 %v1236, 16
        %v1335 = vrot.slane %v1333, 5
        %v1336 = vsel %vm294, %v1331, %v1335
        %v1338 = vshrl.u32 %v1208, 16
        %v1340 = vrot.slane %v1338, 4
        %v1341 = vshll.u32 %v1208, 16
        %v1343 = vrot.slane %v1341, 5
        %v1344 = vor.u32 %v1340, %v1343
        %v1345 = vrot.slane %v1344, 4
        %v1347 = vshll.u32 %v1209, 16
        %v1349 = vrot.slane %v1347, 5
        %v1350 = vsel %vm294, %v1345, %v1349
        %v1351 = vshrl.u32 %v1209, 16
        %v1353 = vrot.slane %v1351, 4
        %v1354 = vor.u32 %v1353, %v1349
        %v1355 = vrot.slane %v1354, 4
        %v1357 = vshll.u32 %v1237, 16
        %v1359 = vrot.slane %v1357, 5
        %v1360 = vsel %vm294, %v1355, %v1359
        %v1362 = vshrl.u32 %v1210, 16
        %v1364 = vrot.slane %v1362, 4
        %v1365 = vshll.u32 %v1210, 16
        %v1367 = vrot.slane %v1365, 5
        %v1368 = vor.u32 %v1364, %v1367
        %v1369 = vrot.slane %v1368, 4
        %v1371 = vshll.u32 %v1211, 16
        %v1373 = vrot.slane %v1371, 5
        %v1374 = vsel %vm294, %v1369, %v1373
        %v1375 = vshrl.u32 %v1211, 16
        %v1377 = vrot.slane %v1375, 4
        %v1378 = vor.u32 %v1377, %v1373
        %v1379 = vrot.slane %v1378, 4
        %v1381 = vshll.u32 %v1238, 16
        %v1383 = vrot.slane %v1381, 5
        %v1384 = vsel %vm294, %v1379, %v1383
        %v1386 = vshrl.u32 %v1212, 16
        %v1388 = vrot.slane %v1386, 4
        %v1389 = vshll.u32 %v1212, 16
        %v1391 = vrot.slane %v1389, 5
        %v1392 = vor.u32 %v1388, %v1391
        %v1393 = vrot.slane %v1392, 4
        %v1395 = vshll.u32 %v1213, 16
        %v1397 = vrot.slane %v1395, 5
        %v1398 = vsel %vm294, %v1393, %v1397
        %v1399 = vshrl.u32 %v1213, 16
        %v1401 = vrot.slane %v1399, 4
        %v1402 = vor.u32 %v1401, %v1397
        %v1403 = vrot.slane %v1402, 4
        %v1405 = vshll.u32 %v1239, 16
        %v1407 = vrot.slane %v1405, 5
        %v1408 = vsel %vm294, %v1403, %v1407
        %v1410 = vshrl.u32 %v1214, 16
        %v1412 = vrot.slane %v1410, 4
        %v1413 = vshll.u32 %v1214, 16
        %v1415 = vrot.slane %v1413, 5
        %v1416 = vor.u32 %v1412, %v1415
        %v1417 = vrot.slane %v1416, 4
        %v1419 = vshll.u32 %v1215, 16
        %v1421 = vrot.slane %v1419, 5
        %v1422 = vsel %vm294, %v1417, %v1421
        %v1423 = vshrl.u32 %v1215, 16
        %v1425 = vrot.slane %v1423, 4
        %v1426 = vor.u32 %v1425, %v1421
        %v1427 = vrot.slane %v1426, 4
        %v1429 = vshll.u32 %v1240, 16
        %v1431 = vrot.slane %v1429, 5
        %v1432 = vsel %vm294, %v1427, %v1431
        %s1433 = scalar_lea.vmem %s1, 256
        %v1434 = vld [vmem:[%s1433] sm:$0xf]
        %v1435 = vld [vmem:[%s1433 + $0x4] sm:$0xf]
        %v1436 = vld [vmem:[%s1433 + $0x8] sm:$0xf]
        %v1437 = vld [vmem:[%s1433 + $0xc] sm:$0xf]
        %v1438 = vld [vmem:[%s1433 + $0x10] sm:$0xf]
        %v1439 = vld [vmem:[%s1433 + $0x14] sm:$0xf]
        %v1440 = vld [vmem:[%s1433 + $0x18] sm:$0xf]
        %v1441 = vld [vmem:[%s1433 + $0x1c] sm:$0xf]
        %v1442 = vld [vmem:[%s1433 + $0x20] sm:$0xf]
        %v1443 = vld [vmem:[%s1433 + $0x24] sm:$0xf]
        %v1444 = vld [vmem:[%s1433 + $0x28] sm:$0xf]
        %v1445 = vld [vmem:[%s1433 + $0x2c] sm:$0xf]
        %v1446 = vld [vmem:[%s1433 + $0x30] sm:$0xf]
        %v1447 = vld [vmem:[%s1433 + $0x34] sm:$0xf]
        %v1448 = vld [vmem:[%s1433 + $0x38] sm:$0xf]
        %v1449 = vld [vmem:[%s1433 + $0x3c] sm:$0xf]
        %v1450 = vunpack.c.l.b16 %v1254
        %v1451 = vunpack.c.l.b16 %v1264
        %v1452 = vunpack.c.l.b16 %v1278
        %v1453 = vunpack.c.l.b16 %v1288
        %v1454 = vunpack.c.l.b16 %v1302
        %v1455 = vunpack.c.l.b16 %v1312
        %v1456 = vunpack.c.l.b16 %v1326
        %v1457 = vunpack.c.l.b16 %v1336
        %v1458 = vunpack.c.l.b16 %v1350
        %v1459 = vunpack.c.l.b16 %v1360
        %v1460 = vunpack.c.l.b16 %v1374
        %v1461 = vunpack.c.l.b16 %v1384
        %v1462 = vunpack.c.l.b16 %v1398
        %v1463 = vunpack.c.l.b16 %v1408
        %v1464 = vunpack.c.l.b16 %v1422
        %v1465 = vunpack.c.l.b16 %v1432
        %v1466 = vpack.c.b16 %v1451, %v1450
        %v1467 = vpack.c.b16 %v1453, %v1452
        %v1468 = vpack.c.b16 %v1455, %v1454
        %v1469 = vpack.c.b16 %v1457, %v1456
        %v1470 = vpack.c.b16 %v1459, %v1458
        %v1471 = vpack.c.b16 %v1461, %v1460
        %v1472 = vpack.c.b16 %v1463, %v1462
        %v1473 = vpack.c.b16 %v1465, %v1464
        %v1498 = vunpack.c.l.b16 %v1434
        %v1499 = vunpack.c.l.b16 %v1435
        %v1500 = vunpack.c.l.b16 %v1436
        %v1501 = vunpack.c.l.b16 %v1437
        %v1502 = vunpack.c.l.b16 %v1438
        %v1503 = vunpack.c.l.b16 %v1439
        %v1504 = vunpack.c.l.b16 %v1440
        %v1505 = vunpack.c.l.b16 %v1441
        %v1506 = vunpack.c.l.b16 %v1442
        %v1507 = vunpack.c.l.b16 %v1443
        %v1508 = vunpack.c.l.b16 %v1444
        %v1509 = vunpack.c.l.b16 %v1445
        %v1510 = vunpack.c.l.b16 %v1446
        %v1511 = vunpack.c.l.b16 %v1447
        %v1512 = vunpack.c.l.b16 %v1448
        %v1513 = vunpack.c.l.b16 %v1449
        %v1514 = vpack.c.b16 %v1499, %v1498
        %v1515 = vpack.c.b16 %v1501, %v1500
        %v1516 = vpack.c.b16 %v1503, %v1502
        %v1517 = vpack.c.b16 %v1505, %v1504
        %v1518 = vpack.c.b16 %v1507, %v1506
        %v1519 = vpack.c.b16 %v1509, %v1508
        %v1520 = vpack.c.b16 %v1511, %v1510
        %v1521 = vpack.c.b16 %v1513, %v1512
        %1530 = vmatprep.subr.bf16.mxu0 0
        %1531 = vmatpush1.bf16.msra.mxu0 %v1514
        %1532 = vmatprep.subr.bf16.mxu0 0
        %1533 = vmatpush1.bf16.msra.mxu0 %v1515
        %1534 = vmatprep.subr.bf16.mxu0 0
        %1535 = vmatpush1.bf16.msra.mxu0 %v1516
        %1536 = vmatprep.subr.bf16.mxu0 0
        %1537 = vmatpush1.bf16.msra.mxu0 %v1517
        %1538 = vmatprep.subr.bf16.mxu0 0
        %1539 = vmatpush1.bf16.msra.mxu0 %v1518
        %1540 = vmatprep.subr.bf16.mxu0 0
        %1541 = vmatpush1.bf16.msra.mxu0 %v1519
        %1542 = vmatprep.subr.bf16.mxu0 0
        %1543 = vmatpush1.bf16.msra.mxu0 %v1520
        %1544 = vmatprep.subr.bf16.mxu0 0
        %1545 = vmatpush1.bf16.msra.mxu0 %v1521
        %1546 = vmatprep.subr.bf16.mxu0 0
        %1547 = vmatpush1.bf16.msra.mxu0 0
        %1548 = vmatprep.subr.bf16.mxu0 0
        %1549 = vmatpush1.bf16.msra.mxu0 0
        %1550 = vmatprep.subr.bf16.mxu0 0
        %1551 = vmatpush1.bf16.msra.mxu0 0
        %1552 = vmatprep.subr.bf16.mxu0 0
        %1553 = vmatpush1.bf16.msra.mxu0 0
        %1554 = vmatprep.subr.bf16.mxu0 0
        %1555 = vmatpush1.bf16.msra.mxu0 0
        %1556 = vmatprep.subr.bf16.mxu0 0
        %1557 = vmatpush1.bf16.msra.mxu0 0
        %1558 = vmatprep.subr.bf16.mxu0 0
        %1559 = vmatpush1.bf16.msra.mxu0 0
        %1560 = vmatprep.subr.bf16.mxu0 0
        %1561 = vmatpush1.bf16.msra.mxu0 0
        %1562 = vmatprep.mubr.bf16.mxu0 0
        %1563 = vmatmul.mubr.bf16.gmra.mrb[0].mxu0 %v1466
        %v1564 = vpop.f32.mrb[0].mxu0
        %v1565 = vadd.f32 0.0, %v1564
        %v1566 = vpop.f32.mrb[0].mxu0
        %v1567 = vpop.f32.mrb[0].mxu0
        %v1568 = vadd.f32 0.0, %v1567
        %v1569 = vpop.f32.mrb[0].mxu0
        %1570 = vmatprep.mubr.bf16.mxu0 0
        %1571 = vmatmul.mubr.bf16.gmra.mrb[0].mxu0 %v1467
        %v1572 = vpop.f32.mrb[0].mxu0
        %v1573 = vadd.f32 0.0, %v1572
        %v1574 = vpop.f32.mrb[0].mxu0
        %v1575 = vpop.f32.mrb[0].mxu0
        %v1576 = vadd.f32 0.0, %v1575
        %v1577 = vpop.f32.mrb[0].mxu0
        %1578 = vmatprep.mubr.bf16.mxu0 0
        %1579 = vmatmul.mubr.bf16.gmra.mrb[0].mxu0 %v1468
        %v1580 = vpop.f32.mrb[0].mxu0
        %v1581 = vadd.f32 0.0, %v1580
        %v1582 = vpop.f32.mrb[0].mxu0
        %v1583 = vpop.f32.mrb[0].mxu0
        %v1584 = vadd.f32 0.0, %v1583
        %v1585 = vpop.f32.mrb[0].mxu0
        %1586 = vmatprep.mubr.bf16.mxu0 0
        %1587 = vmatmul.mubr.bf16.gmra.mrb[0].mxu0 %v1469
        %v1588 = vpop.f32.mrb[0].mxu0
        %v1589 = vadd.f32 0.0, %v1588
        %v1590 = vpop.f32.mrb[0].mxu0
        %v1591 = vpop.f32.mrb[0].mxu0
        %v1592 = vadd.f32 0.0, %v1591
        %v1593 = vpop.f32.mrb[0].mxu0
        %1594 = vmatprep.mubr.bf16.mxu0 0
        %1595 = vmatmul.mubr.bf16.gmra.mrb[0].mxu0 %v1470
        %v1596 = vpop.f32.mrb[0].mxu0
        %v1597 = vadd.f32 0.0, %v1596
        %v1598 = vpop.f32.mrb[0].mxu0
        %v1599 = vpop.f32.mrb[0].mxu0
        %v1600 = vadd.f32 0.0, %v1599
        %v1601 = vpop.f32.mrb[0].mxu0
        %1602 = vmatprep.mubr.bf16.mxu0 0
        %1603 = vmatmul.mubr.bf16.gmra.mrb[0].mxu0 %v1471
        %v1604 = vpop.f32.mrb[0].mxu0
        %v1605 = vadd.f32 0.0, %v1604
        %v1606 = vpop.f32.mrb[0].mxu0
        %v1607 = vpop.f32.mrb[0].mxu0
        %v1608 = vadd.f32 0.0, %v1607
        %v1609 = vpop.f32.mrb[0].mxu0
        %1610 = vmatprep.mubr.bf16.mxu0 0
        %1611 = vmatmul.mubr.bf16.gmra.mrb[0].mxu0 %v1472
        %v1612 = vpop.f32.mrb[0].mxu0
        %v1613 = vadd.f32 0.0, %v1612
        %v1614 = vpop.f32.mrb[0].mxu0
        %v1615 = vpop.f32.mrb[0].mxu0
        %v1616 = vadd.f32 0.0, %v1615
        %v1617 = vpop.f32.mrb[0].mxu0
        %1618 = vmatprep.mubr.bf16.mxu0 0
        %1619 = vmatmul.mubr.bf16.gmra.mrb[0].mxu0 %v1473
        %v1620 = vpop.f32.mrb[0].mxu0
        %v1621 = vadd.f32 0.0, %v1620
        %v1622 = vpop.f32.mrb[0].mxu0
        %v1623 = vpop.f32.mrb[0].mxu0
        %v1624 = vadd.f32 0.0, %v1623
        %v1625 = vpop.f32.mrb[0].mxu0
        %1626 = vdwg.mxu0
        %v1643 = vunpack.c.l.b16 %v1200
        %v1644 = vunpack.c.l.b16 %v1201
        %v1645 = vunpack.c.l.b16 %v1202
        %v1646 = vunpack.c.l.b16 %v1203
        %v1647 = vunpack.c.l.b16 %v1204
        %v1648 = vunpack.c.l.b16 %v1205
        %v1649 = vunpack.c.l.b16 %v1206
        %v1650 = vunpack.c.l.b16 %v1207
        %v1651 = vunpack.c.l.b16 %v1208
        %v1652 = vunpack.c.l.b16 %v1209
        %v1653 = vunpack.c.l.b16 %v1210
        %v1654 = vunpack.c.l.b16 %v1211
        %v1655 = vunpack.c.l.b16 %v1212
        %v1656 = vunpack.c.l.b16 %v1213
        %v1657 = vunpack.c.l.b16 %v1214
        %v1658 = vunpack.c.l.b16 %v1215
        %v1659 = vpack.c.b16 %v1644, %v1643
        %v1660 = vpack.c.b16 %v1646, %v1645
        %v1661 = vpack.c.b16 %v1648, %v1647
        %v1662 = vpack.c.b16 %v1650, %v1649
        %v1663 = vpack.c.b16 %v1652, %v1651
        %v1664 = vpack.c.b16 %v1654, %v1653
        %v1665 = vpack.c.b16 %v1656, %v1655
        %v1666 = vpack.c.b16 %v1658, %v1657
        %v1691 = vunpack.c.l.b16 %v1217
        %v1692 = vunpack.c.l.b16 %v1218
        %v1693 = vunpack.c.l.b16 %v1219
        %v1694 = vunpack.c.l.b16 %v1220
        %v1695 = vunpack.c.l.b16 %v1221
        %v1696 = vunpack.c.l.b16 %v1222
        %v1697 = vunpack.c.l.b16 %v1223
        %v1698 = vunpack.c.l.b16 %v1224
        %v1699 = vunpack.c.l.b16 %v1225
        %v1700 = vunpack.c.l.b16 %v1226
        %v1701 = vunpack.c.l.b16 %v1227
        %v1702 = vunpack.c.l.b16 %v1228
        %v1703 = vunpack.c.l.b16 %v1229
        %v1704 = vunpack.c.l.b16 %v1230
        %v1705 = vunpack.c.l.b16 %v1231
        %v1706 = vunpack.c.l.b16 %v1232
        %v1707 = vpack.c.b16 %v1692, %v1691
        %v1708 = vpack.c.b16 %v1694, %v1693
        %v1709 = vpack.c.b16 %v1696, %v1695
        %v1710 = vpack.c.b16 %v1698, %v1697
        %v1711 = vpack.c.b16 %v1700, %v1699
        %v1712 = vpack.c.b16 %v1702, %v1701
        %v1713 = vpack.c.b16 %v1704, %v1703
        %v1714 = vpack.c.b16 %v1706, %v1705
        %1723 = vmatprep.subr.bf16.mxu0 0
        %1724 = vmatpush1.bf16.msra.mxu0 %v1707
        %1725 = vmatprep.subr.bf16.mxu0 0
        %1726 = vmatpush1.bf16.msra.mxu0 %v1708
        %1727 = vmatprep.subr.bf16.mxu0 0
        %1728 = vmatpush1.bf16.msra.mxu0 %v1709
        %1729 = vmatprep.subr.bf16.mxu0 0
        %1730 = vmatpush1.bf16.msra.mxu0 %v1710
        %1731 = vmatprep.subr.bf16.mxu0 0
        %1732 = vmatpush1.bf16.msra.mxu0 %v1711
        %1733 = vmatprep.subr.bf16.mxu0 0
        %1734 = vmatpush1.bf16.msra.mxu0 %v1712
        %1735 = vmatprep.subr.bf16.mxu0 0
        %1736 = vmatpush1.bf16.msra.mxu0 %v1713
        %1737 = vmatprep.subr.bf16.mxu0 0
        %1738 = vmatpush1.bf16.msra.mxu0 %v1714
        %1739 = vmatprep.subr.bf16.mxu0 0
        %1740 = vmatpush1.bf16.msra.mxu0 0
        %1741 = vmatprep.subr.bf16.mxu0 0
        %1742 = vmatpush1.bf16.msra.mxu0 0
        %1743 = vmatprep.subr.bf16.mxu0 0
        %1744 = vmatpush1.bf16.msra.mxu0 0
        %1745 = vmatprep.subr.bf16.mxu0 0
        %1746 = vmatpush1.bf16.msra.mxu0 0
        %1747 = vmatprep.subr.bf16.mxu0 0
        %1748 = vmatpush1.bf16.msra.mxu0 0
        %1749 = vmatprep.subr.bf16.mxu0 0
        %1750 = vmatpush1.bf16.msra.mxu0 0
        %1751 = vmatprep.subr.bf16.mxu0 0
        %1752 = vmatpush1.bf16.msra.mxu0 0
        %1753 = vmatprep.subr.bf16.mxu0 0
        %1754 = vmatpush1.bf16.msra.mxu0 0
        %1755 = vmatprep.mubr.bf16.mxu0 0
        %1756 = vmatmul.mubr.bf16.gmra.mrb[0].mxu0 %v1659
        %v1757 = vpop.f32.mrb[0].mxu0
        %v1758 = vadd.f32 %v1565, %v1757
        %v1759 = vpop.f32.mrb[0].mxu0
        %v1760 = vpop.f32.mrb[0].mxu0
        %v1761 = vadd.f32 %v1568, %v1760
        %v1762 = vpop.f32.mrb[0].mxu0
        %1763 = vmatprep.mubr.bf16.mxu0 0
        %1764 = vmatmul.mubr.bf16.gmra.mrb[0].mxu0 %v1660
        %v1765 = vpop.f32.mrb[0].mxu0
        %v1766 = vadd.f32 %v1573, %v1765
        %v1767 = vpop.f32.mrb[0].mxu0
        %v1768 = vpop.f32.mrb[0].mxu0
        %v1769 = vadd.f32 %v1576, %v1768
        %v1770 = vpop.f32.mrb[0].mxu0
        %1771 = vmatprep.mubr.bf16.mxu0 0
        %1772 = vmatmul.mubr.bf16.gmra.mrb[0].mxu0 %v1661
        %v1773 = vpop.f32.mrb[0].mxu0
        %v1774 = vadd.f32 %v1581, %v1773
        %v1775 = vpop.f32.mrb[0].mxu0
        %v1776 = vpop.f32.mrb[0].mxu0
        %v1777 = vadd.f32 %v1584, %v1776
        %v1778 = vpop.f32.mrb[0].mxu0
        %1779 = vmatprep.mubr.bf16.mxu0 0
        %1780 = vmatmul.mubr.bf16.gmra.mrb[0].mxu0 %v1662
        %v1781 = vpop.f32.mrb[0].mxu0
        %v1782 = vadd.f32 %v1589, %v1781
        %v1783 = vpop.f32.mrb[0].mxu0
        %v1784 = vpop.f32.mrb[0].mxu0
        %v1785 = vadd.f32 %v1592, %v1784
        %v1786 = vpop.f32.mrb[0].mxu0
        %1787 = vmatprep.mubr.bf16.mxu0 0
        %1788 = vmatmul.mubr.bf16.gmra.mrb[0].mxu0 %v1663
        %v1789 = vpop.f32.mrb[0].mxu0
        %v1790 = vadd.f32 %v1597, %v1789
        %v1791 = vpop.f32.mrb[0].mxu0
        %v1792 = vpop.f32.mrb[0].mxu0
        %v1793 = vadd.f32 %v1600, %v1792
        %v1794 = vpop.f32.mrb[0].mxu0
        %1795 = vmatprep.mubr.bf16.mxu0 0
        %1796 = vmatmul.mubr.bf16.gmra.mrb[0].mxu0 %v1664
        %v1797 = vpop.f32.mrb[0].mxu0
        %v1798 = vadd.f32 %v1605, %v1797
        %v1799 = vpop.f32.mrb[0].mxu0
        %v1800 = vpop.f32.mrb[0].mxu0
        %v1801 = vadd.f32 %v1608, %v1800
        %v1802 = vpop.f32.mrb[0].mxu0
        %1803 = vmatprep.mubr.bf16.mxu0 0
        %1804 = vmatmul.mubr.bf16.gmra.mrb[0].mxu0 %v1665
        %v1805 = vpop.f32.mrb[0].mxu0
        %v1806 = vadd.f32 %v1613, %v1805
        %v1807 = vpop.f32.mrb[0].mxu0
        %v1808 = vpop.f32.mrb[0].mxu0
        %v1809 = vadd.f32 %v1616, %v1808
        %v1810 = vpop.f32.mrb[0].mxu0
        %1811 = vmatprep.mubr.bf16.mxu0 0
        %1812 = vmatmul.mubr.bf16.gmra.mrb[0].mxu0 %v1666
        %v1813 = vpop.f32.mrb[0].mxu0
        %v1814 = vadd.f32 %v1621, %v1813
        %v1815 = vpop.f32.mrb[0].mxu0
        %v1816 = vpop.f32.mrb[0].mxu0
        %v1817 = vadd.f32 %v1624, %v1816
        %v1818 = vpop.f32.mrb[0].mxu0
        %1819 = vdwg.mxu0
        %v1820 = vld [vmem:[%s1199] sm:$0xe]
        %v1821 = vld [vmem:[%s1199 + $0xc] sm:$0xe]
        %v1822 = vld [vmem:[%s1199 + $0x18] sm:$0xe]
        %v1823 = vld [vmem:[%s1199 + $0x24] sm:$0xe]
        %v1824 = vld [vmem:[%s1199 + $0x30] sm:$0xe]
        %v1825 = vld [vmem:[%s1199 + $0x3c] sm:$0xe]
        %v1826 = vld [vmem:[%s1199 + $0x48] sm:$0xe]
        %v1827 = vld [vmem:[%s1199 + $0x54] sm:$0xe]
        %v1844 = vrot.slane %v1820, 5
        %v1845 = vrot.slane %v1844, 4
        %v1846 = vrot.slane %v1201, 5
        %v1847 = vsel %vm900, %v1845, %v1846
        %v1848 = vrot.slane %v1846, 4
        %v1849 = vrot.slane %v1233, 5
        %v1850 = vsel %vm900, %v1848, %v1849
        %v1851 = vrot.slane %v1821, 5
        %v1852 = vrot.slane %v1851, 4
        %v1853 = vrot.slane %v1203, 5
        %v1854 = vsel %vm900, %v1852, %v1853
        %v1855 = vrot.slane %v1853, 4
        %v1856 = vrot.slane %v1234, 5
        %v1857 = vsel %vm900, %v1855, %v1856
        %v1858 = vrot.slane %v1822, 5
        %v1859 = vrot.slane %v1858, 4
        %v1860 = vrot.slane %v1205, 5
        %v1861 = vsel %vm900, %v1859, %v1860
        %v1862 = vrot.slane %v1860, 4
        %v1863 = vrot.slane %v1235, 5
        %v1864 = vsel %vm900, %v1862, %v1863
        %v1865 = vrot.slane %v1823, 5
        %v1866 = vrot.slane %v1865, 4
        %v1867 = vrot.slane %v1207, 5
        %v1868 = vsel %vm900, %v1866, %v1867
        %v1869 = vrot.slane %v1867, 4
        %v1870 = vrot.slane %v1236, 5
        %v1871 = vsel %vm900, %v1869, %v1870
        %v1872 = vrot.slane %v1824, 5
        %v1873 = vrot.slane %v1872, 4
        %v1874 = vrot.slane %v1209, 5
        %v1875 = vsel %vm900, %v1873, %v1874
        %v1876 = vrot.slane %v1874, 4
        %v1877 = vrot.slane %v1237, 5
        %v1878 = vsel %vm900, %v1876, %v1877
        %v1879 = vrot.slane %v1825, 5
        %v1880 = vrot.slane %v1879, 4
        %v1881 = vrot.slane %v1211, 5
        %v1882 = vsel %vm900, %v1880, %v1881
        %v1883 = vrot.slane %v1881, 4
        %v1884 = vrot.slane %v1238, 5
        %v1885 = vsel %vm900, %v1883, %v1884
        %v1886 = vrot.slane %v1826, 5
        %v1887 = vrot.slane %v1886, 4
        %v1888 = vrot.slane %v1213, 5
        %v1889 = vsel %vm900, %v1887, %v1888
        %v1890 = vrot.slane %v1888, 4
        %v1891 = vrot.slane %v1239, 5
        %v1892 = vsel %vm900, %v1890, %v1891
        %v1893 = vrot.slane %v1827, 5
        %v1894 = vrot.slane %v1893, 4
        %v1895 = vrot.slane %v1215, 5
        %v1896 = vsel %vm900, %v1894, %v1895
        %v1897 = vrot.slane %v1895, 4
        %v1898 = vrot.slane %v1240, 5
        %v1899 = vsel %vm900, %v1897, %v1898
        %s1900 = scalar_lea.vmem %s1, 320
        %v1901 = vld [vmem:[%s1900] sm:$0xf]
        %v1902 = vld [vmem:[%s1900 + $0x4] sm:$0xf]
        %v1903 = vld [vmem:[%s1900 + $0x8] sm:$0xf]
        %v1904 = vld [vmem:[%s1900 + $0xc] sm:$0xf]
        %v1905 = vld [vmem:[%s1900 + $0x10] sm:$0xf]
        %v1906 = vld [vmem:[%s1900 + $0x14] sm:$0xf]
        %v1907 = vld [vmem:[%s1900 + $0x18] sm:$0xf]
        %v1908 = vld [vmem:[%s1900 + $0x1c] sm:$0xf]
        %v1909 = vld [vmem:[%s1900 + $0x20] sm:$0xf]
        %v1910 = vld [vmem:[%s1900 + $0x24] sm:$0xf]
        %v1911 = vld [vmem:[%s1900 + $0x28] sm:$0xf]
        %v1912 = vld [vmem:[%s1900 + $0x2c] sm:$0xf]
        %v1913 = vld [vmem:[%s1900 + $0x30] sm:$0xf]
        %v1914 = vld [vmem:[%s1900 + $0x34] sm:$0xf]
        %v1915 = vld [vmem:[%s1900 + $0x38] sm:$0xf]
        %v1916 = vld [vmem:[%s1900 + $0x3c] sm:$0xf]
        %v1917 = vunpack.c.l.b16 %v1847
        %v1918 = vunpack.c.l.b16 %v1850
        %v1919 = vunpack.c.l.b16 %v1854
        %v1920 = vunpack.c.l.b16 %v1857
        %v1921 = vunpack.c.l.b16 %v1861
        %v1922 = vunpack.c.l.b16 %v1864
        %v1923 = vunpack.c.l.b16 %v1868
        %v1924 = vunpack.c.l.b16 %v1871
        %v1925 = vunpack.c.l.b16 %v1875
        %v1926 = vunpack.c.l.b16 %v1878
        %v1927 = vunpack.c.l.b16 %v1882
        %v1928 = vunpack.c.l.b16 %v1885
        %v1929 = vunpack.c.l.b16 %v1889
        %v1930 = vunpack.c.l.b16 %v1892
        %v1931 = vunpack.c.l.b16 %v1896
        %v1932 = vunpack.c.l.b16 %v1899
        %v1933 = vpack.c.b16 %v1918, %v1917
        %v1934 = vpack.c.b16 %v1920, %v1919
        %v1935 = vpack.c.b16 %v1922, %v1921
        %v1936 = vpack.c.b16 %v1924, %v1923
        %v1937 = vpack.c.b16 %v1926, %v1925
        %v1938 = vpack.c.b16 %v1928, %v1927
        %v1939 = vpack.c.b16 %v1930, %v1929
        %v1940 = vpack.c.b16 %v1932, %v1931
        %v1965 = vunpack.c.l.b16 %v1901
        %v1966 = vunpack.c.l.b16 %v1902
        %v1967 = vunpack.c.l.b16 %v1903
        %v1968 = vunpack.c.l.b16 %v1904
        %v1969 = vunpack.c.l.b16 %v1905
        %v1970 = vunpack.c.l.b16 %v1906
        %v1971 = vunpack.c.l.b16 %v1907
        %v1972 = vunpack.c.l.b16 %v1908
        %v1973 = vunpack.c.l.b16 %v1909
        %v1974 = vunpack.c.l.b16 %v1910
        %v1975 = vunpack.c.l.b16 %v1911
        %v1976 = vunpack.c.l.b16 %v1912
        %v1977 = vunpack.c.l.b16 %v1913
        %v1978 = vunpack.c.l.b16 %v1914
        %v1979 = vunpack.c.l.b16 %v1915
        %v1980 = vunpack.c.l.b16 %v1916
        %v1981 = vpack.c.b16 %v1966, %v1965
        %v1982 = vpack.c.b16 %v1968, %v1967
        %v1983 = vpack.c.b16 %v1970, %v1969
        %v1984 = vpack.c.b16 %v1972, %v1971
        %v1985 = vpack.c.b16 %v1974, %v1973
        %v1986 = vpack.c.b16 %v1976, %v1975
        %v1987 = vpack.c.b16 %v1978, %v1977
        %v1988 = vpack.c.b16 %v1980, %v1979
        %1997 = vmatprep.subr.bf16.mxu0 0
        %1998 = vmatpush1.bf16.msra.mxu0 %v1981
        %1999 = vmatprep.subr.bf16.mxu0 0
        %2000 = vmatpush1.bf16.msra.mxu0 %v1982
        %2001 = vmatprep.subr.bf16.mxu0 0
        %2002 = vmatpush1.bf16.msra.mxu0 %v1983
        %2003 = vmatprep.subr.bf16.mxu0 0
        %2004 = vmatpush1.bf16.msra.mxu0 %v1984
        %2005 = vmatprep.subr.bf16.mxu0 0
        %2006 = vmatpush1.bf16.msra.mxu0 %v1985
        %2007 = vmatprep.subr.bf16.mxu0 0
        %2008 = vmatpush1.bf16.msra.mxu0 %v1986
        %2009 = vmatprep.subr.bf16.mxu0 0
        %2010 = vmatpush1.bf16.msra.mxu0 %v1987
        %2011 = vmatprep.subr.bf16.mxu0 0
        %2012 = vmatpush1.bf16.msra.mxu0 %v1988
        %2013 = vmatprep.subr.bf16.mxu0 0
        %2014 = vmatpush1.bf16.msra.mxu0 0
        %2015 = vmatprep.subr.bf16.mxu0 0
        %2016 = vmatpush1.bf16.msra.mxu0 0
        %2017 = vmatprep.subr.bf16.mxu0 0
        %2018 = vmatpush1.bf16.msra.mxu0 0
        %2019 = vmatprep.subr.bf16.mxu0 0
        %2020 = vmatpush1.bf16.msra.mxu0 0
        %2021 = vmatprep.subr.bf16.mxu0 0
        %2022 = vmatpush1.bf16.msra.mxu0 0
        %2023 = vmatprep.subr.bf16.mxu0 0
        %2024 = vmatpush1.bf16.msra.mxu0 0
        %2025 = vmatprep.subr.bf16.mxu0 0
        %2026 = vmatpush1.bf16.msra.mxu0 0
        %2027 = vmatprep.subr.bf16.mxu0 0
        %2028 = vmatpush1.bf16.msra.mxu0 0
        %2029 = vmatprep.mubr.bf16.mxu0 0
        %2030 = vmatmul.mubr.bf16.gmra.mrb[0].mxu0 %v1933
        %v2031 = vpop.f32.mrb[0].mxu0
        %v2032 = vadd.f32 0.0, %v2031
        %v2033 = vpop.f32.mrb[0].mxu0
        %v2034 = vpop.f32.mrb[0].mxu0
        %v2035 = vadd.f32 0.0, %v2034
        %v2036 = vpop.f32.mrb[0].mxu0
        %2037 = vmatprep.mubr.bf16.mxu0 0
        %2038 = vmatmul.mubr.bf16.gmra.mrb[0].mxu0 %v1934
        %v2039 = vpop.f32.mrb[0].mxu0
        %v2040 = vadd.f32 0.0, %v2039
        %v2041 = vpop.f32.mrb[0].mxu0
        %v2042 = vpop.f32.mrb[0].mxu0
        %v2043 = vadd.f32 0.0, %v2042
        %v2044 = vpop.f32.mrb[0].mxu0
        %2045 = vmatprep.mubr.bf16.mxu0 0
        %2046 = vmatmul.mubr.bf16.gmra.mrb[0].mxu0 %v1935
        %v2047 = vpop.f32.mrb[0].mxu0
        %v2048 = vadd.f32 0.0, %v2047
        %v2049 = vpop.f32.mrb[0].mxu0
        %v2050 = vpop.f32.mrb[0].mxu0
        %v2051 = vadd.f32 0.0, %v2050
        %v2052 = vpop.f32.mrb[0].mxu0
        %2053 = vmatprep.mubr.bf16.mxu0 0
        %2054 = vmatmul.mubr.bf16.gmra.mrb[0].mxu0 %v1936
        %v2055 = vpop.f32.mrb[0].mxu0
        %v2056 = vadd.f32 0.0, %v2055
        %v2057 = vpop.f32.mrb[0].mxu0
        %v2058 = vpop.f32.mrb[0].mxu0
        %v2059 = vadd.f32 0.0, %v2058
        %v2060 = vpop.f32.mrb[0].mxu0
        %2061 = vmatprep.mubr.bf16.mxu0 0
        %2062 = vmatmul.mubr.bf16.gmra.mrb[0].mxu0 %v1937
        %v2063 = vpop.f32.mrb[0].mxu0
        %v2064 = vadd.f32 0.0, %v2063
        %v2065 = vpop.f32.mrb[0].mxu0
        %v2066 = vpop.f32.mrb[0].mxu0
        %v2067 = vadd.f32 0.0, %v2066
        %v2068 = vpop.f32.mrb[0].mxu0
        %2069 = vmatprep.mubr.bf16.mxu0 0
        %2070 = vmatmul.mubr.bf16.gmra.mrb[0].mxu0 %v1938
        %v2071 = vpop.f32.mrb[0].mxu0
        %v2072 = vadd.f32 0.0, %v2071
        %v2073 = vpop.f32.mrb[0].mxu0
        %v2074 = vpop.f32.mrb[0].mxu0
        %v2075 = vadd.f32 0.0, %v2074
        %v2076 = vpop.f32.mrb[0].mxu0
        %2077 = vmatprep.mubr.bf16.mxu0 0
        %2078 = vmatmul.mubr.bf16.gmra.mrb[0].mxu0 %v1939
        %v2079 = vpop.f32.mrb[0].mxu0
        %v2080 = vadd.f32 0.0, %v2079
        %v2081 = vpop.f32.mrb[0].mxu0
        %v2082 = vpop.f32.mrb[0].mxu0
        %v2083 = vadd.f32 0.0, %v2082
        %v2084 = vpop.f32.mrb[0].mxu0
        %2085 = vmatprep.mubr.bf16.mxu0 0
        %2086 = vmatmul.mubr.bf16.gmra.mrb[0].mxu0 %v1940
        %v2087 = vpop.f32.mrb[0].mxu0
        %v2088 = vadd.f32 0.0, %v2087
        %v2089 = vpop.f32.mrb[0].mxu0
        %v2090 = vpop.f32.mrb[0].mxu0
        %v2091 = vadd.f32 0.0, %v2090
        %v2092 = vpop.f32.mrb[0].mxu0
        %2093 = vdwg.mxu0
        %v2094 = vadd.f32 %v1758, %v2032
        %v2095 = vadd.f32 %v1761, %v2035
        %v2096 = vadd.f32 %v1766, %v2040
        %v2097 = vadd.f32 %v1769, %v2043
        %v2098 = vadd.f32 %v1774, %v2048
        %v2099 = vadd.f32 %v1777, %v2051
        %v2100 = vadd.f32 %v1782, %v2056
        %v2101 = vadd.f32 %v1785, %v2059
        %v2102 = vadd.f32 %v1790, %v2064
        %v2103 = vadd.f32 %v1793, %v2067
        %v2104 = vadd.f32 %v1798, %v2072
        %v2105 = vadd.f32 %v1801, %v2075
        %v2106 = vadd.f32 %v1806, %v2080
        %v2107 = vadd.f32 %v1809, %v2083
        %v2108 = vadd.f32 %v1814, %v2088
        %v2109 = vadd.f32 %v1817, %v2091
        %v2110 = vadd.f32 %v1183, %v2094
        %v2111 = vadd.f32 %v1184, %v2095
        %v2112 = vadd.f32 %v1185, %v2096
        %v2113 = vadd.f32 %v1186, %v2097
        %v2114 = vadd.f32 %v1187, %v2098
        %v2115 = vadd.f32 %v1188, %v2099
        %v2116 = vadd.f32 %v1189, %v2100
        %v2117 = vadd.f32 %v1190, %v2101
        %v2118 = vadd.f32 %v1191, %v2102
        %v2119 = vadd.f32 %v1192, %v2103
        %v2120 = vadd.f32 %v1193, %v2104
        %v2121 = vadd.f32 %v1194, %v2105
        %v2122 = vadd.f32 %v1195, %v2106
        %v2123 = vadd.f32 %v1196, %v2107
        %v2124 = vadd.f32 %v1197, %v2108
        %v2125 = vadd.f32 %v1198, %v2109
        %2126 = vst [vmem:[#allocation2] sm:$0xff] %v2110
        %2127 = vst [vmem:[#allocation2 + $0x8] sm:$0xff] %v2111
        %2128 = vst [vmem:[#allocation2 + $0x10] sm:$0xff] %v2112
        %2129 = vst [vmem:[#allocation2 + $0x18] sm:$0xff] %v2113
        %2130 = vst [vmem:[#allocation2 + $0x20] sm:$0xff] %v2114
        %2131 = vst [vmem:[#allocation2 + $0x28] sm:$0xff] %v2115
        %2132 = vst [vmem:[#allocation2 + $0x30] sm:$0xff] %v2116
        %2133 = vst [vmem:[#allocation2 + $0x38] sm:$0xff] %v2117
        %2134 = vst [vmem:[#allocation2 + $0x40] sm:$0xff] %v2118
        %2135 = vst [vmem:[#allocation2 + $0x48] sm:$0xff] %v2119
        %2136 = vst [vmem:[#allocation2 + $0x50] sm:$0xff] %v2120
        %2137 = vst [vmem:[#allocation2 + $0x58] sm:$0xff] %v2121
        %2138 = vst [vmem:[#allocation2 + $0x60] sm:$0xff] %v2122
        %2139 = vst [vmem:[#allocation2 + $0x68] sm:$0xff] %v2123
        %2140 = vst [vmem:[#allocation2 + $0x70] sm:$0xff] %v2124
        %2141 = vst [vmem:[#allocation2 + $0x78] sm:$0xff] %v2125
        %v2142 = vld [vmem:[#allocation2] sm:$0xff]
        %v2143 = vld [vmem:[#allocation2 + $0x8] sm:$0xff]
        %v2144 = vld [vmem:[#allocation2 + $0x10] sm:$0xff]
        %v2145 = vld [vmem:[#allocation2 + $0x18] sm:$0xff]
        %v2146 = vld [vmem:[#allocation2 + $0x20] sm:$0xff]
        %v2147 = vld [vmem:[#allocation2 + $0x28] sm:$0xff]
        %v2148 = vld [vmem:[#allocation2 + $0x30] sm:$0xff]
        %v2149 = vld [vmem:[#allocation2 + $0x38] sm:$0xff]
        %v2150 = vld [vmem:[#allocation2 + $0x40] sm:$0xff]
        %v2151 = vld [vmem:[#allocation2 + $0x48] sm:$0xff]
        %v2152 = vld [vmem:[#allocation2 + $0x50] sm:$0xff]
        %v2153 = vld [vmem:[#allocation2 + $0x58] sm:$0xff]
        %v2154 = vld [vmem:[#allocation2 + $0x60] sm:$0xff]
        %v2155 = vld [vmem:[#allocation2 + $0x68] sm:$0xff]
        %v2156 = vld [vmem:[#allocation2 + $0x70] sm:$0xff]
        %v2157 = vld [vmem:[#allocation2 + $0x78] sm:$0xff]
        %s2158 = scalar_lea.vmem %s250, 24
        %v2159 = vld [vmem:[%s2158] sm:$0xf]
        %v2160 = vld [vmem:[%s2158 + $0x4] sm:$0xf]
        %v2161 = vld [vmem:[%s2158 + $0xc] sm:$0xf]
        %v2162 = vld [vmem:[%s2158 + $0x10] sm:$0xf]
        %v2163 = vld [vmem:[%s2158 + $0x18] sm:$0xf]
        %v2164 = vld [vmem:[%s2158 + $0x1c] sm:$0xf]
        %v2165 = vld [vmem:[%s2158 + $0x24] sm:$0xf]
        %v2166 = vld [vmem:[%s2158 + $0x28] sm:$0xf]
        %v2167 = vld [vmem:[%s2158 + $0x30] sm:$0xf]
        %v2168 = vld [vmem:[%s2158 + $0x34] sm:$0xf]
        %v2169 = vld [vmem:[%s2158 + $0x3c] sm:$0xf]
        %v2170 = vld [vmem:[%s2158 + $0x40] sm:$0xf]
        %v2171 = vld [vmem:[%s2158 + $0x48] sm:$0xf]
        %v2172 = vld [vmem:[%s2158 + $0x4c] sm:$0xf]
        %v2173 = vld [vmem:[%s2158 + $0x54] sm:$0xf]
        %v2174 = vld [vmem:[%s2158 + $0x58] sm:$0xf]
        %s2175 = scalar_lea.vmem %s1, 384
        %v2176 = vld [vmem:[%s2175] sm:$0xf]
        %v2177 = vld [vmem:[%s2175 + $0x4] sm:$0xf]
        %v2178 = vld [vmem:[%s2175 + $0x8] sm:$0xf]
        %v2179 = vld [vmem:[%s2175 + $0xc] sm:$0xf]
        %v2180 = vld [vmem:[%s2175 + $0x10] sm:$0xf]
        %v2181 = vld [vmem:[%s2175 + $0x14] sm:$0xf]
        %v2182 = vld [vmem:[%s2175 + $0x18] sm:$0xf]
        %v2183 = vld [vmem:[%s2175 + $0x1c] sm:$0xf]
        %v2184 = vld [vmem:[%s2175 + $0x20] sm:$0xf]
        %v2185 = vld [vmem:[%s2175 + $0x24] sm:$0xf]
        %v2186 = vld [vmem:[%s2175 + $0x28] sm:$0xf]
        %v2187 = vld [vmem:[%s2175 + $0x2c] sm:$0xf]
        %v2188 = vld [vmem:[%s2175 + $0x30] sm:$0xf]
        %v2189 = vld [vmem:[%s2175 + $0x34] sm:$0xf]
        %v2190 = vld [vmem:[%s2175 + $0x38] sm:$0xf]
        %v2191 = vld [vmem:[%s2175 + $0x3c] sm:$0xf]
        %v2192 = vld [vmem:[%s2158 + $0x8] sm:$0x1]
        %v2193 = vld [vmem:[%s2158 + $0x14] sm:$0x1]
        %v2194 = vld [vmem:[%s2158 + $0x20] sm:$0x1]
        %v2195 = vld [vmem:[%s2158 + $0x2c] sm:$0x1]
        %v2196 = vld [vmem:[%s2158 + $0x38] sm:$0x1]
        %v2197 = vld [vmem:[%s2158 + $0x44] sm:$0x1]
        %v2198 = vld [vmem:[%s2158 + $0x50] sm:$0x1]
        %v2199 = vld [vmem:[%s2158 + $0x5c] sm:$0x1]
        %v2201 = vshrl.u32 %v2159, 16
        %v2203 = vrot.slane %v2201, 4
        %v2204 = vshll.u32 %v2159, 16
        %v2206 = vrot.slane %v2204, 5
        %v2207 = vor.u32 %v2203, %v2206
        %v2208 = vrot.slane %v2207, 4
        %v2210 = vshll.u32 %v2160, 16
        %v2212 = vrot.slane %v2210, 5
        %v2213 = vsel %vm294, %v2208, %v2212
        %v2214 = vshrl.u32 %v2160, 16
        %v2216 = vrot.slane %v2214, 4
        %v2217 = vor.u32 %v2216, %v2212
        %v2218 = vrot.slane %v2217, 4
        %v2220 = vshll.u32 %v2192, 16
        %v2222 = vrot.slane %v2220, 5
        %v2223 = vsel %vm294, %v2218, %v2222
        %v2225 = vshrl.u32 %v2161, 16
        %v2227 = vrot.slane %v2225, 4
        %v2228 = vshll.u32 %v2161, 16
        %v2230 = vrot.slane %v2228, 5
        %v2231 = vor.u32 %v2227, %v2230
        %v2232 = vrot.slane %v2231, 4
        %v2234 = vshll.u32 %v2162, 16
        %v2236 = vrot.slane %v2234, 5
        %v2237 = vsel %vm294, %v2232, %v2236
        %v2238 = vshrl.u32 %v2162, 16
        %v2240 = vrot.slane %v2238, 4
        %v2241 = vor.u32 %v2240, %v2236
        %v2242 = vrot.slane %v2241, 4
        %v2244 = vshll.u32 %v2193, 16
        %v2246 = vrot.slane %v2244, 5
        %v2247 = vsel %vm294, %v2242, %v2246
        %v2249 = vshrl.u32 %v2163, 16
        %v2251 = vrot.slane %v2249, 4
        %v2252 = vshll.u32 %v2163, 16
        %v2254 = vrot.slane %v2252, 5
        %v2255 = vor.u32 %v2251, %v2254
        %v2256 = vrot.slane %v2255, 4
        %v2258 = vshll.u32 %v2164, 16
        %v2260 = vrot.slane %v2258, 5
        %v2261 = vsel %vm294, %v2256, %v2260
        %v2262 = vshrl.u32 %v2164, 16
        %v2264 = vrot.slane %v2262, 4
        %v2265 = vor.u32 %v2264, %v2260
        %v2266 = vrot.slane %v2265, 4
        %v2268 = vshll.u32 %v2194, 16
        %v2270 = vrot.slane %v2268, 5
        %v2271 = vsel %vm294, %v2266, %v2270
        %v2273 = vshrl.u32 %v2165, 16
        %v2275 = vrot.slane %v2273, 4
        %v2276 = vshll.u32 %v2165, 16
        %v2278 = vrot.slane %v2276, 5
        %v2279 = vor.u32 %v2275, %v2278
        %v2280 = vrot.slane %v2279, 4
        %v2282 = vshll.u32 %v2166, 16
        %v2284 = vrot.slane %v2282, 5
        %v2285 = vsel %vm294, %v2280, %v2284
        %v2286 = vshrl.u32 %v2166, 16
        %v2288 = vrot.slane %v2286, 4
        %v2289 = vor.u32 %v2288, %v2284
        %v2290 = vrot.slane %v2289, 4
        %v2292 = vshll.u32 %v2195, 16
        %v2294 = vrot.slane %v2292, 5
        %v2295 = vsel %vm294, %v2290, %v2294
        %v2297 = vshrl.u32 %v2167, 16
        %v2299 = vrot.slane %v2297, 4
        %v2300 = vshll.u32 %v2167, 16
        %v2302 = vrot.slane %v2300, 5
        %v2303 = vor.u32 %v2299, %v2302
        %v2304 = vrot.slane %v2303, 4
        %v2306 = vshll.u32 %v2168, 16
        %v2308 = vrot.slane %v2306, 5
        %v2309 = vsel %vm294, %v2304, %v2308
        %v2310 = vshrl.u32 %v2168, 16
        %v2312 = vrot.slane %v2310, 4
        %v2313 = vor.u32 %v2312, %v2308
        %v2314 = vrot.slane %v2313, 4
        %v2316 = vshll.u32 %v2196, 16
        %v2318 = vrot.slane %v2316, 5
        %v2319 = vsel %vm294, %v2314, %v2318
        %v2321 = vshrl.u32 %v2169, 16
        %v2323 = vrot.slane %v2321, 4
        %v2324 = vshll.u32 %v2169, 16
        %v2326 = vrot.slane %v2324, 5
        %v2327 = vor.u32 %v2323, %v2326
        %v2328 = vrot.slane %v2327, 4
        %v2330 = vshll.u32 %v2170, 16
        %v2332 = vrot.slane %v2330, 5
        %v2333 = vsel %vm294, %v2328, %v2332
        %v2334 = vshrl.u32 %v2170, 16
        %v2336 = vrot.slane %v2334, 4
        %v2337 = vor.u32 %v2336, %v2332
        %v2338 = vrot.slane %v2337, 4
        %v2340 = vshll.u32 %v2197, 16
        %v2342 = vrot.slane %v2340, 5
        %v2343 = vsel %vm294, %v2338, %v2342
        %v2345 = vshrl.u32 %v2171, 16
        %v2347 = vrot.slane %v2345, 4
        %v2348 = vshll.u32 %v2171, 16
        %v2350 = vrot.slane %v2348, 5
        %v2351 = vor.u32 %v2347, %v2350
        %v2352 = vrot.slane %v2351, 4
        %v2354 = vshll.u32 %v2172, 16
        %v2356 = vrot.slane %v2354, 5
        %v2357 = vsel %vm294, %v2352, %v2356
        %v2358 = vshrl.u32 %v2172, 16
        %v2360 = vrot.slane %v2358, 4
        %v2361 = vor.u32 %v2360, %v2356
        %v2362 = vrot.slane %v2361, 4
        %v2364 = vshll.u32 %v2198, 16
        %v2366 = vrot.slane %v2364, 5
        %v2367 = vsel %vm294, %v2362, %v2366
        %v2369 = vshrl.u32 %v2173, 16
        %v2371 = vrot.slane %v2369, 4
        %v2372 = vshll.u32 %v2173, 16
        %v2374 = vrot.slane %v2372, 5
        %v2375 = vor.u32 %v2371, %v2374
        %v2376 = vrot.slane %v2375, 4
        %v2378 = vshll.u32 %v2174, 16
        %v2380 = vrot.slane %v2378, 5
        %v2381 = vsel %vm294, %v2376, %v2380
        %v2382 = vshrl.u32 %v2174, 16
        %v2384 = vrot.slane %v2382, 4
        %v2385 = vor.u32 %v2384, %v2380
        %v2386 = vrot.slane %v2385, 4
        %v2388 = vshll.u32 %v2199, 16
        %v2390 = vrot.slane %v2388, 5
        %v2391 = vsel %vm294, %v2386, %v2390
        %s2392 = scalar_lea.vmem %s1, 448
        %v2393 = vld [vmem:[%s2392] sm:$0xf]
        %v2394 = vld [vmem:[%s2392 + $0x4] sm:$0xf]
        %v2395 = vld [vmem:[%s2392 + $0x8] sm:$0xf]
        %v2396 = vld [vmem:[%s2392 + $0xc] sm:$0xf]
        %v2397 = vld [vmem:[%s2392 + $0x10] sm:$0xf]
        %v2398 = vld [vmem:[%s2392 + $0x14] sm:$0xf]
        %v2399 = vld [vmem:[%s2392 + $0x18] sm:$0xf]
        %v2400 = vld [vmem:[%s2392 + $0x1c] sm:$0xf]
        %v2401 = vld [vmem:[%s2392 + $0x20] sm:$0xf]
        %v2402 = vld [vmem:[%s2392 + $0x24] sm:$0xf]
        %v2403 = vld [vmem:[%s2392 + $0x28] sm:$0xf]
        %v2404 = vld [vmem:[%s2392 + $0x2c] sm:$0xf]
        %v2405 = vld [vmem:[%s2392 + $0x30] sm:$0xf]
        %v2406 = vld [vmem:[%s2392 + $0x34] sm:$0xf]
        %v2407 = vld [vmem:[%s2392 + $0x38] sm:$0xf]
        %v2408 = vld [vmem:[%s2392 + $0x3c] sm:$0xf]
        %v2409 = vunpack.c.l.b16 %v2213
        %v2410 = vunpack.c.l.b16 %v2223
        %v2411 = vunpack.c.l.b16 %v2237
        %v2412 = vunpack.c.l.b16 %v2247
        %v2413 = vunpack.c.l.b16 %v2261
        %v2414 = vunpack.c.l.b16 %v2271
        %v2415 = vunpack.c.l.b16 %v2285
        %v2416 = vunpack.c.l.b16 %v2295
        %v2417 = vunpack.c.l.b16 %v2309
        %v2418 = vunpack.c.l.b16 %v2319
        %v2419 = vunpack.c.l.b16 %v2333
        %v2420 = vunpack.c.l.b16 %v2343
        %v2421 = vunpack.c.l.b16 %v2357
        %v2422 = vunpack.c.l.b16 %v2367
        %v2423 = vunpack.c.l.b16 %v2381
        %v2424 = vunpack.c.l.b16 %v2391
        %v2425 = vpack.c.b16 %v2410, %v2409
        %v2426 = vpack.c.b16 %v2412, %v2411
        %v2427 = vpack.c.b16 %v2414, %v2413
        %v2428 = vpack.c.b16 %v2416, %v2415
        %v2429 = vpack.c.b16 %v2418, %v2417
        %v2430 = vpack.c.b16 %v2420, %v2419
        %v2431 = vpack.c.b16 %v2422, %v2421
        %v2432 = vpack.c.b16 %v2424, %v2423
        %v2457 = vunpack.c.l.b16 %v2393
        %v2458 = vunpack.c.l.b16 %v2394
        %v2459 = vunpack.c.l.b16 %v2395
        %v2460 = vunpack.c.l.b16 %v2396
        %v2461 = vunpack.c.l.b16 %v2397
        %v2462 = vunpack.c.l.b16 %v2398
        %v2463 = vunpack.c.l.b16 %v2399
        %v2464 = vunpack.c.l.b16 %v2400
        %v2465 = vunpack.c.l.b16 %v2401
        %v2466 = vunpack.c.l.b16 %v2402
        %v2467 = vunpack.c.l.b16 %v2403
        %v2468 = vunpack.c.l.b16 %v2404
        %v2469 = vunpack.c.l.b16 %v2405
        %v2470 = vunpack.c.l.b16 %v2406
        %v2471 = vunpack.c.l.b16 %v2407
        %v2472 = vunpack.c.l.b16 %v2408
        %v2473 = vpack.c.b16 %v2458, %v2457
        %v2474 = vpack.c.b16 %v2460, %v2459
        %v2475 = vpack.c.b16 %v2462, %v2461
        %v2476 = vpack.c.b16 %v2464, %v2463
        %v2477 = vpack.c.b16 %v2466, %v2465
        %v2478 = vpack.c.b16 %v2468, %v2467
        %v2479 = vpack.c.b16 %v2470, %v2469
        %v2480 = vpack.c.b16 %v2472, %v2471
        %2489 = vmatprep.subr.bf16.mxu0 0
        %2490 = vmatpush1.bf16.msra.mxu0 %v2473
        %2491 = vmatprep.subr.bf16.mxu0 0
        %2492 = vmatpush1.bf16.msra.mxu0 %v2474
        %2493 = vmatprep.subr.bf16.mxu0 0
        %2494 = vmatpush1.bf16.msra.mxu0 %v2475
        %2495 = vmatprep.subr.bf16.mxu0 0
        %2496 = vmatpush1.bf16.msra.mxu0 %v2476
        %2497 = vmatprep.subr.bf16.mxu0 0
        %2498 = vmatpush1.bf16.msra.mxu0 %v2477
        %2499 = vmatprep.subr.bf16.mxu0 0
        %2500 = vmatpush1.bf16.msra.mxu0 %v2478
        %2501 = vmatprep.subr.bf16.mxu0 0
        %2502 = vmatpush1.bf16.msra.mxu0 %v2479
        %2503 = vmatprep.subr.bf16.mxu0 0
        %2504 = vmatpush1.bf16.msra.mxu0 %v2480
        %2505 = vmatprep.subr.bf16.mxu0 0
        %2506 = vmatpush1.bf16.msra.mxu0 0
        %2507 = vmatprep.subr.bf16.mxu0 0
        %2508 = vmatpush1.bf16.msra.mxu0 0
        %2509 = vmatprep.subr.bf16.mxu0 0
        %2510 = vmatpush1.bf16.msra.mxu0 0
        %2511 = vmatprep.subr.bf16.mxu0 0
        %2512 = vmatpush1.bf16.msra.mxu0 0
        %2513 = vmatprep.subr.bf16.mxu0 0
        %2514 = vmatpush1.bf16.msra.mxu0 0
        %2515 = vmatprep.subr.bf16.mxu0 0
        %2516 = vmatpush1.bf16.msra.mxu0 0
        %2517 = vmatprep.subr.bf16.mxu0 0
        %2518 = vmatpush1.bf16.msra.mxu0 0
        %2519 = vmatprep.subr.bf16.mxu0 0
        %2520 = vmatpush1.bf16.msra.mxu0 0
        %2521 = vmatprep.mubr.bf16.mxu0 0
        %2522 = vmatmul.mubr.bf16.gmra.mrb[0].mxu0 %v2425
        %v2523 = vpop.f32.mrb[0].mxu0
        %v2524 = vadd.f32 0.0, %v2523
        %v2525 = vpop.f32.mrb[0].mxu0
        %v2526 = vpop.f32.mrb[0].mxu0
        %v2527 = vadd.f32 0.0, %v2526
        %v2528 = vpop.f32.mrb[0].mxu0
        %2529 = vmatprep.mubr.bf16.mxu0 0
        %2530 = vmatmul.mubr.bf16.gmra.mrb[0].mxu0 %v2426
        %v2531 = vpop.f32.mrb[0].mxu0
        %v2532 = vadd.f32 0.0, %v2531
        %v2533 = vpop.f32.mrb[0].mxu0
        %v2534 = vpop.f32.mrb[0].mxu0
        %v2535 = vadd.f32 0.0, %v2534
        %v2536 = vpop.f32.mrb[0].mxu0
        %2537 = vmatprep.mubr.bf16.mxu0 0
        %2538 = vmatmul.mubr.bf16.gmra.mrb[0].mxu0 %v2427
        %v2539 = vpop.f32.mrb[0].mxu0
        %v2540 = vadd.f32 0.0, %v2539
        %v2541 = vpop.f32.mrb[0].mxu0
        %v2542 = vpop.f32.mrb[0].mxu0
        %v2543 = vadd.f32 0.0, %v2542
        %v2544 = vpop.f32.mrb[0].mxu0
        %2545 = vmatprep.mubr.bf16.mxu0 0
        %2546 = vmatmul.mubr.bf16.gmra.mrb[0].mxu0 %v2428
        %v2547 = vpop.f32.mrb[0].mxu0
        %v2548 = vadd.f32 0.0, %v2547
        %v2549 = vpop.f32.mrb[0].mxu0
        %v2550 = vpop.f32.mrb[0].mxu0
        %v2551 = vadd.f32 0.0, %v2550
        %v2552 = vpop.f32.mrb[0].mxu0
        %2553 = vmatprep.mubr.bf16.mxu0 0
        %2554 = vmatmul.mubr.bf16.gmra.mrb[0].mxu0 %v2429
        %v2555 = vpop.f32.mrb[0].mxu0
        %v2556 = vadd.f32 0.0, %v2555
        %v2557 = vpop.f32.mrb[0].mxu0
        %v2558 = vpop.f32.mrb[0].mxu0
        %v2559 = vadd.f32 0.0, %v2558
        %v2560 = vpop.f32.mrb[0].mxu0
        %2561 = vmatprep.mubr.bf16.mxu0 0
        %2562 = vmatmul.mubr.bf16.gmra.mrb[0].mxu0 %v2430
        %v2563 = vpop.f32.mrb[0].mxu0
        %v2564 = vadd.f32 0.0, %v2563
        %v2565 = vpop.f32.mrb[0].mxu0
        %v2566 = vpop.f32.mrb[0].mxu0
        %v2567 = vadd.f32 0.0, %v2566
        %v2568 = vpop.f32.mrb[0].mxu0
        %2569 = vmatprep.mubr.bf16.mxu0 0
        %2570 = vmatmul.mubr.bf16.gmra.mrb[0].mxu0 %v2431
        %v2571 = vpop.f32.mrb[0].mxu0
        %v2572 = vadd.f32 0.0, %v2571
        %v2573 = vpop.f32.mrb[0].mxu0
        %v2574 = vpop.f32.mrb[0].mxu0
        %v2575 = vadd.f32 0.0, %v2574
        %v2576 = vpop.f32.mrb[0].mxu0
        %2577 = vmatprep.mubr.bf16.mxu0 0
        %2578 = vmatmul.mubr.bf16.gmra.mrb[0].mxu0 %v2432
        %v2579 = vpop.f32.mrb[0].mxu0
        %v2580 = vadd.f32 0.0, %v2579
        %v2581 = vpop.f32.mrb[0].mxu0
        %v2582 = vpop.f32.mrb[0].mxu0
        %v2583 = vadd.f32 0.0, %v2582
        %v2584 = vpop.f32.mrb[0].mxu0
        %2585 = vdwg.mxu0
        %v2602 = vunpack.c.l.b16 %v2159
        %v2603 = vunpack.c.l.b16 %v2160
        %v2604 = vunpack.c.l.b16 %v2161
        %v2605 = vunpack.c.l.b16 %v2162
        %v2606 = vunpack.c.l.b16 %v2163
        %v2607 = vunpack.c.l.b16 %v2164
        %v2608 = vunpack.c.l.b16 %v2165
        %v2609 = vunpack.c.l.b16 %v2166
        %v2610 = vunpack.c.l.b16 %v2167
        %v2611 = vunpack.c.l.b16 %v2168
        %v2612 = vunpack.c.l.b16 %v2169
        %v2613 = vunpack.c.l.b16 %v2170
        %v2614 = vunpack.c.l.b16 %v2171
        %v2615 = vunpack.c.l.b16 %v2172
        %v2616 = vunpack.c.l.b16 %v2173
        %v2617 = vunpack.c.l.b16 %v2174
        %v2618 = vpack.c.b16 %v2603, %v2602
        %v2619 = vpack.c.b16 %v2605, %v2604
        %v2620 = vpack.c.b16 %v2607, %v2606
        %v2621 = vpack.c.b16 %v2609, %v2608
        %v2622 = vpack.c.b16 %v2611, %v2610
        %v2623 = vpack.c.b16 %v2613, %v2612
        %v2624 = vpack.c.b16 %v2615, %v2614
        %v2625 = vpack.c.b16 %v2617, %v2616
        %v2650 = vunpack.c.l.b16 %v2176
        %v2651 = vunpack.c.l.b16 %v2177
        %v2652 = vunpack.c.l.b16 %v2178
        %v2653 = vunpack.c.l.b16 %v2179
        %v2654 = vunpack.c.l.b16 %v2180
        %v2655 = vunpack.c.l.b16 %v2181
        %v2656 = vunpack.c.l.b16 %v2182
        %v2657 = vunpack.c.l.b16 %v2183
        %v2658 = vunpack.c.l.b16 %v2184
        %v2659 = vunpack.c.l.b16 %v2185
        %v2660 = vunpack.c.l.b16 %v2186
        %v2661 = vunpack.c.l.b16 %v2187
        %v2662 = vunpack.c.l.b16 %v2188
        %v2663 = vunpack.c.l.b16 %v2189
        %v2664 = vunpack.c.l.b16 %v2190
        %v2665 = vunpack.c.l.b16 %v2191
        %v2666 = vpack.c.b16 %v2651, %v2650
        %v2667 = vpack.c.b16 %v2653, %v2652
        %v2668 = vpack.c.b16 %v2655, %v2654
        %v2669 = vpack.c.b16 %v2657, %v2656
        %v2670 = vpack.c.b16 %v2659, %v2658
        %v2671 = vpack.c.b16 %v2661, %v2660
        %v2672 = vpack.c.b16 %v2663, %v2662
        %v2673 = vpack.c.b16 %v2665, %v2664
        %2682 = vmatprep.subr.bf16.mxu0 0
        %2683 = vmatpush1.bf16.msra.mxu0 %v2666
        %2684 = vmatprep.subr.bf16.mxu0 0
        %2685 = vmatpush1.bf16.msra.mxu0 %v2667
        %2686 = vmatprep.subr.bf16.mxu0 0
        %2687 = vmatpush1.bf16.msra.mxu0 %v2668
        %2688 = vmatprep.subr.bf16.mxu0 0
        %2689 = vmatpush1.bf16.msra.mxu0 %v2669
        %2690 = vmatprep.subr.bf16.mxu0 0
        %2691 = vmatpush1.bf16.msra.mxu0 %v2670
        %2692 = vmatprep.subr.bf16.mxu0 0
        %2693 = vmatpush1.bf16.msra.mxu0 %v2671
        %2694 = vmatprep.subr.bf16.mxu0 0
        %2695 = vmatpush1.bf16.msra.mxu0 %v2672
        %2696 = vmatprep.subr.bf16.mxu0 0
        %2697 = vmatpush1.bf16.msra.mxu0 %v2673
        %2698 = vmatprep.subr.bf16.mxu0 0
        %2699 = vmatpush1.bf16.msra.mxu0 0
        %2700 = vmatprep.subr.bf16.mxu0 0
        %2701 = vmatpush1.bf16.msra.mxu0 0
        %2702 = vmatprep.subr.bf16.mxu0 0
        %2703 = vmatpush1.bf16.msra.mxu0 0
        %2704 = vmatprep.subr.bf16.mxu0 0
        %2705 = vmatpush1.bf16.msra.mxu0 0
        %2706 = vmatprep.subr.bf16.mxu0 0
        %2707 = vmatpush1.bf16.msra.mxu0 0
        %2708 = vmatprep.subr.bf16.mxu0 0
        %2709 = vmatpush1.bf16.msra.mxu0 0
        %2710 = vmatprep.subr.bf16.mxu0 0
        %2711 = vmatpush1.bf16.msra.mxu0 0
        %2712 = vmatprep.subr.bf16.mxu0 0
        %2713 = vmatpush1.bf16.msra.mxu0 0
        %2714 = vmatprep.mubr.bf16.mxu0 0
        %2715 = vmatmul.mubr.bf16.gmra.mrb[0].mxu0 %v2618
        %v2716 = vpop.f32.mrb[0].mxu0
        %v2717 = vadd.f32 %v2524, %v2716
        %v2718 = vpop.f32.mrb[0].mxu0
        %v2719 = vpop.f32.mrb[0].mxu0
        %v2720 = vadd.f32 %v2527, %v2719
        %v2721 = vpop.f32.mrb[0].mxu0
        %2722 = vmatprep.mubr.bf16.mxu0 0
        %2723 = vmatmul.mubr.bf16.gmra.mrb[0].mxu0 %v2619
        %v2724 = vpop.f32.mrb[0].mxu0
        %v2725 = vadd.f32 %v2532, %v2724
        %v2726 = vpop.f32.mrb[0].mxu0
        %v2727 = vpop.f32.mrb[0].mxu0
        %v2728 = vadd.f32 %v2535, %v2727
        %v2729 = vpop.f32.mrb[0].mxu0
        %2730 = vmatprep.mubr.bf16.mxu0 0
        %2731 = vmatmul.mubr.bf16.gmra.mrb[0].mxu0 %v2620
        %v2732 = vpop.f32.mrb[0].mxu0
        %v2733 = vadd.f32 %v2540, %v2732
        %v2734 = vpop.f32.mrb[0].mxu0
        %v2735 = vpop.f32.mrb[0].mxu0
        %v2736 = vadd.f32 %v2543, %v2735
        %v2737 = vpop.f32.mrb[0].mxu0
        %2738 = vmatprep.mubr.bf16.mxu0 0
        %2739 = vmatmul.mubr.bf16.gmra.mrb[0].mxu0 %v2621
        %v2740 = vpop.f32.mrb[0].mxu0
        %v2741 = vadd.f32 %v2548, %v2740
        %v2742 = vpop.f32.mrb[0].mxu0
        %v2743 = vpop.f32.mrb[0].mxu0
        %v2744 = vadd.f32 %v2551, %v2743
        %v2745 = vpop.f32.mrb[0].mxu0
        %2746 = vmatprep.mubr.bf16.mxu0 0
        %2747 = vmatmul.mubr.bf16.gmra.mrb[0].mxu0 %v2622
        %v2748 = vpop.f32.mrb[0].mxu0
        %v2749 = vadd.f32 %v2556, %v2748
        %v2750 = vpop.f32.mrb[0].mxu0
        %v2751 = vpop.f32.mrb[0].mxu0
        %v2752 = vadd.f32 %v2559, %v2751
        %v2753 = vpop.f32.mrb[0].mxu0
        %2754 = vmatprep.mubr.bf16.mxu0 0
        %2755 = vmatmul.mubr.bf16.gmra.mrb[0].mxu0 %v2623
        %v2756 = vpop.f32.mrb[0].mxu0
        %v2757 = vadd.f32 %v2564, %v2756
        %v2758 = vpop.f32.mrb[0].mxu0
        %v2759 = vpop.f32.mrb[0].mxu0
        %v2760 = vadd.f32 %v2567, %v2759
        %v2761 = vpop.f32.mrb[0].mxu0
        %2762 = vmatprep.mubr.bf16.mxu0 0
        %2763 = vmatmul.mubr.bf16.gmra.mrb[0].mxu0 %v2624
        %v2764 = vpop.f32.mrb[0].mxu0
        %v2765 = vadd.f32 %v2572, %v2764
        %v2766 = vpop.f32.mrb[0].mxu0
        %v2767 = vpop.f32.mrb[0].mxu0
        %v2768 = vadd.f32 %v2575, %v2767
        %v2769 = vpop.f32.mrb[0].mxu0
        %2770 = vmatprep.mubr.bf16.mxu0 0
        %2771 = vmatmul.mubr.bf16.gmra.mrb[0].mxu0 %v2625
        %v2772 = vpop.f32.mrb[0].mxu0
        %v2773 = vadd.f32 %v2580, %v2772
        %v2774 = vpop.f32.mrb[0].mxu0
        %v2775 = vpop.f32.mrb[0].mxu0
        %v2776 = vadd.f32 %v2583, %v2775
        %v2777 = vpop.f32.mrb[0].mxu0
        %2778 = vdwg.mxu0
        %v2779 = vld [vmem:[%s2158] sm:$0xe]
        %v2780 = vld [vmem:[%s2158 + $0xc] sm:$0xe]
        %v2781 = vld [vmem:[%s2158 + $0x18] sm:$0xe]
        %v2782 = vld [vmem:[%s2158 + $0x24] sm:$0xe]
        %v2783 = vld [vmem:[%s2158 + $0x30] sm:$0xe]
        %v2784 = vld [vmem:[%s2158 + $0x3c] sm:$0xe]
        %v2785 = vld [vmem:[%s2158 + $0x48] sm:$0xe]
        %v2786 = vld [vmem:[%s2158 + $0x54] sm:$0xe]
        %v2803 = vrot.slane %v2779, 5
        %v2804 = vrot.slane %v2803, 4
        %v2805 = vrot.slane %v2160, 5
        %v2806 = vsel %vm900, %v2804, %v2805
        %v2807 = vrot.slane %v2805, 4
        %v2808 = vrot.slane %v2192, 5
        %v2809 = vsel %vm900, %v2807, %v2808
        %v2810 = vrot.slane %v2780, 5
        %v2811 = vrot.slane %v2810, 4
        %v2812 = vrot.slane %v2162, 5
        %v2813 = vsel %vm900, %v2811, %v2812
        %v2814 = vrot.slane %v2812, 4
        %v2815 = vrot.slane %v2193, 5
        %v2816 = vsel %vm900, %v2814, %v2815
        %v2817 = vrot.slane %v2781, 5
        %v2818 = vrot.slane %v2817, 4
        %v2819 = vrot.slane %v2164, 5
        %v2820 = vsel %vm900, %v2818, %v2819
        %v2821 = vrot.slane %v2819, 4
        %v2822 = vrot.slane %v2194, 5
        %v2823 = vsel %vm900, %v2821, %v2822
        %v2824 = vrot.slane %v2782, 5
        %v2825 = vrot.slane %v2824, 4
        %v2826 = vrot.slane %v2166, 5
        %v2827 = vsel %vm900, %v2825, %v2826
        %v2828 = vrot.slane %v2826, 4
        %v2829 = vrot.slane %v2195, 5
        %v2830 = vsel %vm900, %v2828, %v2829
        %v2831 = vrot.slane %v2783, 5
        %v2832 = vrot.slane %v2831, 4
        %v2833 = vrot.slane %v2168, 5
        %v2834 = vsel %vm900, %v2832, %v2833
        %v2835 = vrot.slane %v2833, 4
        %v2836 = vrot.slane %v2196, 5
        %v2837 = vsel %vm900, %v2835, %v2836
        %v2838 = vrot.slane %v2784, 5
        %v2839 = vrot.slane %v2838, 4
        %v2840 = vrot.slane %v2170, 5
        %v2841 = vsel %vm900, %v2839, %v2840
        %v2842 = vrot.slane %v2840, 4
        %v2843 = vrot.slane %v2197, 5
        %v2844 = vsel %vm900, %v2842, %v2843
        %v2845 = vrot.slane %v2785, 5
        %v2846 = vrot.slane %v2845, 4
        %v2847 = vrot.slane %v2172, 5
        %v2848 = vsel %vm900, %v2846, %v2847
        %v2849 = vrot.slane %v2847, 4
        %v2850 = vrot.slane %v2198, 5
        %v2851 = vsel %vm900, %v2849, %v2850
        %v2852 = vrot.slane %v2786, 5
        %v2853 = vrot.slane %v2852, 4
        %v2854 = vrot.slane %v2174, 5
        %v2855 = vsel %vm900, %v2853, %v2854
        %v2856 = vrot.slane %v2854, 4
        %v2857 = vrot.slane %v2199, 5
        %v2858 = vsel %vm900, %v2856, %v2857
        %s2859 = scalar_lea.vmem %s1, 512
        %v2860 = vld [vmem:[%s2859] sm:$0xf]
        %v2861 = vld [vmem:[%s2859 + $0x4] sm:$0xf]
        %v2862 = vld [vmem:[%s2859 + $0x8] sm:$0xf]
        %v2863 = vld [vmem:[%s2859 + $0xc] sm:$0xf]
        %v2864 = vld [vmem:[%s2859 + $0x10] sm:$0xf]
        %v2865 = vld [vmem:[%s2859 + $0x14] sm:$0xf]
        %v2866 = vld [vmem:[%s2859 + $0x18] sm:$0xf]
        %v2867 = vld [vmem:[%s2859 + $0x1c] sm:$0xf]
        %v2868 = vld [vmem:[%s2859 + $0x20] sm:$0xf]
        %v2869 = vld [vmem:[%s2859 + $0x24] sm:$0xf]
        %v2870 = vld [vmem:[%s2859 + $0x28] sm:$0xf]
        %v2871 = vld [vmem:[%s2859 + $0x2c] sm:$0xf]
        %v2872 = vld [vmem:[%s2859 + $0x30] sm:$0xf]
        %v2873 = vld [vmem:[%s2859 + $0x34] sm:$0xf]
        %v2874 = vld [vmem:[%s2859 + $0x38] sm:$0xf]
        %v2875 = vld [vmem:[%s2859 + $0x3c] sm:$0xf]
        %v2876 = vunpack.c.l.b16 %v2806
        %v2877 = vunpack.c.l.b16 %v2809
        %v2878 = vunpack.c.l.b16 %v2813
        %v2879 = vunpack.c.l.b16 %v2816
        %v2880 = vunpack.c.l.b16 %v2820
        %v2881 = vunpack.c.l.b16 %v2823
        %v2882 = vunpack.c.l.b16 %v2827
        %v2883 = vunpack.c.l.b16 %v2830
        %v2884 = vunpack.c.l.b16 %v2834
        %v2885 = vunpack.c.l.b16 %v2837
        %v2886 = vunpack.c.l.b16 %v2841
        %v2887 = vunpack.c.l.b16 %v2844
        %v2888 = vunpack.c.l.b16 %v2848
        %v2889 = vunpack.c.l.b16 %v2851
        %v2890 = vunpack.c.l.b16 %v2855
        %v2891 = vunpack.c.l.b16 %v2858
        %v2892 = vpack.c.b16 %v2877, %v2876
        %v2893 = vpack.c.b16 %v2879, %v2878
        %v2894 = vpack.c.b16 %v2881, %v2880
        %v2895 = vpack.c.b16 %v2883, %v2882
        %v2896 = vpack.c.b16 %v2885, %v2884
        %v2897 = vpack.c.b16 %v2887, %v2886
        %v2898 = vpack.c.b16 %v2889, %v2888
        %v2899 = vpack.c.b16 %v2891, %v2890
        %v2924 = vunpack.c.l.b16 %v2860
        %v2925 = vunpack.c.l.b16 %v2861
        %v2926 = vunpack.c.l.b16 %v2862
        %v2927 = vunpack.c.l.b16 %v2863
        %v2928 = vunpack.c.l.b16 %v2864
        %v2929 = vunpack.c.l.b16 %v2865
        %v2930 = vunpack.c.l.b16 %v2866
        %v2931 = vunpack.c.l.b16 %v2867
        %v2932 = vunpack.c.l.b16 %v2868
        %v2933 = vunpack.c.l.b16 %v2869
        %v2934 = vunpack.c.l.b16 %v2870
        %v2935 = vunpack.c.l.b16 %v2871
        %v2936 = vunpack.c.l.b16 %v2872
        %v2937 = vunpack.c.l.b16 %v2873
        %v2938 = vunpack.c.l.b16 %v2874
        %v2939 = vunpack.c.l.b16 %v2875
        %v2940 = vpack.c.b16 %v2925, %v2924
        %v2941 = vpack.c.b16 %v2927, %v2926
        %v2942 = vpack.c.b16 %v2929, %v2928
        %v2943 = vpack.c.b16 %v2931, %v2930
        %v2944 = vpack.c.b16 %v2933, %v2932
        %v2945 = vpack.c.b16 %v2935, %v2934
        %v2946 = vpack.c.b16 %v2937, %v2936
        %v2947 = vpack.c.b16 %v2939, %v2938
        %2956 = vmatprep.subr.bf16.mxu0 0
        %2957 = vmatpush1.bf16.msra.mxu0 %v2940
        %2958 = vmatprep.subr.bf16.mxu0 0
        %2959 = vmatpush1.bf16.msra.mxu0 %v2941
        %2960 = vmatprep.subr.bf16.mxu0 0
        %2961 = vmatpush1.bf16.msra.mxu0 %v2942
        %2962 = vmatprep.subr.bf16.mxu0 0
        %2963 = vmatpush1.bf16.msra.mxu0 %v2943
        %2964 = vmatprep.subr.bf16.mxu0 0
        %2965 = vmatpush1.bf16.msra.mxu0 %v2944
        %2966 = vmatprep.subr.bf16.mxu0 0
        %2967 = vmatpush1.bf16.msra.mxu0 %v2945
        %2968 = vmatprep.subr.bf16.mxu0 0
        %2969 = vmatpush1.bf16.msra.mxu0 %v2946
        %2970 = vmatprep.subr.bf16.mxu0 0
        %2971 = vmatpush1.bf16.msra.mxu0 %v2947
        %2972 = vmatprep.subr.bf16.mxu0 0
        %2973 = vmatpush1.bf16.msra.mxu0 0
        %2974 = vmatprep.subr.bf16.mxu0 0
        %2975 = vmatpush1.bf16.msra.mxu0 0
        %2976 = vmatprep.subr.bf16.mxu0 0
        %2977 = vmatpush1.bf16.msra.mxu0 0
        %2978 = vmatprep.subr.bf16.mxu0 0
        %2979 = vmatpush1.bf16.msra.mxu0 0
        %2980 = vmatprep.subr.bf16.mxu0 0
        %2981 = vmatpush1.bf16.msra.mxu0 0
        %2982 = vmatprep.subr.bf16.mxu0 0
        %2983 = vmatpush1.bf16.msra.mxu0 0
        %2984 = vmatprep.subr.bf16.mxu0 0
        %2985 = vmatpush1.bf16.msra.mxu0 0
        %2986 = vmatprep.subr.bf16.mxu0 0
        %2987 = vmatpush1.bf16.msra.mxu0 0
        %2988 = vmatprep.mubr.bf16.mxu0 0
        %2989 = vmatmul.mubr.bf16.gmra.mrb[0].mxu0 %v2892
        %v2990 = vpop.f32.mrb[0].mxu0
        %v2991 = vadd.f32 0.0, %v2990
        %v2992 = vpop.f32.mrb[0].mxu0
        %v2993 = vpop.f32.mrb[0].mxu0
        %v2994 = vadd.f32 0.0, %v2993
        %v2995 = vpop.f32.mrb[0].mxu0
        %2996 = vmatprep.mubr.bf16.mxu0 0
        %2997 = vmatmul.mubr.bf16.gmra.mrb[0].mxu0 %v2893
        %v2998 = vpop.f32.mrb[0].mxu0
        %v2999 = vadd.f32 0.0, %v2998
        %v3000 = vpop.f32.mrb[0].mxu0
        %v3001 = vpop.f32.mrb[0].mxu0
        %v3002 = vadd.f32 0.0, %v3001
        %v3003 = vpop.f32.mrb[0].mxu0
        %3004 = vmatprep.mubr.bf16.mxu0 0
        %3005 = vmatmul.mubr.bf16.gmra.mrb[0].mxu0 %v2894
        %v3006 = vpop.f32.mrb[0].mxu0
        %v3007 = vadd.f32 0.0, %v3006
        %v3008 = vpop.f32.mrb[0].mxu0
        %v3009 = vpop.f32.mrb[0].mxu0
        %v3010 = vadd.f32 0.0, %v3009
        %v3011 = vpop.f32.mrb[0].mxu0
        %3012 = vmatprep.mubr.bf16.mxu0 0
        %3013 = vmatmul.mubr.bf16.gmra.mrb[0].mxu0 %v2895
        %v3014 = vpop.f32.mrb[0].mxu0
        %v3015 = vadd.f32 0.0, %v3014
        %v3016 = vpop.f32.mrb[0].mxu0
        %v3017 = vpop.f32.mrb[0].mxu0
        %v3018 = vadd.f32 0.0, %v3017
        %v3019 = vpop.f32.mrb[0].mxu0
        %3020 = vmatprep.mubr.bf16.mxu0 0
        %3021 = vmatmul.mubr.bf16.gmra.mrb[0].mxu0 %v2896
        %v3022 = vpop.f32.mrb[0].mxu0
        %v3023 = vadd.f32 0.0, %v3022
        %v3024 = vpop.f32.mrb[0].mxu0
        %v3025 = vpop.f32.mrb[0].mxu0
        %v3026 = vadd.f32 0.0, %v3025
        %v3027 = vpop.f32.mrb[0].mxu0
        %3028 = vmatprep.mubr.bf16.mxu0 0
        %3029 = vmatmul.mubr.bf16.gmra.mrb[0].mxu0 %v2897
        %v3030 = vpop.f32.mrb[0].mxu0
        %v3031 = vadd.f32 0.0, %v3030
        %v3032 = vpop.f32.mrb[0].mxu0
        %v3033 = vpop.f32.mrb[0].mxu0
        %v3034 = vadd.f32 0.0, %v3033
        %v3035 = vpop.f32.mrb[0].mxu0
        %3036 = vmatprep.mubr.bf16.mxu0 0
        %3037 = vmatmul.mubr.bf16.gmra.mrb[0].mxu0 %v2898
        %v3038 = vpop.f32.mrb[0].mxu0
        %v3039 = vadd.f32 0.0, %v3038
        %v3040 = vpop.f32.mrb[0].mxu0
        %v3041 = vpop.f32.mrb[0].mxu0
        %v3042 = vadd.f32 0.0, %v3041
        %v3043 = vpop.f32.mrb[0].mxu0
        %3044 = vmatprep.mubr.bf16.mxu0 0
        %3045 = vmatmul.mubr.bf16.gmra.mrb[0].mxu0 %v2899
        %v3046 = vpop.f32.mrb[0].mxu0
        %v3047 = vadd.f32 0.0, %v3046
        %v3048 = vpop.f32.mrb[0].mxu0
        %v3049 = vpop.f32.mrb[0].mxu0
        %v3050 = vadd.f32 0.0, %v3049
        %v3051 = vpop.f32.mrb[0].mxu0
        %3052 = vdwg.mxu0
        %v3053 = vadd.f32 %v2717, %v2991
        %v3054 = vadd.f32 %v2720, %v2994
        %v3055 = vadd.f32 %v2725, %v2999
        %v3056 = vadd.f32 %v2728, %v3002
        %v3057 = vadd.f32 %v2733, %v3007
        %v3058 = vadd.f32 %v2736, %v3010
        %v3059 = vadd.f32 %v2741, %v3015
        %v3060 = vadd.f32 %v2744, %v3018
        %v3061 = vadd.f32 %v2749, %v3023
        %v3062 = vadd.f32 %v2752, %v3026
        %v3063 = vadd.f32 %v2757, %v3031
        %v3064 = vadd.f32 %v2760, %v3034
        %v3065 = vadd.f32 %v2765, %v3039
        %v3066 = vadd.f32 %v2768, %v3042
        %v3067 = vadd.f32 %v2773, %v3047
        %v3068 = vadd.f32 %v2776, %v3050
        %v3069 = vadd.f32 %v2142, %v3053
        %v3070 = vadd.f32 %v2143, %v3054
        %v3071 = vadd.f32 %v2144, %v3055
        %v3072 = vadd.f32 %v2145, %v3056
        %v3073 = vadd.f32 %v2146, %v3057
        %v3074 = vadd.f32 %v2147, %v3058
        %v3075 = vadd.f32 %v2148, %v3059
        %v3076 = vadd.f32 %v2149, %v3060
        %v3077 = vadd.f32 %v2150, %v3061
        %v3078 = vadd.f32 %v2151, %v3062
        %v3079 = vadd.f32 %v2152, %v3063
        %v3080 = vadd.f32 %v2153, %v3064
        %v3081 = vadd.f32 %v2154, %v3065
        %v3082 = vadd.f32 %v2155, %v3066
        %v3083 = vadd.f32 %v2156, %v3067
        %v3084 = vadd.f32 %v2157, %v3068
        %v3085 = vld [vmem:[%s2] sm:$0x1]
        %v3087 = vlaneseq
        %v3088 = vshrl.u32 %v3087, 7
        %v3089 = vsub.s32 0, %v3088
        %v3090 = vrot.slane %v3085, %v3089
        %v3092 = vadd.f32 %v3069, %v3090
        %v3093 = vadd.f32 %v3070, %v3090
        %v3094 = vadd.f32 %v3071, %v3090
        %v3095 = vadd.f32 %v3072, %v3090
        %v3096 = vadd.f32 %v3073, %v3090
        %v3097 = vadd.f32 %v3074, %v3090
        %v3098 = vadd.f32 %v3075, %v3090
        %v3099 = vadd.f32 %v3076, %v3090
        %v3100 = vadd.f32 %v3077, %v3090
        %v3101 = vadd.f32 %v3078, %v3090
        %v3102 = vadd.f32 %v3079, %v3090
        %v3103 = vadd.f32 %v3080, %v3090
        %v3104 = vadd.f32 %v3081, %v3090
        %v3105 = vadd.f32 %v3082, %v3090
        %v3106 = vadd.f32 %v3083, %v3090
        %v3107 = vadd.f32 %v3084, %v3090
        %v3108 = vmax.f32 %v3092, 0.0
        %v3109 = vmax.f32 %v3093, 0.0
        %v3110 = vmax.f32 %v3094, 0.0
        %v3111 = vmax.f32 %v3095, 0.0
        %v3112 = vmax.f32 %v3096, 0.0
        %v3113 = vmax.f32 %v3097, 0.0
        %v3114 = vmax.f32 %v3098, 0.0
        %v3115 = vmax.f32 %v3099, 0.0
        %v3116 = vmax.f32 %v3100, 0.0
        %v3117 = vmax.f32 %v3101, 0.0
        %v3118 = vmax.f32 %v3102, 0.0
        %v3119 = vmax.f32 %v3103, 0.0
        %v3120 = vmax.f32 %v3104, 0.0
        %v3121 = vmax.f32 %v3105, 0.0
        %v3122 = vmax.f32 %v3106, 0.0
        %v3123 = vmax.f32 %v3107, 0.0
        %v3124 = vpack.c.bf16 %v3109, %v3108
        %v3125 = vpack.c.bf16 %v3111, %v3110
        %v3126 = vpack.c.bf16 %v3113, %v3112
        %v3127 = vpack.c.bf16 %v3115, %v3114
        %v3128 = vpack.c.bf16 %v3117, %v3116
        %v3129 = vpack.c.bf16 %v3119, %v3118
        %v3130 = vpack.c.bf16 %v3121, %v3120
        %v3131 = vpack.c.bf16 %v3123, %v3122
        %v3132 = vld [vmem:[%s3] sm:$0xf]
        %v3133 = vld [vmem:[%s3 + $0x4] sm:$0xf]
        %v3134 = vld [vmem:[%s3 + $0x8] sm:$0xf]
        %v3135 = vld [vmem:[%s3 + $0xc] sm:$0xf]
        %v3136 = vld [vmem:[%s3 + $0x10] sm:$0xf]
        %v3137 = vld [vmem:[%s3 + $0x14] sm:$0xf]
        %v3138 = vld [vmem:[%s3 + $0x18] sm:$0xf]
        %v3139 = vld [vmem:[%s3 + $0x1c] sm:$0xf]
        %v3140 = vld [vmem:[%s3 + $0x20] sm:$0xf]
        %v3141 = vld [vmem:[%s3 + $0x24] sm:$0xf]
        %v3142 = vld [vmem:[%s3 + $0x28] sm:$0xf]
        %v3143 = vld [vmem:[%s3 + $0x2c] sm:$0xf]
        %v3144 = vld [vmem:[%s3 + $0x30] sm:$0xf]
        %v3145 = vld [vmem:[%s3 + $0x34] sm:$0xf]
        %v3146 = vld [vmem:[%s3 + $0x38] sm:$0xf]
        %v3147 = vld [vmem:[%s3 + $0x3c] sm:$0xf]
        %v3148 = vld [vmem:[%s4] sm:$0x1]
        %v3150 = vlaneseq
        %v3151 = vshrl.u32 %v3150, 7
        %v3152 = vsub.s32 0, %v3151
        %v3153 = vrot.slane %v3148, %v3152
        %v3171 = vunpack.c.l.b16 %v3132
        %v3172 = vunpack.c.l.b16 %v3133
        %v3173 = vunpack.c.l.b16 %v3134
        %v3174 = vunpack.c.l.b16 %v3135
        %v3175 = vunpack.c.l.b16 %v3136
        %v3176 = vunpack.c.l.b16 %v3137
        %v3177 = vunpack.c.l.b16 %v3138
        %v3178 = vunpack.c.l.b16 %v3139
        %v3179 = vunpack.c.l.b16 %v3140
        %v3180 = vunpack.c.l.b16 %v3141
        %v3181 = vunpack.c.l.b16 %v3142
        %v3182 = vunpack.c.l.b16 %v3143
        %v3183 = vunpack.c.l.b16 %v3144
        %v3184 = vunpack.c.l.b16 %v3145
        %v3185 = vunpack.c.l.b16 %v3146
        %v3186 = vunpack.c.l.b16 %v3147
        %v3187 = vpack.c.b16 %v3172, %v3171
        %v3188 = vpack.c.b16 %v3174, %v3173
        %v3189 = vpack.c.b16 %v3176, %v3175
        %v3190 = vpack.c.b16 %v3178, %v3177
        %v3191 = vpack.c.b16 %v3180, %v3179
        %v3192 = vpack.c.b16 %v3182, %v3181
        %v3193 = vpack.c.b16 %v3184, %v3183
        %v3194 = vpack.c.b16 %v3186, %v3185
        %3203 = vmatprep.subr.bf16.mxu0 0
        %3204 = vmatpush1.bf16.msra.mxu0 %v3187
        %3205 = vmatprep.subr.bf16.mxu0 0
        %3206 = vmatpush1.bf16.msra.mxu0 %v3188
        %3207 = vmatprep.subr.bf16.mxu0 0
        %3208 = vmatpush1.bf16.msra.mxu0 %v3189
        %3209 = vmatprep.subr.bf16.mxu0 0
        %3210 = vmatpush1.bf16.msra.mxu0 %v3190
        %3211 = vmatprep.subr.bf16.mxu0 0
        %3212 = vmatpush1.bf16.msra.mxu0 %v3191
        %3213 = vmatprep.subr.bf16.mxu0 0
        %3214 = vmatpush1.bf16.msra.mxu0 %v3192
        %3215 = vmatprep.subr.bf16.mxu0 0
        %3216 = vmatpush1.bf16.msra.mxu0 %v3193
        %3217 = vmatprep.subr.bf16.mxu0 0
        %3218 = vmatpush1.bf16.msra.mxu0 %v3194
        %3219 = vmatprep.subr.bf16.mxu0 0
        %3220 = vmatpush1.bf16.msra.mxu0 0
        %3221 = vmatprep.subr.bf16.mxu0 0
        %3222 = vmatpush1.bf16.msra.mxu0 0
        %3223 = vmatprep.subr.bf16.mxu0 0
        %3224 = vmatpush1.bf16.msra.mxu0 0
        %3225 = vmatprep.subr.bf16.mxu0 0
        %3226 = vmatpush1.bf16.msra.mxu0 0
        %3227 = vmatprep.subr.bf16.mxu0 0
        %3228 = vmatpush1.bf16.msra.mxu0 0
        %3229 = vmatprep.subr.bf16.mxu0 0
        %3230 = vmatpush1.bf16.msra.mxu0 0
        %3231 = vmatprep.subr.bf16.mxu0 0
        %3232 = vmatpush1.bf16.msra.mxu0 0
        %3233 = vmatprep.subr.bf16.mxu0 0
        %3234 = vmatpush1.bf16.msra.mxu0 0
        %3235 = vmatprep.mubr.bf16.mxu0 0
        %3236 = vmatmul.mubr.bf16.gmra.mrb[0].mxu0 %v3124
        %v3237 = vpop.f32.mrb[0].mxu0
        %v3238 = vadd.f32 %v3153, %v3237
        %v3239 = vpop.f32.mrb[0].mxu0
        %v3240 = vpop.f32.mrb[0].mxu0
        %v3241 = vadd.f32 %v3153, %v3240
        %v3242 = vpop.f32.mrb[0].mxu0
        %3243 = vmatprep.mubr.bf16.mxu0 0
        %3244 = vmatmul.mubr.bf16.gmra.mrb[0].mxu0 %v3125
        %v3245 = vpop.f32.mrb[0].mxu0
        %v3246 = vadd.f32 %v3153, %v3245
        %v3247 = vpop.f32.mrb[0].mxu0
        %v3248 = vpop.f32.mrb[0].mxu0
        %v3249 = vadd.f32 %v3153, %v3248
        %v3250 = vpop.f32.mrb[0].mxu0
        %3251 = vmatprep.mubr.bf16.mxu0 0
        %3252 = vmatmul.mubr.bf16.gmra.mrb[0].mxu0 %v3126
        %v3253 = vpop.f32.mrb[0].mxu0
        %v3254 = vadd.f32 %v3153, %v3253
        %v3255 = vpop.f32.mrb[0].mxu0
        %v3256 = vpop.f32.mrb[0].mxu0
        %v3257 = vadd.f32 %v3153, %v3256
        %v3258 = vpop.f32.mrb[0].mxu0
        %3259 = vmatprep.mubr.bf16.mxu0 0
        %3260 = vmatmul.mubr.bf16.gmra.mrb[0].mxu0 %v3127
        %v3261 = vpop.f32.mrb[0].mxu0
        %v3262 = vadd.f32 %v3153, %v3261
        %v3263 = vpop.f32.mrb[0].mxu0
        %v3264 = vpop.f32.mrb[0].mxu0
        %v3265 = vadd.f32 %v3153, %v3264
        %v3266 = vpop.f32.mrb[0].mxu0
        %3267 = vmatprep.mubr.bf16.mxu0 0
        %3268 = vmatmul.mubr.bf16.gmra.mrb[0].mxu0 %v3128
        %v3269 = vpop.f32.mrb[0].mxu0
        %v3270 = vadd.f32 %v3153, %v3269
        %v3271 = vpop.f32.mrb[0].mxu0
        %v3272 = vpop.f32.mrb[0].mxu0
        %v3273 = vadd.f32 %v3153, %v3272
        %v3274 = vpop.f32.mrb[0].mxu0
        %3275 = vmatprep.mubr.bf16.mxu0 0
        %3276 = vmatmul.mubr.bf16.gmra.mrb[0].mxu0 %v3129
        %v3277 = vpop.f32.mrb[0].mxu0
        %v3278 = vadd.f32 %v3153, %v3277
        %v3279 = vpop.f32.mrb[0].mxu0
        %v3280 = vpop.f32.mrb[0].mxu0
        %v3281 = vadd.f32 %v3153, %v3280
        %v3282 = vpop.f32.mrb[0].mxu0
        %3283 = vmatprep.mubr.bf16.mxu0 0
        %3284 = vmatmul.mubr.bf16.gmra.mrb[0].mxu0 %v3130
        %v3285 = vpop.f32.mrb[0].mxu0
        %v3286 = vadd.f32 %v3153, %v3285
        %v3287 = vpop.f32.mrb[0].mxu0
        %v3288 = vpop.f32.mrb[0].mxu0
        %v3289 = vadd.f32 %v3153, %v3288
        %v3290 = vpop.f32.mrb[0].mxu0
        %3291 = vmatprep.mubr.bf16.mxu0 0
        %3292 = vmatmul.mubr.bf16.gmra.mrb[0].mxu0 %v3131
        %v3293 = vpop.f32.mrb[0].mxu0
        %v3294 = vadd.f32 %v3153, %v3293
        %v3295 = vpop.f32.mrb[0].mxu0
        %v3296 = vpop.f32.mrb[0].mxu0
        %v3297 = vadd.f32 %v3153, %v3296
        %v3298 = vpop.f32.mrb[0].mxu0
        %3299 = vdwg.mxu0
        %v3300 = vsub.f32 0.0, %v3238
        %v3301 = vsub.f32 0.0, %v3241
        %v3302 = vsub.f32 0.0, %v3246
        %v3303 = vsub.f32 0.0, %v3249
        %v3304 = vsub.f32 0.0, %v3254
        %v3305 = vsub.f32 0.0, %v3257
        %v3306 = vsub.f32 0.0, %v3262
        %v3307 = vsub.f32 0.0, %v3265
        %v3308 = vsub.f32 0.0, %v3270
        %v3309 = vsub.f32 0.0, %v3273
        %v3310 = vsub.f32 0.0, %v3278
        %v3311 = vsub.f32 0.0, %v3281
        %v3312 = vsub.f32 0.0, %v3286
        %v3313 = vsub.f32 0.0, %v3289
        %v3314 = vsub.f32 0.0, %v3294
        %v3315 = vsub.f32 0.0, %v3297
        %v3316 = vmul.f32 %v3300, 1.442695
        %v3317 = vpow.pop %v3316
        %v3318 = vmul.f32 %v3301, 1.442695
        %v3319 = vpow.pop %v3318
        %v3320 = vmul.f32 %v3302, 1.442695
        %v3321 = vpow.pop %v3320
        %v3322 = vmul.f32 %v3303, 1.442695
        %v3323 = vpow.pop %v3322
        %v3324 = vmul.f32 %v3304, 1.442695
        %v3325 = vpow.pop %v3324
        %v3326 = vmul.f32 %v3305, 1.442695
        %v3327 = vpow.pop %v3326
        %v3328 = vmul.f32 %v3306, 1.442695
        %v3329 = vpow.pop %v3328
        %v3330 = vmul.f32 %v3307, 1.442695
        %v3331 = vpow.pop %v3330
        %v3332 = vmul.f32 %v3308, 1.442695
        %v3333 = vpow.pop %v3332
        %v3334 = vmul.f32 %v3309, 1.442695
        %v3335 = vpow.pop %v3334
        %v3336 = vmul.f32 %v3310, 1.442695
        %v3337 = vpow.pop %v3336
        %v3338 = vmul.f32 %v3311, 1.442695
        %v3339 = vpow.pop %v3338
        %v3340 = vmul.f32 %v3312, 1.442695
        %v3341 = vpow.pop %v3340
        %v3342 = vmul.f32 %v3313, 1.442695
        %v3343 = vpow.pop %v3342
        %v3344 = vmul.f32 %v3314, 1.442695
        %v3345 = vpow.pop %v3344
        %v3346 = vmul.f32 %v3315, 1.442695
        %v3347 = vpow.pop %v3346
        %v3348 = vadd.f32 %v3317, 1.0
        %v3349 = vadd.f32 %v3319, 1.0
        %v3350 = vadd.f32 %v3321, 1.0
        %v3351 = vadd.f32 %v3323, 1.0
        %v3352 = vadd.f32 %v3325, 1.0
        %v3353 = vadd.f32 %v3327, 1.0
        %v3354 = vadd.f32 %v3329, 1.0
        %v3355 = vadd.f32 %v3331, 1.0
        %v3356 = vadd.f32 %v3333, 1.0
        %v3357 = vadd.f32 %v3335, 1.0
        %v3358 = vadd.f32 %v3337, 1.0
        %v3359 = vadd.f32 %v3339, 1.0
        %v3360 = vadd.f32 %v3341, 1.0
        %v3361 = vadd.f32 %v3343, 1.0
        %v3362 = vadd.f32 %v3345, 1.0
        %v3363 = vadd.f32 %v3347, 1.0
        %v3364 = vrcp.pop %v3348
        %v3365 = vmul.f32 1.0, %v3364
        %v3366 = vrcp.pop %v3349
        %v3367 = vmul.f32 1.0, %v3366
        %v3368 = vrcp.pop %v3350
        %v3369 = vmul.f32 1.0, %v3368
        %v3370 = vrcp.pop %v3351
        %v3371 = vmul.f32 1.0, %v3370
        %v3372 = vrcp.pop %v3352
        %v3373 = vmul.f32 1.0, %v3372
        %v3374 = vrcp.pop %v3353
        %v3375 = vmul.f32 1.0, %v3374
        %v3376 = vrcp.pop %v3354
        %v3377 = vmul.f32 1.0, %v3376
        %v3378 = vrcp.pop %v3355
        %v3379 = vmul.f32 1.0, %v3378
        %v3380 = vrcp.pop %v3356
        %v3381 = vmul.f32 1.0, %v3380
        %v3382 = vrcp.pop %v3357
        %v3383 = vmul.f32 1.0, %v3382
        %v3384 = vrcp.pop %v3358
        %v3385 = vmul.f32 1.0, %v3384
        %v3386 = vrcp.pop %v3359
        %v3387 = vmul.f32 1.0, %v3386
        %v3388 = vrcp.pop %v3360
        %v3389 = vmul.f32 1.0, %v3388
        %v3390 = vrcp.pop %v3361
        %v3391 = vmul.f32 1.0, %v3390
        %v3392 = vrcp.pop %v3362
        %v3393 = vmul.f32 1.0, %v3392
        %v3394 = vrcp.pop %v3363
        %v3395 = vmul.f32 1.0, %v3394
        %v3396 = vlaneseq
        %v3397 = vand.u32 %v3396, 127
        %vm3398 = vcmp.ge.s32.totalorder %v3397, 54
        %vm3399 = vcmp.lt.s32.totalorder %v3397, 63
        %vm3400 = vmand %vm3398, %vm3399
        %v3401 = vsel %vm3400, %v3365, %v3238
        %v3402 = vsel %vm3400, %v3367, %v3241
        %v3403 = vsel %vm3400, %v3369, %v3246
        %v3404 = vsel %vm3400, %v3371, %v3249
        %v3405 = vsel %vm3400, %v3373, %v3254
        %v3406 = vsel %vm3400, %v3375, %v3257
        %v3407 = vsel %vm3400, %v3377, %v3262
        %v3408 = vsel %vm3400, %v3379, %v3265
        %v3409 = vsel %vm3400, %v3381, %v3270
        %v3410 = vsel %vm3400, %v3383, %v3273
        %v3411 = vsel %vm3400, %v3385, %v3278
        %v3412 = vsel %vm3400, %v3387, %v3281
        %v3413 = vsel %vm3400, %v3389, %v3286
        %v3414 = vsel %vm3400, %v3391, %v3289
        %v3415 = vsel %vm3400, %v3393, %v3294
        %v3416 = vsel %vm3400, %v3395, %v3297
        %3417 = vst [vmem:[%s241] sm:$0xff] %v3401
        %3418 = vst [vmem:[%s241 + $0x8] sm:$0xff] %v3402
        %3419 = vst [vmem:[%s241 + $0x10] sm:$0xff] %v3403
        %3420 = vst [vmem:[%s241 + $0x18] sm:$0xff] %v3404
        %3421 = vst [vmem:[%s241 + $0x20] sm:$0xff] %v3405
        %3422 = vst [vmem:[%s241 + $0x28] sm:$0xff] %v3406
        %3423 = vst [vmem:[%s241 + $0x30] sm:$0xff] %v3407
        %3424 = vst [vmem:[%s241 + $0x38] sm:$0xff] %v3408
        %3425 = vst [vmem:[%s241 + $0x40] sm:$0xff] %v3409
        %3426 = vst [vmem:[%s241 + $0x48] sm:$0xff] %v3410
        %3427 = vst [vmem:[%s241 + $0x50] sm:$0xff] %v3411
        %3428 = vst [vmem:[%s241 + $0x58] sm:$0xff] %v3412
        %3429 = vst [vmem:[%s241 + $0x60] sm:$0xff] %v3413
        %3430 = vst [vmem:[%s241 + $0x68] sm:$0xff] %v3414
        %3431 = vst [vmem:[%s241 + $0x70] sm:$0xff] %v3415
        %3432 = vst [vmem:[%s241 + $0x78] sm:$0xff] %v3416
        %s3433 = sand.u32 %s153, 1
        %s3434 = scalar_lea.sflag [#allocation4], %s3433
        %s3435 = sand.u32 %s153, 1
        %s3436 = smul.addr %s3435, 128
        %s3437 = scalar_lea.vmem [#allocation3], %s3436
        // Predicated region
        $region41: #{tpu_custom_call.1} parent=39 // pred_check
          %p3438 = pneg %p163
        $region42: #{tpu_custom_call.1} parent=39 // pred_check_branch
          %3440 = sbr.rel (%p3438) target = $region44
        $region43: #{tpu_custom_call.1} parent=39 // pred_region
          %s3442 = ssub.s32 2048, 2048
          %3443 = vsyncadd %s3434, %s3442
          %s3444 = smul.addr %s24, 16
          %s3445 = smul.addr %s23, 32
          %s3446 = sadd.s32 %s3444, %s3445
          %s3447 = smul.addr %s3446, 128
          %s3448 = scalar_lea.hbm %s5, %s3447
          %s3449 = sshll.u32 %s3437, 4
          %s3450 = int_to_ptr.vmem [resolvable:$true] %s3449
          %3455 = dma.vmem_to_hbm [thread:$0]  %s3450, 2048, %s3448, %s3434, 128, 128, 8
        $region44: #{tpu_custom_call.1} parent=39 // pred_fallthru
          _
      $region40: #{tpu_custom_call.1} parent=5 // pred_fallthru
        _
      %p3456 = scmp.le.s32.totalorder 2, %s14
      // Predicated region
      $region45: #{tpu_custom_call.1} parent=5 // pred_check
        %p3457 = pneg %p3456
      $region46: #{tpu_custom_call.1} parent=5 // pred_check_branch
        %3459 = sbr.rel (%p3457) target = $region48
      $region47: #{tpu_custom_call.1} parent=5 // pred_region
        %s3460 = ssub.s32 %s14, 2
        // Predicated region
        $region49: #{tpu_custom_call.1} parent=47 // pred_check
          %p3461 = pneg %p169
        $region50: #{tpu_custom_call.1} parent=47 // pred_check_branch
          %3463 = sbr.rel (%p3461) target = $region52
        $region51: #{tpu_custom_call.1} parent=47 // pred_region
          %s3464 = sand.u32 %s154, 1
          %s3465 = scalar_lea.sflag [#allocation4], %s3464
          %s3466 = sand.u32 %s154, 1
          %s3467 = smul.addr %s3466, 128
          %s3468 = scalar_lea.vmem [#allocation3], %s3467
          %3469 = dma.done %s3465, 2048
        $region52: #{tpu_custom_call.1} parent=47 // pred_fallthru
          _
      $region48: #{tpu_custom_call.1} parent=5 // pred_fallthru
        _
    $region6: #{tpu_custom_call.1} parent=1 // loop_footer
      %s18 = sadd.s32 1, %s14
    $region7: #{tpu_custom_call.1} parent=1 // loop_footer_branch
      %13 = sbr.rel target = $region3
    $region8: #{tpu_custom_call.1} parent=1 // loop_exit
      _
    %3470 = vsyncpa [#allocation4], 1
    %s3471 = scalar_lea.sflag [#allocation4], 1
    %3472 = vsyncpa %s3471, 1

</llo_original>
